<compile_context>
chip_gen: v7x
topology: tpu7x:2x2x1
jax: 0.10.0
libtpu: 0.0.40
codegen_flags: <defaults>
</compile_context>

<pallas_src>
import math
import functools

import jax
import jax.numpy as jnp
import numpy as np
from jax.experimental import pallas as pl
from jax.experimental.pallas import tpu as pltpu


_LANE = 128


def _round_up(x, m):
    return ((x + m - 1) // m) * m


def _slab_a_layout(n_enc, hdim):
    """Column offsets inside the (hdim, width) hidden-layer weight slab.

      [0 : n_enc]        w0_aug = [w0^T | b0]  (b0 rides on the constant enc row)
      [c1 : c1 + hdim]   w1^T
      [c2 : c2 + hdim]   w2^T
      [c3]               b1 column
      [c3 + 1]           b2 column

    Segments start on 128-lane boundaries so the big matmul operands load from
    aligned offsets.
    """
    c1 = _round_up(n_enc, _LANE)
    c2 = _round_up(c1 + hdim, _LANE)
    c3 = _round_up(c2 + hdim, _LANE)
    width = c3 + 2
    return c1, c2, c3, width


def _height_field_kernel(n_enc, hdim, half_span, mid,
                         x3_ref, slab_a_ref, slab_b_ref, out_ref):
    c1, c2, c3, _ = _slab_a_layout(n_enc, hdim)

    x3 = x3_ref[...]                                       # (3, TILE): [x; y; 1]

    # Stacked RFF: rows 0..F-1 = sin phases, F..2F-1 = cos phases (+pi/2),
    # row 2F = constant pi/2 (sin == 1) that carries b0 through layer 0.
    # The phase/bias column of w_rff multiplies the constant-one input row, so
    # there is no separate broadcast bias add.
    w_rff = slab_b_ref[0:n_enc, 0:3]                       # (2F+1, 3)
    s_all = jnp.dot(w_rff, x3,
                    preferred_element_type=jnp.float32)    # (2F+1, TILE)
    enc = jnp.sin(s_all)                                   # single stacked sin

    # Layer 0: b0 is the last column of w0_aug (multiplies the constant row).
    w0_aug = slab_a_ref[:, 0:n_enc]                        # (H, 2F+1)
    h = jnp.maximum(
        jnp.dot(w0_aug, enc, preferred_element_type=jnp.float32), 0.0)

    w1T = slab_a_ref[:, c1:c1 + hdim]                      # (H, H)
    b1 = slab_a_ref[:, c3:c3 + 1]                          # (H, 1)
    h = jnp.maximum(
        jnp.dot(w1T, h, preferred_element_type=jnp.float32) + b1, 0.0)

    w2T = slab_a_ref[:, c2:c2 + hdim]                      # (H, H)
    b2 = slab_a_ref[:, c3 + 1:c3 + 2]                      # (H, 1)
    h = jnp.maximum(
        jnp.dot(w2T, h, preferred_element_type=jnp.float32) + b2, 0.0)

    w3T = slab_b_ref[n_enc:n_enc + 1, 0:hdim]              # (1, H)
    b3 = slab_b_ref[n_enc:n_enc + 1, hdim:hdim + 1]        # (1, 1)
    raw = jnp.dot(w3T, h, preferred_element_type=jnp.float32) + b3  # (1, TILE)

    z = jnp.tanh(raw)
    out_ref[...] = (z * half_span + mid).astype(out_ref.dtype)  # lane-dense store


def _pick_tile(n, max_tile=4096, min_tile=1024):
    """Largest multiple-of-1024 tile <= max_tile that keeps >= 2 grid steps.

    Bigger tiles amortize the ~0.35 us per-grid-step overhead (v5e/v6e are
    single-TC and want the largest tile); the >= 2-step floor keeps both v7x
    TensorCores busy under dimension_semantics=("parallel",).
    """
    tile = max_tile
    while tile > min_tile and (n + tile - 1) // tile < 2:
        tile //= 2
    return tile


def neural_height_field_forward(xy, params, out_range=(-2.0, 2.0), tile=None,
                                max_tile=4096):
    """xy: (N, 2) float32 in [0, 1]^2.  Returns z: (N,) float32.

    `tile` (point-tile size) defaults to an auto pick; sweep max_tile in
    2048-8192 for large N if tuning.
    """
    N = xy.shape[0]
    bmat, w0, b0, w1, b1, w2, b2, w3, b3 = params
    F = bmat.shape[1]
    H = w1.shape[0]
    n_enc = 2 * F + 1

    if tile is None:
        tile = _pick_tile(N, max_tile=max_tile)
    n_tiles = pl.cdiv(N, tile)
    n_pad = n_tiles * tile

    # ---- host-side parameter refactoring (one-time, O(H^2)) -----------------
    # Fold x -> 2*(x - 0.5) and the 2*pi RFF scale:
    #   2*pi*(2*xy - 1) @ B == xy @ (4*pi*B) - 2*pi*(B[0,:] + B[1,:])
    # and stack [sin rows; cos rows (+pi/2); const pi/2 row], with the phase
    # shift as a 3rd column that multiplies the constant-one input row.
    half_pi = 0.5 * math.pi
    b4piT = ((4.0 * math.pi) * bmat.astype(jnp.float32)).T                    # (F, 2)
    shift = (-2.0 * math.pi) * (bmat[0, :] + bmat[1, :]).astype(jnp.float32)  # (F,)
    w_rff = jnp.concatenate([
        jnp.concatenate([b4piT, shift[:, None]], axis=1),                # sin rows
        jnp.concatenate([b4piT, (shift + half_pi)[:, None]], axis=1),    # cos rows
        jnp.array([[0.0, 0.0, half_pi]], jnp.float32),                   # const row
    ], axis=0)                                                           # (2F+1, 3)

    c1, c2, c3, width_a = _slab_a_layout(n_enc, H)
    slab_a = jnp.zeros((H, width_a), jnp.float32)
    slab_a = slab_a.at[:, 0:2 * F].set(w0.astype(jnp.float32).T)        # w0^T
    slab_a = slab_a.at[:, 2 * F].set(b0.reshape(H).astype(jnp.float32))  # b0 col
    slab_a = slab_a.at[:, c1:c1 + H].set(w1.astype(jnp.float32).T)
    slab_a = slab_a.at[:, c2:c2 + H].set(w2.astype(jnp.float32).T)
    slab_a = slab_a.at[:, c3].set(b1.reshape(H).astype(jnp.float32))
    slab_a = slab_a.at[:, c3 + 1].set(b2.reshape(H).astype(jnp.float32))

    slab_b = jnp.zeros((n_enc + 1, H + 1), jnp.float32)
    slab_b = slab_b.at[0:n_enc, 0:3].set(w_rff)
    slab_b = slab_b.at[n_enc, 0:H].set(w3.reshape(H).astype(jnp.float32))
    slab_b = slab_b.at[n_enc, H].set(b3.reshape(()).astype(jnp.float32))

    # Padded, ones-augmented, transposed input in ONE fused op: both the tail
    # pad rows (dummy points, sliced off at the end) and the extra column are
    # filled with 1.0 -- the latter is the constant-one row the folded biases
    # ride on.  Never rely on OOB reads of VMEM refs.
    x3 = jnp.pad(xy.astype(jnp.float32), ((0, n_pad - N), (0, 1)),
                 constant_values=1.0).T                                  # (3, n_pad)

    half_span = (float(out_range[1]) - float(out_range[0])) * 0.5
    mid = (float(out_range[1]) + float(out_range[0])) * 0.5
    kernel = functools.partial(_height_field_kernel, n_enc, H, half_span, mid)

    out = pl.pallas_call(
        kernel,
        out_shape=jax.ShapeDtypeStruct((1, n_pad), jnp.float32),
        grid_spec=pltpu.PrefetchScalarGridSpec(
            num_scalar_prefetch=0,
            grid=(n_tiles,),
            in_specs=[pl.BlockSpec((3, tile), lambda i: (0, i)),     # xy^T tile
                      pl.BlockSpec(slab_a.shape, lambda i: (0, 0)),  # resident
                      pl.BlockSpec(slab_b.shape, lambda i: (0, 0))],  # resident
            out_specs=pl.BlockSpec((1, tile), lambda i: (0, i)),     # lane-dense
        ),
        compiler_params=pltpu.CompilerParams(
            dimension_semantics=("parallel",)),
        cost_estimate=pl.CostEstimate(
            flops=int(19_300 * n_pad),          # RFF + 4 matmuls per point
            transcendentals=int(22 * n_pad),    # (2F+1) sin + 1 tanh per point
            bytes_accessed=int(16 * n_pad)),    # 12 B in + 4 B out per point
    )(x3, slab_a, slab_b)

    return out[0, :N]


def init_params(key, in_dim=2, hidden_dim=64, n_layers=3,
                num_frequencies=10, scale=10.0):
    """Deterministic synthetic init mirroring the PyTorch module's shapes.

    Weights kept in the natural (fan_in, fan_out) layout; the forward wrapper
    transposes / stacks / folds them for the kernel.
    """
    keys = jax.random.split(key, 2 + 2 * (n_layers + 1))
    # RFF B matrix ~ N(0, scale^2), shape (in_dim, num_frequencies)
    bmat = scale * jax.random.normal(keys[0], (in_dim, num_frequencies),
                                     dtype=jnp.float32)
    params = [bmat]
    fan_in = 2 * num_frequencies
    dims = [fan_in] + [hidden_dim] * n_layers + [1]
    kidx = 1
    for li in range(n_layers + 1):
        d_in, d_out = dims[li], dims[li + 1]
        bound = 1.0 / math.sqrt(d_in)  # PyTorch nn.Linear default init range
        w = jax.random.uniform(keys[kidx], (d_in, d_out), jnp.float32,
                               -bound, bound)
        b = jax.random.uniform(keys[kidx + 1], (1, d_out), jnp.float32,
                               -bound, bound)
        kidx += 2
        params += [w, b]
    return tuple(params)


def reference_forward(xy, params, out_range=(-2.0, 2.0)):
    """Pure-JAX reference matching the PyTorch forward exactly."""
    bmat, w0, b0, w1, b1, w2, b2, w3, b3 = params
    x = 2.0 * (xy - 0.5)
    s = 2.0 * math.pi * x @ bmat
    enc = jnp.concatenate([jnp.sin(s), jnp.cos(s)], axis=-1)
    h = jnp.maximum(enc @ w0 + b0, 0.0)
    h = jnp.maximum(h @ w1 + b1, 0.0)
    h = jnp.maximum(h @ w2 + b2, 0.0)
    raw = (h @ w3 + b3)[:, 0]
    z = jnp.tanh(raw)
    return z * (out_range[1] - out_range[0]) / 2 + sum(out_range) / 2


if __name__ == "__main__":
    key = jax.random.PRNGKey(0)
    pkey, xkey = jax.random.split(key)
    params = init_params(pkey)

    # Two small deterministic batches of 2D query points in [0, 1]^2:
    #   * N=2000 -> auto tile 1024, 2 grid steps (padded-tail + megacore path)
    #   * N=5000 -> auto tile 4096, 2 grid steps (large-tile path)
    for n_pts in (2000, 5000):
        xy = jax.random.uniform(jax.random.fold_in(xkey, n_pts), (n_pts, 2),
                                dtype=jnp.float32)
        z = jax.block_until_ready(neural_height_field_forward(xy, params))
        z_ref = jax.block_until_ready(reference_forward(xy, params))
        assert z.shape == (n_pts,)
        # Tolerance accounts for the f32 re-association of the folded affine /
        # 2*pi / +pi/2 phases inside sin (|s| ~ O(100) with scale=10).
        np.testing.assert_allclose(np.asarray(z), np.asarray(z_ref),
                                   rtol=2e-3, atol=2e-3)

    # TODO(synk): forward_with_grad / fit (autograd + Adam training loop) are
    # training-time utilities, not part of the forward hot path; not kernelized.
    print("KERNEL_OK")
</pallas_src>

<mosaic_0001>
module attributes {stable_mosaic.version = 11 : i64} {
  func.func @_height_field_kernel(%arg0: i32, %arg1: memref<3x1024xf32, #tpu.memory_space<vmem>>, %arg2: memref<64x386xf32, #tpu.memory_space<vmem>>, %arg3: memref<22x65xf32, #tpu.memory_space<vmem>>, %arg4: memref<1x1024xf32, #tpu.memory_space<vmem>>) attributes {dimension_semantics = [#tpu.dimension_semantics<parallel>], iteration_bounds = array<i64: 2>, scalar_prefetch = 0 : i64, scratch_operands = 0 : i64, tpu.core_type = #tpu.core_type<tc>, window_params = [{transform_indices = @transform_0, window_bounds = array<i64: 3, 1024>}, {pipeline_mode = #tpu.pipeline_mode<synchronous>, transform_indices = @transform_1, window_bounds = array<i64: 64, 386>}, {pipeline_mode = #tpu.pipeline_mode<synchronous>, transform_indices = @transform_2, window_bounds = array<i64: 22, 65>}, {transform_indices = @transform_3, window_bounds = array<i64: 1, 1024>}]} {
    %c0 = arith.constant 0 : index
    %c0_0 = arith.constant 0 : index
    %0 = vector.load %arg1[%c0, %c0_0] : memref<3x1024xf32, #tpu.memory_space<vmem>>, vector<3x1024xf32>
    %c0_1 = arith.constant 0 : index
    %c0_2 = arith.constant 0 : index
    %1 = vector.load %arg3[%c0_1, %c0_2] : memref<22x65xf32, #tpu.memory_space<vmem>>, vector<21x3xf32>
    %cst = arith.constant dense<0.000000e+00> : vector<21x1024xf32>
    %2 = tpu.matmul %1, %0, %cst {dimension_numbers = #tpu.dot_dimension_numbers<[1], [0], [0], [1], [0, 0, 1, 1], [], []>} : vector<21x3xf32>, vector<3x1024xf32>, vector<21x1024xf32> -> vector<21x1024xf32>
    %3 = math.sin %2 : vector<21x1024xf32>
    %c0_3 = arith.constant 0 : index
    %c0_4 = arith.constant 0 : index
    %4 = vector.load %arg2[%c0_3, %c0_4] : memref<64x386xf32, #tpu.memory_space<vmem>>, vector<64x21xf32>
    %cst_5 = arith.constant dense<0.000000e+00> : vector<64x1024xf32>
    %5 = tpu.matmul %4, %3, %cst_5 {dimension_numbers = #tpu.dot_dimension_numbers<[1], [0], [0], [1], [0, 0, 1, 1], [], []>} : vector<64x21xf32>, vector<21x1024xf32>, vector<64x1024xf32> -> vector<64x1024xf32>
    %cst_6 = arith.constant 0.000000e+00 : f32
    %6 = vector.broadcast %cst_6 : f32 to vector<64x1024xf32>
    %7 = arith.maximumf %5, %6 : vector<64x1024xf32>
    %c0_7 = arith.constant 0 : index
    %c128 = arith.constant 128 : index
    %8 = vector.load %arg2[%c0_7, %c128] : memref<64x386xf32, #tpu.memory_space<vmem>>, vector<64x64xf32>
    %c0_8 = arith.constant 0 : index
    %c384 = arith.constant 384 : index
    %9 = vector.load %arg2[%c0_8, %c384] : memref<64x386xf32, #tpu.memory_space<vmem>>, vector<64x1xf32>
    %cst_9 = arith.constant dense<0.000000e+00> : vector<64x1024xf32>
    %10 = tpu.matmul %8, %7, %cst_9 {dimension_numbers = #tpu.dot_dimension_numbers<[1], [0], [0], [1], [0, 0, 1, 1], [], []>} : vector<64x64xf32>, vector<64x1024xf32>, vector<64x1024xf32> -> vector<64x1024xf32>
    %11 = vector.broadcast %9 : vector<64x1xf32> to vector<64x1024xf32>
    %12 = arith.addf %10, %11 : vector<64x1024xf32>
    %cst_10 = arith.constant 0.000000e+00 : f32
    %13 = vector.broadcast %cst_10 : f32 to vector<64x1024xf32>
    %14 = arith.maximumf %12, %13 : vector<64x1024xf32>
    %c0_11 = arith.constant 0 : index
    %c256 = arith.constant 256 : index
    %15 = vector.load %arg2[%c0_11, %c256] : memref<64x386xf32, #tpu.memory_space<vmem>>, vector<64x64xf32>
    %c0_12 = arith.constant 0 : index
    %c385 = arith.constant 385 : index
    %16 = vector.load %arg2[%c0_12, %c385] : memref<64x386xf32, #tpu.memory_space<vmem>>, vector<64x1xf32>
    %cst_13 = arith.constant dense<0.000000e+00> : vector<64x1024xf32>
    %17 = tpu.matmul %15, %14, %cst_13 {dimension_numbers = #tpu.dot_dimension_numbers<[1], [0], [0], [1], [0, 0, 1, 1], [], []>} : vector<64x64xf32>, vector<64x1024xf32>, vector<64x1024xf32> -> vector<64x1024xf32>
    %18 = vector.broadcast %16 : vector<64x1xf32> to vector<64x1024xf32>
    %19 = arith.addf %17, %18 : vector<64x1024xf32>
    %cst_14 = arith.constant 0.000000e+00 : f32
    %20 = vector.broadcast %cst_14 : f32 to vector<64x1024xf32>
    %21 = arith.maximumf %19, %20 : vector<64x1024xf32>
    %c21 = arith.constant 21 : index
    %c0_15 = arith.constant 0 : index
    %22 = vector.load %arg3[%c21, %c0_15] : memref<22x65xf32, #tpu.memory_space<vmem>>, vector<1x64xf32>
    %c21_16 = arith.constant 21 : index
    %c64 = arith.constant 64 : index
    %23 = vector.load %arg3[%c21_16, %c64] : memref<22x65xf32, #tpu.memory_space<vmem>>, vector<1x1xf32>
    %cst_17 = arith.constant dense<0.000000e+00> : vector<1x1024xf32>
    %24 = tpu.matmul %22, %21, %cst_17 {dimension_numbers = #tpu.dot_dimension_numbers<[1], [0], [0], [1], [0, 0, 1, 1], [], []>} : vector<1x64xf32>, vector<64x1024xf32>, vector<1x1024xf32> -> vector<1x1024xf32>
    %25 = vector.broadcast %23 : vector<1x1xf32> to vector<1x1024xf32>
    %26 = arith.addf %24, %25 : vector<1x1024xf32>
    %27 = math.tanh %26 : vector<1x1024xf32>
    %cst_18 = arith.constant 2.000000e+00 : f32
    %28 = vector.broadcast %cst_18 : f32 to vector<1x1024xf32>
    %29 = arith.mulf %27, %28 : vector<1x1024xf32>
    %cst_19 = arith.constant 0.000000e+00 : f32
    %30 = vector.broadcast %cst_19 : f32 to vector<1x1024xf32>
    %31 = arith.addf %29, %30 : vector<1x1024xf32>
    %c0_20 = arith.constant 0 : index
    %c0_21 = arith.constant 0 : index
    %32 = vector.load %arg4[%c0_20, %c0_21] : memref<1x1024xf32, #tpu.memory_space<vmem>>, vector<1x1024xf32>
    tpu.vector_store %arg4[%c0_20, %c0_21], %31 {strides = array<i32>} : memref<1x1024xf32, #tpu.memory_space<vmem>>, vector<1x1024xf32>,
    return
  }
  func.func @transform_0(%arg0: i32) -> (i32, i32) {
    %c0_i32 = arith.constant 0 : i32
    %c0_i32_0 = arith.constant 0 : i32
    return %c0_i32, %arg0 : i32, i32
  }
  func.func @transform_1(%arg0: i32) -> (i32, i32) {
    %c0_i32 = arith.constant 0 : i32
    %c0_i32_0 = arith.constant 0 : i32
    %c0_i32_1 = arith.constant 0 : i32
    return %c0_i32, %c0_i32_0 : i32, i32
  }
  func.func @transform_2(%arg0: i32) -> (i32, i32) {
    %c0_i32 = arith.constant 0 : i32
    %c0_i32_0 = arith.constant 0 : i32
    %c0_i32_1 = arith.constant 0 : i32
    return %c0_i32, %c0_i32_0 : i32, i32
  }
  func.func @transform_3(%arg0: i32) -> (i32, i32) {
    %c0_i32 = arith.constant 0 : i32
    %c0_i32_0 = arith.constant 0 : i32
    return %c0_i32, %arg0 : i32, i32
  }
}

</mosaic_0001>

<llo_original>
// kernel: tpu_custom_call.1
$region0: #{tpu_custom_call.1}
  #allocation0 [shape = 'u32[]', space=smem, size = 0x4, offset = 0x4, fixed_abs, tag = 'smem constant byte address 0x4 - core index']
  #allocation1 [shape = 'u32[144,128]{1,0:T(1,128)}', space=vmem, size = 0x12000, scoped, tag = 'internal scratch']
  %s0 = inlined_call_operand.hbm [shape: f32[3,2048], index: 0, kind: input, shape index: {}]
  %s1 = inlined_call_operand.hbm [shape: f32[64,386], index: 1, kind: input, shape index: {}]
  %s2 = inlined_call_operand.hbm [shape: f32[22,65], index: 2, kind: input, shape index: {}]
  %s3 = inlined_call_operand.hbm [shape: f32[1,2048], index: 3, kind: output, shape index: {}]
  %s4 = sld [smem:[#allocation0]]
  $region57: #{tpu_custom_call.1} parent=0
    _
  %s6 = ssub.s32 1, %s4
  %s7 = scalar_select 0, %s6, %s4
  $region1: #{tpu_custom_call.1} parent=0
    #allocation2 [shape = 'u8[32768]{0}', space=vmem, size = 0x8000, scoped, tag = 'input window, operand 0']
    #allocation3 [shape = 's32[2]{0}', space=sflag, size = 0x8, scoped, tag = 'scoped memory for tpu_custom_call.1']
    #allocation4 [shape = 's32[2]{0}', space=sflag, size = 0x8, scoped, tag = 'scoped memory for tpu_custom_call.1']
    #allocation5 [shape = 'u8[131072]{0}', space=vmem, size = 0x20000, scoped, tag = 'input window, operand 1, single buffered']
    #allocation6 [shape = 's32[1]{0}', space=sflag, size = 0x4, scoped, tag = 'scoped memory for tpu_custom_call.1']
    #allocation7 [shape = 'u8[12288]{0}', space=vmem, size = 0x3000, scoped, tag = 'input window, operand 2, single buffered']
    #allocation8 [shape = 'u8[8192]{0}', space=vmem, size = 0x2000, scoped, tag = 'output window, operand 0']
    %8 = vsyncpa [#allocation3], 0
    %s9 = scalar_lea.sflag [#allocation3], 1
    %10 = vsyncpa %s9, 0
    %11 = vsyncpa [#allocation6], 0
    %12 = vsyncpa [#allocation4], 0
    %s13 = scalar_lea.sflag [#allocation4], 1
    %14 = vsyncpa %s13, 0
    loop: start=0, step=1, limit=4
    $region2: #{tpu_custom_call.1} parent=1 // loop_pre_header
      _
    $region3: #{tpu_custom_call.1} parent=1 // loop_header
      %s16 = sphi 0, %s20
      %p17 = scmp.ge.s32.totalorder %s16, 4
      %s26 = sphi 0, %s28
      %s29 = sphi 0, %s26
      %s30 = sphi 0, %s29
      %s46 = sphi 0, %s30
      %s50 = sphi 0, %s50
      %s52 = sphi 0, %s50
      %s53 = sphi 0, %s52
      %s67 = sphi 0, %s53
      %s71 = sphi 0, %s71
      %s73 = sphi 0, %s71
      %s74 = sphi 0, %s73
      %s88 = sphi 0, %s74
      %s94 = sphi 0, %s96
      %s97 = sphi 0, %s94
      %s98 = sphi 0, %s97
      %s114 = sphi 0, %s98
    $region4: #{tpu_custom_call.1} parent=1 // loop_header_branch
      %19 = sbr.rel (%p17) target = $region8
    $region5: #{tpu_custom_call.1} parent=1 // loop_body
      %s21 = ssub.s32 %s16, 1
      %s22 = ssub.s32 %s16, 2
      %s23 = sadd.s32 %s16, 1
      %s24 = ssub.s32 %s16, %s23
      %p25 = scmp.eq.s32.totalorder %s24, 0
      %s27 = sadd.s32 %s26, 1
      %s28 = scalar_select %p25, %s26, %s27
      %p31 = pneg %p25
      %p32 = scmp.eq.s32.totalorder %s16, 1
      %p33 = por %p31, %p32
      %p34 = scmp.ne.s32.totalorder %s26, %s29
      %p35 = scmp.eq.s32.totalorder %s16, 0
      %p36 = por %p34, %p35
      %p37 = scmp.ne.s32.totalorder %s26, %s29
      %p38 = scmp.eq.s32.totalorder %s21, 1
      %p39 = por %p37, %p38
      %p40 = scmp.ne.s32.totalorder %s29, %s30
      %p41 = scmp.eq.s32.totalorder %s21, 0
      %p42 = por %p40, %p41
      %p43 = scmp.ne.s32.totalorder %s29, %s30
      %p44 = scmp.eq.s32.totalorder %s22, 1
      %p45 = por %p43, %p44
      %p47 = scmp.ne.s32.totalorder %s30, %s46
      %p48 = scmp.eq.s32.totalorder %s22, 0
      %p49 = por %p47, %p48
      %s51 = sadd.s32 %s50, 1
      %p54 = scmp.eq.s32.totalorder %s16, 1
      %p55 = scmp.ne.s32.totalorder %s50, %s52
      %p56 = scmp.eq.s32.totalorder %s16, 0
      %p57 = por %p55, %p56
      %p58 = scmp.ne.s32.totalorder %s50, %s52
      %p59 = scmp.eq.s32.totalorder %s21, 1
      %p60 = por %p58, %p59
      %p61 = scmp.ne.s32.totalorder %s52, %s53
      %p62 = scmp.eq.s32.totalorder %s21, 0
      %p63 = por %p61, %p62
      %p64 = scmp.ne.s32.totalorder %s52, %s53
      %p65 = scmp.eq.s32.totalorder %s22, 1
      %p66 = por %p64, %p65
      %p68 = scmp.ne.s32.totalorder %s53, %s67
      %p69 = scmp.eq.s32.totalorder %s22, 0
      %p70 = por %p68, %p69
      %s72 = sadd.s32 %s71, 1
      %p75 = scmp.eq.s32.totalorder %s16, 1
      %p76 = scmp.ne.s32.totalorder %s71, %s73
      %p77 = scmp.eq.s32.totalorder %s16, 0
      %p78 = por %p76, %p77
      %p79 = scmp.ne.s32.totalorder %s71, %s73
      %p80 = scmp.eq.s32.totalorder %s21, 1
      %p81 = por %p79, %p80
      %p82 = scmp.ne.s32.totalorder %s73, %s74
      %p83 = scmp.eq.s32.totalorder %s21, 0
      %p84 = por %p82, %p83
      %p85 = scmp.ne.s32.totalorder %s73, %s74
      %p86 = scmp.eq.s32.totalorder %s22, 1
      %p87 = por %p85, %p86
      %p89 = scmp.ne.s32.totalorder %s74, %s88
      %p90 = scmp.eq.s32.totalorder %s22, 0
      %p91 = por %p89, %p90
      %s92 = ssub.s32 %s16, %s23
      %p93 = scmp.eq.s32.totalorder %s92, 0
      %s95 = sadd.s32 %s94, 1
      %s96 = scalar_select %p93, %s94, %s95
      %p99 = pneg %p93
      %p100 = scmp.eq.s32.totalorder %s16, 1
      %p101 = por %p99, %p100
      %p102 = scmp.ne.s32.totalorder %s94, %s97
      %p103 = scmp.eq.s32.totalorder %s16, 0
      %p104 = por %p102, %p103
      %p105 = scmp.ne.s32.totalorder %s94, %s97
      %p106 = scmp.eq.s32.totalorder %s21, 1
      %p107 = por %p105, %p106
      %p108 = scmp.ne.s32.totalorder %s97, %s98
      %p109 = scmp.eq.s32.totalorder %s21, 0
      %p110 = por %p108, %p109
      %p111 = scmp.ne.s32.totalorder %s97, %s98
      %p112 = scmp.eq.s32.totalorder %s22, 1
      %p113 = por %p111, %p112
      %p115 = scmp.ne.s32.totalorder %s98, %s114
      %p116 = scmp.eq.s32.totalorder %s22, 0
      %p117 = por %p115, %p116
      %p118 = scmp.le.s32.totalorder 1, %s16
      %p119 = scmp.lt.s32.totalorder %s16, 3
      %p120 = pnand %p118, %p119
      %p121 = pneg %p120
      // Predicated region
      $region9: #{tpu_custom_call.1} parent=5 // pred_check
        _
      $region10: #{tpu_custom_call.1} parent=5 // pred_check_branch
        %123 = sbr.rel (%p120) target = $region12
      $region11: #{tpu_custom_call.1} parent=5 // pred_region
        %s124 = ssub.s32 %s16, 1
        // Predicated region
        $region13: #{tpu_custom_call.1} parent=11 // pred_check
          %p125 = pneg %p63
        $region14: #{tpu_custom_call.1} parent=11 // pred_check_branch
          %127 = sbr.rel (%p125) target = $region16
        $region15: #{tpu_custom_call.1} parent=11 // pred_region
          %s129 = ssub.s32 4096, 4096
          %130 = vsyncadd [#allocation6], %s129
          %s131 = sshll.u32 [#allocation5], 4
          %s132 = int_to_ptr.vmem [resolvable:$true] %s131
          %137 = dma.hbm_to_vmem [thread:$0]  %s1, 4096, %s132, [#allocation6], 512, 512, 32
        $region16: #{tpu_custom_call.1} parent=11 // pred_fallthru
          _
        // Predicated region
        $region17: #{tpu_custom_call.1} parent=11 // pred_check
          %p138 = pneg %p84
        $region18: #{tpu_custom_call.1} parent=11 // pred_check_branch
          %140 = sbr.rel (%p138) target = $region20
        $region19: #{tpu_custom_call.1} parent=11 // pred_region
          %s142 = ssub.s32 384, 384
          %143 = vsyncadd [#allocation6], %s142
          %s144 = sshll.u32 [#allocation7], 4
          %s145 = int_to_ptr.vmem [resolvable:$true] %s144
          %150 = dma.hbm_to_vmem [thread:$0]  %s2, 384, %s145, [#allocation6], 128, 128, 8
        $region20: #{tpu_custom_call.1} parent=11 // pred_fallthru
          _
      $region12: #{tpu_custom_call.1} parent=5 // pred_fallthru
        _
      %p151 = scmp.lt.s32.totalorder %s16, 2
      // Predicated region
      $region21: #{tpu_custom_call.1} parent=5 // pred_check
        %p152 = pneg %p151
      $region22: #{tpu_custom_call.1} parent=5 // pred_check_branch
        %154 = sbr.rel (%p152) target = $region24
      $region23: #{tpu_custom_call.1} parent=5 // pred_region
        // Predicated region
        $region25: #{tpu_custom_call.1} parent=23 // pred_check
          %p155 = pneg %p36
        $region26: #{tpu_custom_call.1} parent=23 // pred_check_branch
          %157 = sbr.rel (%p155) target = $region28
        $region27: #{tpu_custom_call.1} parent=23 // pred_region
          %s158 = sand.u32 %s26, 1
          %s159 = scalar_lea.sflag [#allocation3], %s158
          %s160 = sand.u32 %s26, 1
          %s161 = smul.addr %s160, 32
          %s162 = scalar_lea.vmem [#allocation2], %s161
          %s163 = smul.u32 8, %s16
          %s165 = ssub.s32 512, 512
          %166 = vsyncadd %s159, %s165
          %s167 = smul.addr %s163, 64
          %s168 = scalar_lea.hbm %s0, %s167
          %s170 = sshll.u32 %s162, 4
          %s171 = int_to_ptr.vmem [resolvable:$true] %s170
          %173 = dma.hbm_to_vmem [thread:$0]  %s168, 512, %s171, %s159
        $region28: #{tpu_custom_call.1} parent=23 // pred_fallthru
          _
      $region24: #{tpu_custom_call.1} parent=5 // pred_fallthru
        _
      %p174 = scmp.le.s32.totalorder 1, %s16
      %p175 = scmp.lt.s32.totalorder %s16, 3
      %p176 = pnand %p174, %p175
      %p177 = pneg %p176
      // Predicated region
      $region29: #{tpu_custom_call.1} parent=5 // pred_check
        _
      $region30: #{tpu_custom_call.1} parent=5 // pred_check_branch
        %179 = sbr.rel (%p176) target = $region32
      $region31: #{tpu_custom_call.1} parent=5 // pred_region
        %s180 = ssub.s32 %s16, 1
        %s181 = sand.u32 %s29, 1
        %s182 = scalar_lea.sflag [#allocation3], %s181
        %s183 = sand.u32 %s29, 1
        %s184 = smul.addr %s183, 32
        %s185 = scalar_lea.vmem [#allocation2], %s184
        // Predicated region
        $region33: #{tpu_custom_call.1} parent=31 // pred_check
          %p186 = pneg %p42
        $region34: #{tpu_custom_call.1} parent=31 // pred_check_branch
          %188 = sbr.rel (%p186) target = $region36
        $region35: #{tpu_custom_call.1} parent=31 // pred_region
          %189 = dma.done %s182, 512
        $region36: #{tpu_custom_call.1} parent=31 // pred_fallthru
          _
        // Predicated region
        $region37: #{tpu_custom_call.1} parent=31 // pred_check
          %p190 = pneg %p63
        $region38: #{tpu_custom_call.1} parent=31 // pred_check_branch
          %192 = sbr.rel (%p190) target = $region40
        $region39: #{tpu_custom_call.1} parent=31 // pred_region
          %193 = dma.done [#allocation6], 4096
        $region40: #{tpu_custom_call.1} parent=31 // pred_fallthru
          _
        // Predicated region
        $region41: #{tpu_custom_call.1} parent=31 // pred_check
          %p194 = pneg %p84
        $region42: #{tpu_custom_call.1} parent=31 // pred_check_branch
          %196 = sbr.rel (%p194) target = $region44
        $region43: #{tpu_custom_call.1} parent=31 // pred_region
          %197 = dma.done [#allocation6], 384
        $region44: #{tpu_custom_call.1} parent=31 // pred_fallthru
          _
        %s198 = sand.u32 %s29, 1
        %s199 = scalar_lea.sflag [#allocation3], %s198
        %s200 = sand.u32 %s29, 1
        %s201 = smul.addr %s200, 32
        %s202 = scalar_lea.vmem [#allocation2], %s201
        %p203 = pneg %p42
        %p204 = pneg %p39
        %p205 = pneg %p63
        %p206 = pneg %p60
        %p207 = pneg %p84
        %p208 = pneg %p81
        %p209 = pneg %p110
        %p210 = pneg %p107
        %s211 = sand.u32 %s97, 1
        %s212 = scalar_lea.sflag [#allocation4], %s211
        %s213 = sand.u32 %s97, 1
        %s214 = smul.addr %s213, 8
        %s215 = scalar_lea.vmem [#allocation8], %s214
        %s216 = smul.u32 8, %s21
        %s217 = smul.u32 8, %s21
        %v218 = vld [vmem:[%s185] sm:$0x77]
        %v219 = vld [vmem:[%s185 + $0x8] sm:$0x77]
        %v220 = vld [vmem:[%s185 + $0x10] sm:$0x77]
        %v221 = vld [vmem:[%s185 + $0x18] sm:$0x77]
        %v222 = vld [vmem:[#allocation7] sm:$0xff]
        %v223 = vld [vmem:[#allocation7 + $0x8] sm:$0xff]
        %v224 = vld [vmem:[#allocation7 + $0x10] sm:$0x1f]
        %v229 = vcombine.high %v218, %v218
        %v230 = vcombine.high %v219, %v219
        %v231 = vcombine.high %v220, %v220
        %v232 = vcombine.high %v221, %v221
        %vm233 = vcmask 23552
        %v235 = vsel %vm233, %v222, 0
        %v238 = vsel %vm233, %v223, 0
        %v241 = vsel %vm233, %v224, 0
        %vm243 = vcmask 1042432
        %v244 = vsel %vm243, %v218, 0
        %v246 = vsel %vm243, %v229, 0
        %v248 = vsel %vm243, %v219, 0
        %v250 = vsel %vm243, %v230, 0
        %v252 = vsel %vm243, %v220, 0
        %v254 = vsel %vm243, %v231, 0
        %v256 = vsel %vm243, %v221, 0
        %v258 = vsel %vm243, %v232, 0
        %260 = vmatprep.subr.mxu0 %v246
        %261 = vmatpush1.msra.mxu0 %v244
        %262 = vmatprep.subr.mxu0 0.0
        %263 = vmatpush1.msra.mxu0 0.0
        %264 = vmatprep.subr.mxu0 0.0
        %265 = vmatpush1.msra.mxu0 0.0
        %266 = vmatprep.subr.mxu0 0.0
        %267 = vmatpush1.msra.mxu0 0.0
        %268 = vmatprep.subr.mxu0 0.0
        %269 = vmatpush1.msra.mxu0 0.0
        %270 = vmatprep.subr.mxu0 0.0
        %271 = vmatpush1.msra.mxu0 0.0
        %272 = vmatprep.subr.mxu0 0.0
        %273 = vmatpush1.msra.mxu0 0.0
        %274 = vmatprep.subr.mxu0 0.0
        %275 = vmatpush1.msra.mxu0 0.0
        %276 = vmatprep.subr.mxu0 0.0
        %277 = vmatpush1.msra.mxu0 0.0
        %278 = vmatprep.subr.mxu0 0.0
        %279 = vmatpush1.msra.mxu0 0.0
        %280 = vmatprep.subr.mxu0 0.0
        %281 = vmatpush1.msra.mxu0 0.0
        %282 = vmatprep.subr.mxu0 0.0
        %283 = vmatpush1.msra.mxu0 0.0
        %284 = vmatprep.subr.mxu0 0.0
        %285 = vmatpush1.msra.mxu0 0.0
        %286 = vmatprep.subr.mxu0 0.0
        %287 = vmatpush1.msra.mxu0 0.0
        %288 = vmatprep.subr.mxu0 0.0
        %289 = vmatpush1.msra.mxu0 0.0
        %290 = vmatprep.subr.mxu0 0.0
        %291 = vmatpush1.msra.mxu0 0.0
        %292 = vmatprep.subr.mxu0 0.0
        %293 = vmatpush1.msra.mxu0 0.0
        %294 = vmatprep.subr.mxu0 0.0
        %295 = vmatpush1.msra.mxu0 0.0
        %296 = vmatprep.subr.mxu0 0.0
        %297 = vmatpush1.msra.mxu0 0.0
        %298 = vmatprep.subr.mxu0 0.0
        %299 = vmatpush1.msra.mxu0 0.0
        %300 = vmatprep.subr.mxu0 0.0
        %301 = vmatpush1.msra.mxu0 0.0
        %302 = vmatprep.subr.mxu0 0.0
        %303 = vmatpush1.msra.mxu0 0.0
        %304 = vmatprep.subr.mxu0 0.0
        %305 = vmatpush1.msra.mxu0 0.0
        %306 = vmatprep.subr.mxu0 0.0
        %307 = vmatpush1.msra.mxu0 0.0
        %308 = vmatprep.subr.mxu0 0.0
        %309 = vmatpush1.msra.mxu0 0.0
        %310 = vmatprep.subr.mxu0 0.0
        %311 = vmatpush1.msra.mxu0 0.0
        %312 = vmatprep.subr.mxu0 0.0
        %313 = vmatpush1.msra.mxu0 0.0
        %314 = vmatprep.subr.mxu0 0.0
        %315 = vmatpush1.msra.mxu0 0.0
        %316 = vmatprep.subr.mxu0 0.0
        %317 = vmatpush1.msra.mxu0 0.0
        %318 = vmatprep.subr.mxu0 0.0
        %319 = vmatpush1.msra.mxu0 0.0
        %320 = vmatprep.subr.mxu0 0.0
        %321 = vmatpush1.msra.mxu0 0.0
        %322 = vmatprep.subr.mxu0 0.0
        %323 = vmatpush1.msra.mxu0 0.0
        %324 = vmatprep.mubr.f32.mxu0 0.0
        %325 = vmatmul.mubr.f32.gmra.mrb[0].mxu0 %v235
        %v326 = vpop.f32.mrb[0].mxu0
        %v327 = vadd.f32 0.0, %v326
        %v328 = vpop.f32.mrb[0].mxu0
        %v329 = vadd.f32 0.0, %v328
        %330 = vmatprep.mubr.f32.mxu0 0.0
        %331 = vmatmul.mubr.f32.gmra.mrb[0].mxu0 %v238
        %v332 = vpop.f32.mrb[0].mxu0
        %v333 = vadd.f32 0.0, %v332
        %v334 = vpop.f32.mrb[0].mxu0
        %v335 = vadd.f32 0.0, %v334
        %336 = vmatprep.mubr.f32.mxu0 0.0
        %337 = vmatmul.mubr.f32.gmra.mrb[0].mxu0 %v241
        %v338 = vpop.f32.mrb[0].mxu0
        %v339 = vadd.f32 0.0, %v338
        %v340 = vpop.f32.mrb[0].mxu0
        %v341 = vadd.f32 0.0, %v340
        %342 = vdwg.mxu0
        %343 = vmatprep.subr.mxu0 %v250
        %344 = vmatpush1.msra.mxu0 %v248
        %345 = vmatprep.subr.mxu0 0.0
        %346 = vmatpush1.msra.mxu0 0.0
        %347 = vmatprep.subr.mxu0 0.0
        %348 = vmatpush1.msra.mxu0 0.0
        %349 = vmatprep.subr.mxu0 0.0
        %350 = vmatpush1.msra.mxu0 0.0
        %351 = vmatprep.subr.mxu0 0.0
        %352 = vmatpush1.msra.mxu0 0.0
        %353 = vmatprep.subr.mxu0 0.0
        %354 = vmatpush1.msra.mxu0 0.0
        %355 = vmatprep.subr.mxu0 0.0
        %356 = vmatpush1.msra.mxu0 0.0
        %357 = vmatprep.subr.mxu0 0.0
        %358 = vmatpush1.msra.mxu0 0.0
        %359 = vmatprep.subr.mxu0 0.0
        %360 = vmatpush1.msra.mxu0 0.0
        %361 = vmatprep.subr.mxu0 0.0
        %362 = vmatpush1.msra.mxu0 0.0
        %363 = vmatprep.subr.mxu0 0.0
        %364 = vmatpush1.msra.mxu0 0.0
        %365 = vmatprep.subr.mxu0 0.0
        %366 = vmatpush1.msra.mxu0 0.0
        %367 = vmatprep.subr.mxu0 0.0
        %368 = vmatpush1.msra.mxu0 0.0
        %369 = vmatprep.subr.mxu0 0.0
        %370 = vmatpush1.msra.mxu0 0.0
        %371 = vmatprep.subr.mxu0 0.0
        %372 = vmatpush1.msra.mxu0 0.0
        %373 = vmatprep.subr.mxu0 0.0
        %374 = vmatpush1.msra.mxu0 0.0
        %375 = vmatprep.subr.mxu0 0.0
        %376 = vmatpush1.msra.mxu0 0.0
        %377 = vmatprep.subr.mxu0 0.0
        %378 = vmatpush1.msra.mxu0 0.0
        %379 = vmatprep.subr.mxu0 0.0
        %380 = vmatpush1.msra.mxu0 0.0
        %381 = vmatprep.subr.mxu0 0.0
        %382 = vmatpush1.msra.mxu0 0.0
        %383 = vmatprep.subr.mxu0 0.0
        %384 = vmatpush1.msra.mxu0 0.0
        %385 = vmatprep.subr.mxu0 0.0
        %386 = vmatpush1.msra.mxu0 0.0
        %387 = vmatprep.subr.mxu0 0.0
        %388 = vmatpush1.msra.mxu0 0.0
        %389 = vmatprep.subr.mxu0 0.0
        %390 = vmatpush1.msra.mxu0 0.0
        %391 = vmatprep.subr.mxu0 0.0
        %392 = vmatpush1.msra.mxu0 0.0
        %393 = vmatprep.subr.mxu0 0.0
        %394 = vmatpush1.msra.mxu0 0.0
        %395 = vmatprep.subr.mxu0 0.0
        %396 = vmatpush1.msra.mxu0 0.0
        %397 = vmatprep.subr.mxu0 0.0
        %398 = vmatpush1.msra.mxu0 0.0
        %399 = vmatprep.subr.mxu0 0.0
        %400 = vmatpush1.msra.mxu0 0.0
        %401 = vmatprep.subr.mxu0 0.0
        %402 = vmatpush1.msra.mxu0 0.0
        %403 = vmatprep.subr.mxu0 0.0
        %404 = vmatpush1.msra.mxu0 0.0
        %405 = vmatprep.subr.mxu0 0.0
        %406 = vmatpush1.msra.mxu0 0.0
        %407 = vmatprep.mubr.f32.mxu0 0.0
        %408 = vmatmul.mubr.f32.gmra.mrb[0].mxu0 %v235
        %v409 = vpop.f32.mrb[0].mxu0
        %v410 = vadd.f32 0.0, %v409
        %v411 = vpop.f32.mrb[0].mxu0
        %v412 = vadd.f32 0.0, %v411
        %413 = vmatprep.mubr.f32.mxu0 0.0
        %414 = vmatmul.mubr.f32.gmra.mrb[0].mxu0 %v238
        %v415 = vpop.f32.mrb[0].mxu0
        %v416 = vadd.f32 0.0, %v415
        %v417 = vpop.f32.mrb[0].mxu0
        %v418 = vadd.f32 0.0, %v417
        %419 = vmatprep.mubr.f32.mxu0 0.0
        %420 = vmatmul.mubr.f32.gmra.mrb[0].mxu0 %v241
        %v421 = vpop.f32.mrb[0].mxu0
        %v422 = vadd.f32 0.0, %v421
        %v423 = vpop.f32.mrb[0].mxu0
        %v424 = vadd.f32 0.0, %v423
        %425 = vdwg.mxu0
        %426 = vmatprep.subr.mxu0 %v254
        %427 = vmatpush1.msra.mxu0 %v252
        %428 = vmatprep.subr.mxu0 0.0
        %429 = vmatpush1.msra.mxu0 0.0
        %430 = vmatprep.subr.mxu0 0.0
        %431 = vmatpush1.msra.mxu0 0.0
        %432 = vmatprep.subr.mxu0 0.0
        %433 = vmatpush1.msra.mxu0 0.0
        %434 = vmatprep.subr.mxu0 0.0
        %435 = vmatpush1.msra.mxu0 0.0
        %436 = vmatprep.subr.mxu0 0.0
        %437 = vmatpush1.msra.mxu0 0.0
        %438 = vmatprep.subr.mxu0 0.0
        %439 = vmatpush1.msra.mxu0 0.0
        %440 = vmatprep.subr.mxu0 0.0
        %441 = vmatpush1.msra.mxu0 0.0
        %442 = vmatprep.subr.mxu0 0.0
        %443 = vmatpush1.msra.mxu0 0.0
        %444 = vmatprep.subr.mxu0 0.0
        %445 = vmatpush1.msra.mxu0 0.0
        %446 = vmatprep.subr.mxu0 0.0
        %447 = vmatpush1.msra.mxu0 0.0
        %448 = vmatprep.subr.mxu0 0.0
        %449 = vmatpush1.msra.mxu0 0.0
        %450 = vmatprep.subr.mxu0 0.0
        %451 = vmatpush1.msra.mxu0 0.0
        %452 = vmatprep.subr.mxu0 0.0
        %453 = vmatpush1.msra.mxu0 0.0
        %454 = vmatprep.subr.mxu0 0.0
        %455 = vmatpush1.msra.mxu0 0.0
        %456 = vmatprep.subr.mxu0 0.0
        %457 = vmatpush1.msra.mxu0 0.0
        %458 = vmatprep.subr.mxu0 0.0
        %459 = vmatpush1.msra.mxu0 0.0
        %460 = vmatprep.subr.mxu0 0.0
        %461 = vmatpush1.msra.mxu0 0.0
        %462 = vmatprep.subr.mxu0 0.0
        %463 = vmatpush1.msra.mxu0 0.0
        %464 = vmatprep.subr.mxu0 0.0
        %465 = vmatpush1.msra.mxu0 0.0
        %466 = vmatprep.subr.mxu0 0.0
        %467 = vmatpush1.msra.mxu0 0.0
        %468 = vmatprep.subr.mxu0 0.0
        %469 = vmatpush1.msra.mxu0 0.0
        %470 = vmatprep.subr.mxu0 0.0
        %471 = vmatpush1.msra.mxu0 0.0
        %472 = vmatprep.subr.mxu0 0.0
        %473 = vmatpush1.msra.mxu0 0.0
        %474 = vmatprep.subr.mxu0 0.0
        %475 = vmatpush1.msra.mxu0 0.0
        %476 = vmatprep.subr.mxu0 0.0
        %477 = vmatpush1.msra.mxu0 0.0
        %478 = vmatprep.subr.mxu0 0.0
        %479 = vmatpush1.msra.mxu0 0.0
        %480 = vmatprep.subr.mxu0 0.0
        %481 = vmatpush1.msra.mxu0 0.0
        %482 = vmatprep.subr.mxu0 0.0
        %483 = vmatpush1.msra.mxu0 0.0
        %484 = vmatprep.subr.mxu0 0.0
        %485 = vmatpush1.msra.mxu0 0.0
        %486 = vmatprep.subr.mxu0 0.0
        %487 = vmatpush1.msra.mxu0 0.0
        %488 = vmatprep.subr.mxu0 0.0
        %489 = vmatpush1.msra.mxu0 0.0
        %490 = vmatprep.mubr.f32.mxu0 0.0
        %491 = vmatmul.mubr.f32.gmra.mrb[0].mxu0 %v235
        %v492 = vpop.f32.mrb[0].mxu0
        %v493 = vadd.f32 0.0, %v492
        %v494 = vpop.f32.mrb[0].mxu0
        %v495 = vadd.f32 0.0, %v494
        %496 = vmatprep.mubr.f32.mxu0 0.0
        %497 = vmatmul.mubr.f32.gmra.mrb[0].mxu0 %v238
        %v498 = vpop.f32.mrb[0].mxu0
        %v499 = vadd.f32 0.0, %v498
        %v500 = vpop.f32.mrb[0].mxu0
        %v501 = vadd.f32 0.0, %v500
        %502 = vmatprep.mubr.f32.mxu0 0.0
        %503 = vmatmul.mubr.f32.gmra.mrb[0].mxu0 %v241
        %v504 = vpop.f32.mrb[0].mxu0
        %v505 = vadd.f32 0.0, %v504
        %v506 = vpop.f32.mrb[0].mxu0
        %v507 = vadd.f32 0.0, %v506
        %508 = vdwg.mxu0
        %509 = vmatprep.subr.mxu0 %v258
        %510 = vmatpush1.msra.mxu0 %v256
        %511 = vmatprep.subr.mxu0 0.0
        %512 = vmatpush1.msra.mxu0 0.0
        %513 = vmatprep.subr.mxu0 0.0
        %514 = vmatpush1.msra.mxu0 0.0
        %515 = vmatprep.subr.mxu0 0.0
        %516 = vmatpush1.msra.mxu0 0.0
        %517 = vmatprep.subr.mxu0 0.0
        %518 = vmatpush1.msra.mxu0 0.0
        %519 = vmatprep.subr.mxu0 0.0
        %520 = vmatpush1.msra.mxu0 0.0
        %521 = vmatprep.subr.mxu0 0.0
        %522 = vmatpush1.msra.mxu0 0.0
        %523 = vmatprep.subr.mxu0 0.0
        %524 = vmatpush1.msra.mxu0 0.0
        %525 = vmatprep.subr.mxu0 0.0
        %526 = vmatpush1.msra.mxu0 0.0
        %527 = vmatprep.subr.mxu0 0.0
        %528 = vmatpush1.msra.mxu0 0.0
        %529 = vmatprep.subr.mxu0 0.0
        %530 = vmatpush1.msra.mxu0 0.0
        %531 = vmatprep.subr.mxu0 0.0
        %532 = vmatpush1.msra.mxu0 0.0
        %533 = vmatprep.subr.mxu0 0.0
        %534 = vmatpush1.msra.mxu0 0.0
        %535 = vmatprep.subr.mxu0 0.0
        %536 = vmatpush1.msra.mxu0 0.0
        %537 = vmatprep.subr.mxu0 0.0
        %538 = vmatpush1.msra.mxu0 0.0
        %539 = vmatprep.subr.mxu0 0.0
        %540 = vmatpush1.msra.mxu0 0.0
        %541 = vmatprep.subr.mxu0 0.0
        %542 = vmatpush1.msra.mxu0 0.0
        %543 = vmatprep.subr.mxu0 0.0
        %544 = vmatpush1.msra.mxu0 0.0
        %545 = vmatprep.subr.mxu0 0.0
        %546 = vmatpush1.msra.mxu0 0.0
        %547 = vmatprep.subr.mxu0 0.0
        %548 = vmatpush1.msra.mxu0 0.0
        %549 = vmatprep.subr.mxu0 0.0
        %550 = vmatpush1.msra.mxu0 0.0
        %551 = vmatprep.subr.mxu0 0.0
        %552 = vmatpush1.msra.mxu0 0.0
        %553 = vmatprep.subr.mxu0 0.0
        %554 = vmatpush1.msra.mxu0 0.0
        %555 = vmatprep.subr.mxu0 0.0
        %556 = vmatpush1.msra.mxu0 0.0
        %557 = vmatprep.subr.mxu0 0.0
        %558 = vmatpush1.msra.mxu0 0.0
        %559 = vmatprep.subr.mxu0 0.0
        %560 = vmatpush1.msra.mxu0 0.0
        %561 = vmatprep.subr.mxu0 0.0
        %562 = vmatpush1.msra.mxu0 0.0
        %563 = vmatprep.subr.mxu0 0.0
        %564 = vmatpush1.msra.mxu0 0.0
        %565 = vmatprep.subr.mxu0 0.0
        %566 = vmatpush1.msra.mxu0 0.0
        %567 = vmatprep.subr.mxu0 0.0
        %568 = vmatpush1.msra.mxu0 0.0
        %569 = vmatprep.subr.mxu0 0.0
        %570 = vmatpush1.msra.mxu0 0.0
        %571 = vmatprep.subr.mxu0 0.0
        %572 = vmatpush1.msra.mxu0 0.0
        %573 = vmatprep.mubr.f32.mxu0 0.0
        %574 = vmatmul.mubr.f32.gmra.mrb[0].mxu0 %v235
        %v575 = vpop.f32.mrb[0].mxu0
        %v576 = vadd.f32 0.0, %v575
        %v577 = vpop.f32.mrb[0].mxu0
        %v578 = vadd.f32 0.0, %v577
        %579 = vmatprep.mubr.f32.mxu0 0.0
        %580 = vmatmul.mubr.f32.gmra.mrb[0].mxu0 %v238
        %v581 = vpop.f32.mrb[0].mxu0
        %v582 = vadd.f32 0.0, %v581
        %v583 = vpop.f32.mrb[0].mxu0
        %v584 = vadd.f32 0.0, %v583
        %585 = vmatprep.mubr.f32.mxu0 0.0
        %586 = vmatmul.mubr.f32.gmra.mrb[0].mxu0 %v241
        %v587 = vpop.f32.mrb[0].mxu0
        %v588 = vadd.f32 0.0, %v587
        %v589 = vpop.f32.mrb[0].mxu0
        %v590 = vadd.f32 0.0, %v589
        %591 = vdwg.mxu0
        %v592 = vand.u32 2147483647, %v327
        %vm593 = vcmp.le.f32.partialorder %v592, 0.7853982
        %vm594 = vcmp.lt.s32.totalorder %v327, 0
        %v595 = vand.u32 %v327, 2139095040
        %v596 = vshrl.u32 %v595, 23
        %v597 = vsub.s32 %v596, 127
        %v598 = vand.u32 2147483647, %v327
        %v599 = vand.u32 %v598, 8388607
        %v600 = vor.u32 %v599, 8388608
        %v601 = vsub.s32 0, %v600
        %v602 = vadd.s32 %v597, 1
        %vm603 = vcmp.gt.s32.totalorder %v602, 0
        %v604 = vsel %vm603, %v602, 0
        %v605 = vshrl.u32 %v604, 5
        %v606 = vand.u32 %v604, 31
        %v607 = vsub.s32 32, %v606
        %v608 = vshrl.u32 683565275, %v607
        %v609 = vshll.u32 683565275, %v606
        %v610 = vshrl.u32 2475754826, %v607
        %v611 = vor.u32 %v609, %v610
        %v612 = vshll.u32 2475754826, %v606
        %v613 = vshrl.u32 2131351028, %v607
        %v614 = vor.u32 %v612, %v613
        %v615 = vshll.u32 2131351028, %v606
        %v616 = vshrl.u32 2102212464, %v607
        %v617 = vor.u32 %v615, %v616
        %v618 = vshll.u32 2102212464, %v606
        %v619 = vshrl.u32 920167782, %v607
        %v620 = vor.u32 %v618, %v619
        %v621 = vshll.u32 920167782, %v606
        %v622 = vshrl.u32 1326507024, %v607
        %v623 = vor.u32 %v621, %v622
        %vm624 = vcmp.lt.s32.totalorder %v605, 1
        %vm625 = vcmp.lt.s32.totalorder %v605, 2
        %vm626 = vcmp.lt.s32.totalorder %v605, 3
        %vm627 = vcmp.lt.s32.totalorder %v605, 4
        %v628 = vsel %vm624, %v608, %v611
        %v629 = vsel %vm627, %v617, 2102212464
        %v630 = vsel %vm626, %v614, %v629
        %v631 = vsel %vm625, %v628, %v630
        %v632 = vsel %vm624, %v611, %v614
        %v633 = vsel %vm627, %v620, 920167782
        %v634 = vsel %vm626, %v617, %v633
        %v635 = vsel %vm625, %v632, %v634
        %v636 = vsel %vm624, %v614, %v617
        %v637 = vsel %vm627, %v623, 1326507024
        %v638 = vsel %vm626, %v620, %v637
        %v639 = vsel %vm625, %v636, %v638
        %v640 = vshll.u32 %v600, 8
        %v641 = vmul.u32.u64.compose %v640, %v639
        %v642 = vextract.low.u32 %v641
        %v643 = vextract.high.u32 %v641
        %v644 = vmul.u32.u64.compose %v640, %v635
        %v645 = vextract.low.u32 %v644
        %v646 = vextract.high.u32 %v644
        %v647 = vmul.u32 %v640, %v631
        %v648 = vadd.s32 %v643, %v645
        %vm649 = vc.u32 %v643, %v645
        %v650 = vadd.s32 %v646, 1
        %v651 = vsel %vm649, %v650, %v646
        %v652 = vadd.s32 %v647, %v651
        %v653 = vadd.s32 %v652, 536870912
        %v654 = vshrl.u32 %v653, 30
        %v655 = vshll.u32 %v654, 30
        %v656 = vsub.s32 %v652, %v655
        %vm657 = vcmp.lt.s32.totalorder %v656, 0
        %v658 = vsub.s32 0, %v656
        %v659 = vsel %vm657, %v658, %v656
        %v660 = vclz %v659
        %v661 = vsub.s32 %v660, 2
        %vm662 = vcmp.gt.s32.totalorder 0, %v661
        %v663 = vsel %vm662, 0, %v661
        %v664 = vsub.s32 32, %v663
        %v665 = vshll.u32 %v656, %v663
        %v666 = vshrl.u32 %v648, %v664
        %v667 = vor.u32 %v665, %v666
        %v668 = vsub.s32 4294967266, %v663
        %v669 = vadd.s32 %v668, 127
        %v670 = vshll.u32 %v669, 23
        %v671 = vor.u32 4788187, %v670
        %v672 = vand.u32 2147483647, %v671
        %v674 = vcvt.s32.f32 %v667
        %v675 = vmul.f32 %v674, %v672
        %v676 = vxor.u32 %v675, 2147483648
        %v677 = vsel %vm594, %v676, %v675
        %v678 = vsub.s32 4, %v654
        %v679 = vsel %vm594, %v678, %v654
        %v680 = vsel %vm593, %v327, %v677
        %v681 = vsel %vm593, 0, %v679
        %v682 = vcosq.f32.pop %v680
        %v683 = vsinq.f32.pop %v680
        %vm684 = vweird.f32 %v327
        %v685 = vadd.s32 %v681, 3
        %v686 = vand.u32 %v685, 3
        %vm687 = vcmp.lt.s32.totalorder %v686, 2
        %vm688 = vcmp.eq.s32.totalorder %v686, 0
        %v689 = vxor.u32 %v683, 2147483648
        %v690 = vsel %vm688, %v682, %v689
        %vm691 = vcmp.eq.s32.totalorder %v686, 2
        %v692 = vxor.u32 %v682, 2147483648
        %v693 = vsel %vm691, %v692, %v683
        %v694 = vsel %vm687, %v690, %v693
        %v695 = vsel %vm684, nan, %v694
        %v696 = vand.u32 2147483647, %v329
        %vm697 = vcmp.le.f32.partialorder %v696, 0.7853982
        %vm698 = vcmp.lt.s32.totalorder %v329, 0
        %v699 = vand.u32 %v329, 2139095040
        %v700 = vshrl.u32 %v699, 23
        %v701 = vsub.s32 %v700, 127
        %v702 = vand.u32 2147483647, %v329
        %v703 = vand.u32 %v702, 8388607
        %v704 = vor.u32 %v703, 8388608
        %v705 = vsub.s32 0, %v704
        %v706 = vadd.s32 %v701, 1
        %vm707 = vcmp.gt.s32.totalorder %v706, 0
        %v708 = vsel %vm707, %v706, 0
        %v709 = vshrl.u32 %v708, 5
        %v710 = vand.u32 %v708, 31
        %v711 = vsub.s32 32, %v710
        %v712 = vshrl.u32 683565275, %v711
        %v713 = vshll.u32 683565275, %v710
        %v714 = vshrl.u32 2475754826, %v711
        %v715 = vor.u32 %v713, %v714
        %v716 = vshll.u32 2475754826, %v710
        %v717 = vshrl.u32 2131351028, %v711
        %v718 = vor.u32 %v716, %v717
        %v719 = vshll.u32 2131351028, %v710
        %v720 = vshrl.u32 2102212464, %v711
        %v721 = vor.u32 %v719, %v720
        %v722 = vshll.u32 2102212464, %v710
        %v723 = vshrl.u32 920167782, %v711
        %v724 = vor.u32 %v722, %v723
        %v725 = vshll.u32 920167782, %v710
        %v726 = vshrl.u32 1326507024, %v711
        %v727 = vor.u32 %v725, %v726
        %vm728 = vcmp.lt.s32.totalorder %v709, 1
        %vm729 = vcmp.lt.s32.totalorder %v709, 2
        %vm730 = vcmp.lt.s32.totalorder %v709, 3
        %vm731 = vcmp.lt.s32.totalorder %v709, 4
        %v732 = vsel %vm728, %v712, %v715
        %v733 = vsel %vm731, %v721, 2102212464
        %v734 = vsel %vm730, %v718, %v733
        %v735 = vsel %vm729, %v732, %v734
        %v736 = vsel %vm728, %v715, %v718
        %v737 = vsel %vm731, %v724, 920167782
        %v738 = vsel %vm730, %v721, %v737
        %v739 = vsel %vm729, %v736, %v738
        %v740 = vsel %vm728, %v718, %v721
        %v741 = vsel %vm731, %v727, 1326507024
        %v742 = vsel %vm730, %v724, %v741
        %v743 = vsel %vm729, %v740, %v742
        %v744 = vshll.u32 %v704, 8
        %v745 = vmul.u32.u64.compose %v744, %v743
        %v746 = vextract.low.u32 %v745
        %v747 = vextract.high.u32 %v745
        %v748 = vmul.u32.u64.compose %v744, %v739
        %v749 = vextract.low.u32 %v748
        %v750 = vextract.high.u32 %v748
        %v751 = vmul.u32 %v744, %v735
        %v752 = vadd.s32 %v747, %v749
        %vm753 = vc.u32 %v747, %v749
        %v754 = vadd.s32 %v750, 1
        %v755 = vsel %vm753, %v754, %v750
        %v756 = vadd.s32 %v751, %v755
        %v757 = vadd.s32 %v756, 536870912
        %v758 = vshrl.u32 %v757, 30
        %v759 = vshll.u32 %v758, 30
        %v760 = vsub.s32 %v756, %v759
        %vm761 = vcmp.lt.s32.totalorder %v760, 0
        %v762 = vsub.s32 0, %v760
        %v763 = vsel %vm761, %v762, %v760
        %v764 = vclz %v763
        %v765 = vsub.s32 %v764, 2
        %vm766 = vcmp.gt.s32.totalorder 0, %v765
        %v767 = vsel %vm766, 0, %v765
        %v768 = vsub.s32 32, %v767
        %v769 = vshll.u32 %v760, %v767
        %v770 = vshrl.u32 %v752, %v768
        %v771 = vor.u32 %v769, %v770
        %v772 = vsub.s32 4294967266, %v767
        %v773 = vadd.s32 %v772, 127
        %v774 = vshll.u32 %v773, 23
        %v775 = vor.u32 4788187, %v774
        %v776 = vand.u32 2147483647, %v775
        %v778 = vcvt.s32.f32 %v771
        %v779 = vmul.f32 %v778, %v776
        %v780 = vxor.u32 %v779, 2147483648
        %v781 = vsel %vm698, %v780, %v779
        %v782 = vsub.s32 4, %v758
        %v783 = vsel %vm698, %v782, %v758
        %v784 = vsel %vm697, %v329, %v781
        %v785 = vsel %vm697, 0, %v783
        %v786 = vcosq.f32.pop %v784
        %v787 = vsinq.f32.pop %v784
        %vm788 = vweird.f32 %v329
        %v789 = vadd.s32 %v785, 3
        %v790 = vand.u32 %v789, 3
        %vm791 = vcmp.lt.s32.totalorder %v790, 2
        %vm792 = vcmp.eq.s32.totalorder %v790, 0
        %v793 = vxor.u32 %v787, 2147483648
        %v794 = vsel %vm792, %v786, %v793
        %vm795 = vcmp.eq.s32.totalorder %v790, 2
        %v796 = vxor.u32 %v786, 2147483648
        %v797 = vsel %vm795, %v796, %v787
        %v798 = vsel %vm791, %v794, %v797
        %v799 = vsel %vm788, nan, %v798
        %v800 = vand.u32 2147483647, %v410
        %vm801 = vcmp.le.f32.partialorder %v800, 0.7853982
        %vm802 = vcmp.lt.s32.totalorder %v410, 0
        %v803 = vand.u32 %v410, 2139095040
        %v804 = vshrl.u32 %v803, 23
        %v805 = vsub.s32 %v804, 127
        %v806 = vand.u32 2147483647, %v410
        %v807 = vand.u32 %v806, 8388607
        %v808 = vor.u32 %v807, 8388608
        %v809 = vsub.s32 0, %v808
        %v810 = vadd.s32 %v805, 1
        %vm811 = vcmp.gt.s32.totalorder %v810, 0
        %v812 = vsel %vm811, %v810, 0
        %v813 = vshrl.u32 %v812, 5
        %v814 = vand.u32 %v812, 31
        %v815 = vsub.s32 32, %v814
        %v816 = vshrl.u32 683565275, %v815
        %v817 = vshll.u32 683565275, %v814
        %v818 = vshrl.u32 2475754826, %v815
        %v819 = vor.u32 %v817, %v818
        %v820 = vshll.u32 2475754826, %v814
        %v821 = vshrl.u32 2131351028, %v815
        %v822 = vor.u32 %v820, %v821
        %v823 = vshll.u32 2131351028, %v814
        %v824 = vshrl.u32 2102212464, %v815
        %v825 = vor.u32 %v823, %v824
        %v826 = vshll.u32 2102212464, %v814
        %v827 = vshrl.u32 920167782, %v815
        %v828 = vor.u32 %v826, %v827
        %v829 = vshll.u32 920167782, %v814
        %v830 = vshrl.u32 1326507024, %v815
        %v831 = vor.u32 %v829, %v830
        %vm832 = vcmp.lt.s32.totalorder %v813, 1
        %vm833 = vcmp.lt.s32.totalorder %v813, 2
        %vm834 = vcmp.lt.s32.totalorder %v813, 3
        %vm835 = vcmp.lt.s32.totalorder %v813, 4
        %v836 = vsel %vm832, %v816, %v819
        %v837 = vsel %vm835, %v825, 2102212464
        %v838 = vsel %vm834, %v822, %v837
        %v839 = vsel %vm833, %v836, %v838
        %v840 = vsel %vm832, %v819, %v822
        %v841 = vsel %vm835, %v828, 920167782
        %v842 = vsel %vm834, %v825, %v841
        %v843 = vsel %vm833, %v840, %v842
        %v844 = vsel %vm832, %v822, %v825
        %v845 = vsel %vm835, %v831, 1326507024
        %v846 = vsel %vm834, %v828, %v845
        %v847 = vsel %vm833, %v844, %v846
        %v848 = vshll.u32 %v808, 8
        %v849 = vmul.u32.u64.compose %v848, %v847
        %v850 = vextract.low.u32 %v849
        %v851 = vextract.high.u32 %v849
        %v852 = vmul.u32.u64.compose %v848, %v843
        %v853 = vextract.low.u32 %v852
        %v854 = vextract.high.u32 %v852
        %v855 = vmul.u32 %v848, %v839
        %v856 = vadd.s32 %v851, %v853
        %vm857 = vc.u32 %v851, %v853
        %v858 = vadd.s32 %v854, 1
        %v859 = vsel %vm857, %v858, %v854
        %v860 = vadd.s32 %v855, %v859
        %v861 = vadd.s32 %v860, 536870912
        %v862 = vshrl.u32 %v861, 30
        %v863 = vshll.u32 %v862, 30
        %v864 = vsub.s32 %v860, %v863
        %vm865 = vcmp.lt.s32.totalorder %v864, 0
        %v866 = vsub.s32 0, %v864
        %v867 = vsel %vm865, %v866, %v864
        %v868 = vclz %v867
        %v869 = vsub.s32 %v868, 2
        %vm870 = vcmp.gt.s32.totalorder 0, %v869
        %v871 = vsel %vm870, 0, %v869
        %v872 = vsub.s32 32, %v871
        %v873 = vshll.u32 %v864, %v871
        %v874 = vshrl.u32 %v856, %v872
        %v875 = vor.u32 %v873, %v874
        %v876 = vsub.s32 4294967266, %v871
        %v877 = vadd.s32 %v876, 127
        %v878 = vshll.u32 %v877, 23
        %v879 = vor.u32 4788187, %v878
        %v880 = vand.u32 2147483647, %v879
        %v882 = vcvt.s32.f32 %v875
        %v883 = vmul.f32 %v882, %v880
        %v884 = vxor.u32 %v883, 2147483648
        %v885 = vsel %vm802, %v884, %v883
        %v886 = vsub.s32 4, %v862
        %v887 = vsel %vm802, %v886, %v862
        %v888 = vsel %vm801, %v410, %v885
        %v889 = vsel %vm801, 0, %v887
        %v890 = vcosq.f32.pop %v888
        %v891 = vsinq.f32.pop %v888
        %vm892 = vweird.f32 %v410
        %v893 = vadd.s32 %v889, 3
        %v894 = vand.u32 %v893, 3
        %vm895 = vcmp.lt.s32.totalorder %v894, 2
        %vm896 = vcmp.eq.s32.totalorder %v894, 0
        %v897 = vxor.u32 %v891, 2147483648
        %v898 = vsel %vm896, %v890, %v897
        %vm899 = vcmp.eq.s32.totalorder %v894, 2
        %v900 = vxor.u32 %v890, 2147483648
        %v901 = vsel %vm899, %v900, %v891
        %v902 = vsel %vm895, %v898, %v901
        %v903 = vsel %vm892, nan, %v902
        %v904 = vand.u32 2147483647, %v412
        %vm905 = vcmp.le.f32.partialorder %v904, 0.7853982
        %vm906 = vcmp.lt.s32.totalorder %v412, 0
        %v907 = vand.u32 %v412, 2139095040
        %v908 = vshrl.u32 %v907, 23
        %v909 = vsub.s32 %v908, 127
        %v910 = vand.u32 2147483647, %v412
        %v911 = vand.u32 %v910, 8388607
        %v912 = vor.u32 %v911, 8388608
        %v913 = vsub.s32 0, %v912
        %v914 = vadd.s32 %v909, 1
        %vm915 = vcmp.gt.s32.totalorder %v914, 0
        %v916 = vsel %vm915, %v914, 0
        %v917 = vshrl.u32 %v916, 5
        %v918 = vand.u32 %v916, 31
        %v919 = vsub.s32 32, %v918
        %v920 = vshrl.u32 683565275, %v919
        %v921 = vshll.u32 683565275, %v918
        %v922 = vshrl.u32 2475754826, %v919
        %v923 = vor.u32 %v921, %v922
        %v924 = vshll.u32 2475754826, %v918
        %v925 = vshrl.u32 2131351028, %v919
        %v926 = vor.u32 %v924, %v925
        %v927 = vshll.u32 2131351028, %v918
        %v928 = vshrl.u32 2102212464, %v919
        %v929 = vor.u32 %v927, %v928
        %v930 = vshll.u32 2102212464, %v918
        %v931 = vshrl.u32 920167782, %v919
        %v932 = vor.u32 %v930, %v931
        %v933 = vshll.u32 920167782, %v918
        %v934 = vshrl.u32 1326507024, %v919
        %v935 = vor.u32 %v933, %v934
        %vm936 = vcmp.lt.s32.totalorder %v917, 1
        %vm937 = vcmp.lt.s32.totalorder %v917, 2
        %vm938 = vcmp.lt.s32.totalorder %v917, 3
        %vm939 = vcmp.lt.s32.totalorder %v917, 4
        %v940 = vsel %vm936, %v920, %v923
        %v941 = vsel %vm939, %v929, 2102212464
        %v942 = vsel %vm938, %v926, %v941
        %v943 = vsel %vm937, %v940, %v942
        %v944 = vsel %vm936, %v923, %v926
        %v945 = vsel %vm939, %v932, 920167782
        %v946 = vsel %vm938, %v929, %v945
        %v947 = vsel %vm937, %v944, %v946
        %v948 = vsel %vm936, %v926, %v929
        %v949 = vsel %vm939, %v935, 1326507024
        %v950 = vsel %vm938, %v932, %v949
        %v951 = vsel %vm937, %v948, %v950
        %v952 = vshll.u32 %v912, 8
        %v953 = vmul.u32.u64.compose %v952, %v951
        %v954 = vextract.low.u32 %v953
        %v955 = vextract.high.u32 %v953
        %v956 = vmul.u32.u64.compose %v952, %v947
        %v957 = vextract.low.u32 %v956
        %v958 = vextract.high.u32 %v956
        %v959 = vmul.u32 %v952, %v943
        %v960 = vadd.s32 %v955, %v957
        %vm961 = vc.u32 %v955, %v957
        %v962 = vadd.s32 %v958, 1
        %v963 = vsel %vm961, %v962, %v958
        %v964 = vadd.s32 %v959, %v963
        %v965 = vadd.s32 %v964, 536870912
        %v966 = vshrl.u32 %v965, 30
        %v967 = vshll.u32 %v966, 30
        %v968 = vsub.s32 %v964, %v967
        %vm969 = vcmp.lt.s32.totalorder %v968, 0
        %v970 = vsub.s32 0, %v968
        %v971 = vsel %vm969, %v970, %v968
        %v972 = vclz %v971
        %v973 = vsub.s32 %v972, 2
        %vm974 = vcmp.gt.s32.totalorder 0, %v973
        %v975 = vsel %vm974, 0, %v973
        %v976 = vsub.s32 32, %v975
        %v977 = vshll.u32 %v968, %v975
        %v978 = vshrl.u32 %v960, %v976
        %v979 = vor.u32 %v977, %v978
        %v980 = vsub.s32 4294967266, %v975
        %v981 = vadd.s32 %v980, 127
        %v982 = vshll.u32 %v981, 23
        %v983 = vor.u32 4788187, %v982
        %v984 = vand.u32 2147483647, %v983
        %v986 = vcvt.s32.f32 %v979
        %v987 = vmul.f32 %v986, %v984
        %v988 = vxor.u32 %v987, 2147483648
        %v989 = vsel %vm906, %v988, %v987
        %v990 = vsub.s32 4, %v966
        %v991 = vsel %vm906, %v990, %v966
        %v992 = vsel %vm905, %v412, %v989
        %v993 = vsel %vm905, 0, %v991
        %v994 = vcosq.f32.pop %v992
        %v995 = vsinq.f32.pop %v992
        %vm996 = vweird.f32 %v412
        %v997 = vadd.s32 %v993, 3
        %v998 = vand.u32 %v997, 3
        %vm999 = vcmp.lt.s32.totalorder %v998, 2
        %vm1000 = vcmp.eq.s32.totalorder %v998, 0
        %v1001 = vxor.u32 %v995, 2147483648
        %v1002 = vsel %vm1000, %v994, %v1001
        %vm1003 = vcmp.eq.s32.totalorder %v998, 2
        %v1004 = vxor.u32 %v994, 2147483648
        %v1005 = vsel %vm1003, %v1004, %v995
        %v1006 = vsel %vm999, %v1002, %v1005
        %v1007 = vsel %vm996, nan, %v1006
        %v1008 = vand.u32 2147483647, %v493
        %vm1009 = vcmp.le.f32.partialorder %v1008, 0.7853982
        %vm1010 = vcmp.lt.s32.totalorder %v493, 0
        %v1011 = vand.u32 %v493, 2139095040
        %v1012 = vshrl.u32 %v1011, 23
        %v1013 = vsub.s32 %v1012, 127
        %v1014 = vand.u32 2147483647, %v493
        %v1015 = vand.u32 %v1014, 8388607
        %v1016 = vor.u32 %v1015, 8388608
        %v1017 = vsub.s32 0, %v1016
        %v1018 = vadd.s32 %v1013, 1
        %vm1019 = vcmp.gt.s32.totalorder %v1018, 0
        %v1020 = vsel %vm1019, %v1018, 0
        %v1021 = vshrl.u32 %v1020, 5
        %v1022 = vand.u32 %v1020, 31
        %v1023 = vsub.s32 32, %v1022
        %v1024 = vshrl.u32 683565275, %v1023
        %v1025 = vshll.u32 683565275, %v1022
        %v1026 = vshrl.u32 2475754826, %v1023
        %v1027 = vor.u32 %v1025, %v1026
        %v1028 = vshll.u32 2475754826, %v1022
        %v1029 = vshrl.u32 2131351028, %v1023
        %v1030 = vor.u32 %v1028, %v1029
        %v1031 = vshll.u32 2131351028, %v1022
        %v1032 = vshrl.u32 2102212464, %v1023
        %v1033 = vor.u32 %v1031, %v1032
        %v1034 = vshll.u32 2102212464, %v1022
        %v1035 = vshrl.u32 920167782, %v1023
        %v1036 = vor.u32 %v1034, %v1035
        %v1037 = vshll.u32 920167782, %v1022
        %v1038 = vshrl.u32 1326507024, %v1023
        %v1039 = vor.u32 %v1037, %v1038
        %vm1040 = vcmp.lt.s32.totalorder %v1021, 1
        %vm1041 = vcmp.lt.s32.totalorder %v1021, 2
        %vm1042 = vcmp.lt.s32.totalorder %v1021, 3
        %vm1043 = vcmp.lt.s32.totalorder %v1021, 4
        %v1044 = vsel %vm1040, %v1024, %v1027
        %v1045 = vsel %vm1043, %v1033, 2102212464
        %v1046 = vsel %vm1042, %v1030, %v1045
        %v1047 = vsel %vm1041, %v1044, %v1046
        %v1048 = vsel %vm1040, %v1027, %v1030
        %v1049 = vsel %vm1043, %v1036, 920167782
        %v1050 = vsel %vm1042, %v1033, %v1049
        %v1051 = vsel %vm1041, %v1048, %v1050
        %v1052 = vsel %vm1040, %v1030, %v1033
        %v1053 = vsel %vm1043, %v1039, 1326507024
        %v1054 = vsel %vm1042, %v1036, %v1053
        %v1055 = vsel %vm1041, %v1052, %v1054
        %v1056 = vshll.u32 %v1016, 8
        %v1057 = vmul.u32.u64.compose %v1056, %v1055
        %v1058 = vextract.low.u32 %v1057
        %v1059 = vextract.high.u32 %v1057
        %v1060 = vmul.u32.u64.compose %v1056, %v1051
        %v1061 = vextract.low.u32 %v1060
        %v1062 = vextract.high.u32 %v1060
        %v1063 = vmul.u32 %v1056, %v1047
        %v1064 = vadd.s32 %v1059, %v1061
        %vm1065 = vc.u32 %v1059, %v1061
        %v1066 = vadd.s32 %v1062, 1
        %v1067 = vsel %vm1065, %v1066, %v1062
        %v1068 = vadd.s32 %v1063, %v1067
        %v1069 = vadd.s32 %v1068, 536870912
        %v1070 = vshrl.u32 %v1069, 30
        %v1071 = vshll.u32 %v1070, 30
        %v1072 = vsub.s32 %v1068, %v1071
        %vm1073 = vcmp.lt.s32.totalorder %v1072, 0
        %v1074 = vsub.s32 0, %v1072
        %v1075 = vsel %vm1073, %v1074, %v1072
        %v1076 = vclz %v1075
        %v1077 = vsub.s32 %v1076, 2
        %vm1078 = vcmp.gt.s32.totalorder 0, %v1077
        %v1079 = vsel %vm1078, 0, %v1077
        %v1080 = vsub.s32 32, %v1079
        %v1081 = vshll.u32 %v1072, %v1079
        %v1082 = vshrl.u32 %v1064, %v1080
        %v1083 = vor.u32 %v1081, %v1082
        %v1084 = vsub.s32 4294967266, %v1079
        %v1085 = vadd.s32 %v1084, 127
        %v1086 = vshll.u32 %v1085, 23
        %v1087 = vor.u32 4788187, %v1086
        %v1088 = vand.u32 2147483647, %v1087
        %v1090 = vcvt.s32.f32 %v1083
        %v1091 = vmul.f32 %v1090, %v1088
        %v1092 = vxor.u32 %v1091, 2147483648
        %v1093 = vsel %vm1010, %v1092, %v1091
        %v1094 = vsub.s32 4, %v1070
        %v1095 = vsel %vm1010, %v1094, %v1070
        %v1096 = vsel %vm1009, %v493, %v1093
        %v1097 = vsel %vm1009, 0, %v1095
        %v1098 = vcosq.f32.pop %v1096
        %v1099 = vsinq.f32.pop %v1096
        %vm1100 = vweird.f32 %v493
        %v1101 = vadd.s32 %v1097, 3
        %v1102 = vand.u32 %v1101, 3
        %vm1103 = vcmp.lt.s32.totalorder %v1102, 2
        %vm1104 = vcmp.eq.s32.totalorder %v1102, 0
        %v1105 = vxor.u32 %v1099, 2147483648
        %v1106 = vsel %vm1104, %v1098, %v1105
        %vm1107 = vcmp.eq.s32.totalorder %v1102, 2
        %v1108 = vxor.u32 %v1098, 2147483648
        %v1109 = vsel %vm1107, %v1108, %v1099
        %v1110 = vsel %vm1103, %v1106, %v1109
        %v1111 = vsel %vm1100, nan, %v1110
        %v1112 = vand.u32 2147483647, %v495
        %vm1113 = vcmp.le.f32.partialorder %v1112, 0.7853982
        %vm1114 = vcmp.lt.s32.totalorder %v495, 0
        %v1115 = vand.u32 %v495, 2139095040
        %v1116 = vshrl.u32 %v1115, 23
        %v1117 = vsub.s32 %v1116, 127
        %v1118 = vand.u32 2147483647, %v495
        %v1119 = vand.u32 %v1118, 8388607
        %v1120 = vor.u32 %v1119, 8388608
        %v1121 = vsub.s32 0, %v1120
        %v1122 = vadd.s32 %v1117, 1
        %vm1123 = vcmp.gt.s32.totalorder %v1122, 0
        %v1124 = vsel %vm1123, %v1122, 0
        %v1125 = vshrl.u32 %v1124, 5
        %v1126 = vand.u32 %v1124, 31
        %v1127 = vsub.s32 32, %v1126
        %v1128 = vshrl.u32 683565275, %v1127
        %v1129 = vshll.u32 683565275, %v1126
        %v1130 = vshrl.u32 2475754826, %v1127
        %v1131 = vor.u32 %v1129, %v1130
        %v1132 = vshll.u32 2475754826, %v1126
        %v1133 = vshrl.u32 2131351028, %v1127
        %v1134 = vor.u32 %v1132, %v1133
        %v1135 = vshll.u32 2131351028, %v1126
        %v1136 = vshrl.u32 2102212464, %v1127
        %v1137 = vor.u32 %v1135, %v1136
        %v1138 = vshll.u32 2102212464, %v1126
        %v1139 = vshrl.u32 920167782, %v1127
        %v1140 = vor.u32 %v1138, %v1139
        %v1141 = vshll.u32 920167782, %v1126
        %v1142 = vshrl.u32 1326507024, %v1127
        %v1143 = vor.u32 %v1141, %v1142
        %vm1144 = vcmp.lt.s32.totalorder %v1125, 1
        %vm1145 = vcmp.lt.s32.totalorder %v1125, 2
        %vm1146 = vcmp.lt.s32.totalorder %v1125, 3
        %vm1147 = vcmp.lt.s32.totalorder %v1125, 4
        %v1148 = vsel %vm1144, %v1128, %v1131
        %v1149 = vsel %vm1147, %v1137, 2102212464
        %v1150 = vsel %vm1146, %v1134, %v1149
        %v1151 = vsel %vm1145, %v1148, %v1150
        %v1152 = vsel %vm1144, %v1131, %v1134
        %v1153 = vsel %vm1147, %v1140, 920167782
        %v1154 = vsel %vm1146, %v1137, %v1153
        %v1155 = vsel %vm1145, %v1152, %v1154
        %v1156 = vsel %vm1144, %v1134, %v1137
        %v1157 = vsel %vm1147, %v1143, 1326507024
        %v1158 = vsel %vm1146, %v1140, %v1157
        %v1159 = vsel %vm1145, %v1156, %v1158
        %v1160 = vshll.u32 %v1120, 8
        %v1161 = vmul.u32.u64.compose %v1160, %v1159
        %v1162 = vextract.low.u32 %v1161
        %v1163 = vextract.high.u32 %v1161
        %v1164 = vmul.u32.u64.compose %v1160, %v1155
        %v1165 = vextract.low.u32 %v1164
        %v1166 = vextract.high.u32 %v1164
        %v1167 = vmul.u32 %v1160, %v1151
        %v1168 = vadd.s32 %v1163, %v1165
        %vm1169 = vc.u32 %v1163, %v1165
        %v1170 = vadd.s32 %v1166, 1
        %v1171 = vsel %vm1169, %v1170, %v1166
        %v1172 = vadd.s32 %v1167, %v1171
        %v1173 = vadd.s32 %v1172, 536870912
        %v1174 = vshrl.u32 %v1173, 30
        %v1175 = vshll.u32 %v1174, 30
        %v1176 = vsub.s32 %v1172, %v1175
        %vm1177 = vcmp.lt.s32.totalorder %v1176, 0
        %v1178 = vsub.s32 0, %v1176
        %v1179 = vsel %vm1177, %v1178, %v1176
        %v1180 = vclz %v1179
        %v1181 = vsub.s32 %v1180, 2
        %vm1182 = vcmp.gt.s32.totalorder 0, %v1181
        %v1183 = vsel %vm1182, 0, %v1181
        %v1184 = vsub.s32 32, %v1183
        %v1185 = vshll.u32 %v1176, %v1183
        %v1186 = vshrl.u32 %v1168, %v1184
        %v1187 = vor.u32 %v1185, %v1186
        %v1188 = vsub.s32 4294967266, %v1183
        %v1189 = vadd.s32 %v1188, 127
        %v1190 = vshll.u32 %v1189, 23
        %v1191 = vor.u32 4788187, %v1190
        %v1192 = vand.u32 2147483647, %v1191
        %v1194 = vcvt.s32.f32 %v1187
        %v1195 = vmul.f32 %v1194, %v1192
        %v1196 = vxor.u32 %v1195, 2147483648
        %v1197 = vsel %vm1114, %v1196, %v1195
        %v1198 = vsub.s32 4, %v1174
        %v1199 = vsel %vm1114, %v1198, %v1174
        %v1200 = vsel %vm1113, %v495, %v1197
        %v1201 = vsel %vm1113, 0, %v1199
        %v1202 = vcosq.f32.pop %v1200
        %v1203 = vsinq.f32.pop %v1200
        %vm1204 = vweird.f32 %v495
        %v1205 = vadd.s32 %v1201, 3
        %v1206 = vand.u32 %v1205, 3
        %vm1207 = vcmp.lt.s32.totalorder %v1206, 2
        %vm1208 = vcmp.eq.s32.totalorder %v1206, 0
        %v1209 = vxor.u32 %v1203, 2147483648
        %v1210 = vsel %vm1208, %v1202, %v1209
        %vm1211 = vcmp.eq.s32.totalorder %v1206, 2
        %v1212 = vxor.u32 %v1202, 2147483648
        %v1213 = vsel %vm1211, %v1212, %v1203
        %v1214 = vsel %vm1207, %v1210, %v1213
        %v1215 = vsel %vm1204, nan, %v1214
        %v1216 = vand.u32 2147483647, %v576
        %vm1217 = vcmp.le.f32.partialorder %v1216, 0.7853982
        %vm1218 = vcmp.lt.s32.totalorder %v576, 0
        %v1219 = vand.u32 %v576, 2139095040
        %v1220 = vshrl.u32 %v1219, 23
        %v1221 = vsub.s32 %v1220, 127
        %v1222 = vand.u32 2147483647, %v576
        %v1223 = vand.u32 %v1222, 8388607
        %v1224 = vor.u32 %v1223, 8388608
        %v1225 = vsub.s32 0, %v1224
        %v1226 = vadd.s32 %v1221, 1
        %vm1227 = vcmp.gt.s32.totalorder %v1226, 0
        %v1228 = vsel %vm1227, %v1226, 0
        %v1229 = vshrl.u32 %v1228, 5
        %v1230 = vand.u32 %v1228, 31
        %v1231 = vsub.s32 32, %v1230
        %v1232 = vshrl.u32 683565275, %v1231
        %v1233 = vshll.u32 683565275, %v1230
        %v1234 = vshrl.u32 2475754826, %v1231
        %v1235 = vor.u32 %v1233, %v1234
        %v1236 = vshll.u32 2475754826, %v1230
        %v1237 = vshrl.u32 2131351028, %v1231
        %v1238 = vor.u32 %v1236, %v1237
        %v1239 = vshll.u32 2131351028, %v1230
        %v1240 = vshrl.u32 2102212464, %v1231
        %v1241 = vor.u32 %v1239, %v1240
        %v1242 = vshll.u32 2102212464, %v1230
        %v1243 = vshrl.u32 920167782, %v1231
        %v1244 = vor.u32 %v1242, %v1243
        %v1245 = vshll.u32 920167782, %v1230
        %v1246 = vshrl.u32 1326507024, %v1231
        %v1247 = vor.u32 %v1245, %v1246
        %vm1248 = vcmp.lt.s32.totalorder %v1229, 1
        %vm1249 = vcmp.lt.s32.totalorder %v1229, 2
        %vm1250 = vcmp.lt.s32.totalorder %v1229, 3
        %vm1251 = vcmp.lt.s32.totalorder %v1229, 4
        %v1252 = vsel %vm1248, %v1232, %v1235
        %v1253 = vsel %vm1251, %v1241, 2102212464
        %v1254 = vsel %vm1250, %v1238, %v1253
        %v1255 = vsel %vm1249, %v1252, %v1254
        %v1256 = vsel %vm1248, %v1235, %v1238
        %v1257 = vsel %vm1251, %v1244, 920167782
        %v1258 = vsel %vm1250, %v1241, %v1257
        %v1259 = vsel %vm1249, %v1256, %v1258
        %v1260 = vsel %vm1248, %v1238, %v1241
        %v1261 = vsel %vm1251, %v1247, 1326507024
        %v1262 = vsel %vm1250, %v1244, %v1261
        %v1263 = vsel %vm1249, %v1260, %v1262
        %v1264 = vshll.u32 %v1224, 8
        %v1265 = vmul.u32.u64.compose %v1264, %v1263
        %v1266 = vextract.low.u32 %v1265
        %v1267 = vextract.high.u32 %v1265
        %v1268 = vmul.u32.u64.compose %v1264, %v1259
        %v1269 = vextract.low.u32 %v1268
        %v1270 = vextract.high.u32 %v1268
        %v1271 = vmul.u32 %v1264, %v1255
        %v1272 = vadd.s32 %v1267, %v1269
        %vm1273 = vc.u32 %v1267, %v1269
        %v1274 = vadd.s32 %v1270, 1
        %v1275 = vsel %vm1273, %v1274, %v1270
        %v1276 = vadd.s32 %v1271, %v1275
        %v1277 = vadd.s32 %v1276, 536870912
        %v1278 = vshrl.u32 %v1277, 30
        %v1279 = vshll.u32 %v1278, 30
        %v1280 = vsub.s32 %v1276, %v1279
        %vm1281 = vcmp.lt.s32.totalorder %v1280, 0
        %v1282 = vsub.s32 0, %v1280
        %v1283 = vsel %vm1281, %v1282, %v1280
        %v1284 = vclz %v1283
        %v1285 = vsub.s32 %v1284, 2
        %vm1286 = vcmp.gt.s32.totalorder 0, %v1285
        %v1287 = vsel %vm1286, 0, %v1285
        %v1288 = vsub.s32 32, %v1287
        %v1289 = vshll.u32 %v1280, %v1287
        %v1290 = vshrl.u32 %v1272, %v1288
        %v1291 = vor.u32 %v1289, %v1290
        %v1292 = vsub.s32 4294967266, %v1287
        %v1293 = vadd.s32 %v1292, 127
        %v1294 = vshll.u32 %v1293, 23
        %v1295 = vor.u32 4788187, %v1294
        %v1296 = vand.u32 2147483647, %v1295
        %v1298 = vcvt.s32.f32 %v1291
        %v1299 = vmul.f32 %v1298, %v1296
        %v1300 = vxor.u32 %v1299, 2147483648
        %v1301 = vsel %vm1218, %v1300, %v1299
        %v1302 = vsub.s32 4, %v1278
        %v1303 = vsel %vm1218, %v1302, %v1278
        %v1304 = vsel %vm1217, %v576, %v1301
        %v1305 = vsel %vm1217, 0, %v1303
        %v1306 = vcosq.f32.pop %v1304
        %v1307 = vsinq.f32.pop %v1304
        %vm1308 = vweird.f32 %v576
        %v1309 = vadd.s32 %v1305, 3
        %v1310 = vand.u32 %v1309, 3
        %vm1311 = vcmp.lt.s32.totalorder %v1310, 2
        %vm1312 = vcmp.eq.s32.totalorder %v1310, 0
        %v1313 = vxor.u32 %v1307, 2147483648
        %v1314 = vsel %vm1312, %v1306, %v1313
        %vm1315 = vcmp.eq.s32.totalorder %v1310, 2
        %v1316 = vxor.u32 %v1306, 2147483648
        %v1317 = vsel %vm1315, %v1316, %v1307
        %v1318 = vsel %vm1311, %v1314, %v1317
        %v1319 = vsel %vm1308, nan, %v1318
        %v1320 = vand.u32 2147483647, %v578
        %vm1321 = vcmp.le.f32.partialorder %v1320, 0.7853982
        %vm1322 = vcmp.lt.s32.totalorder %v578, 0
        %v1323 = vand.u32 %v578, 2139095040
        %v1324 = vshrl.u32 %v1323, 23
        %v1325 = vsub.s32 %v1324, 127
        %v1326 = vand.u32 2147483647, %v578
        %v1327 = vand.u32 %v1326, 8388607
        %v1328 = vor.u32 %v1327, 8388608
        %v1329 = vsub.s32 0, %v1328
        %v1330 = vadd.s32 %v1325, 1
        %vm1331 = vcmp.gt.s32.totalorder %v1330, 0
        %v1332 = vsel %vm1331, %v1330, 0
        %v1333 = vshrl.u32 %v1332, 5
        %v1334 = vand.u32 %v1332, 31
        %v1335 = vsub.s32 32, %v1334
        %v1336 = vshrl.u32 683565275, %v1335
        %v1337 = vshll.u32 683565275, %v1334
        %v1338 = vshrl.u32 2475754826, %v1335
        %v1339 = vor.u32 %v1337, %v1338
        %v1340 = vshll.u32 2475754826, %v1334
        %v1341 = vshrl.u32 2131351028, %v1335
        %v1342 = vor.u32 %v1340, %v1341
        %v1343 = vshll.u32 2131351028, %v1334
        %v1344 = vshrl.u32 2102212464, %v1335
        %v1345 = vor.u32 %v1343, %v1344
        %v1346 = vshll.u32 2102212464, %v1334
        %v1347 = vshrl.u32 920167782, %v1335
        %v1348 = vor.u32 %v1346, %v1347
        %v1349 = vshll.u32 920167782, %v1334
        %v1350 = vshrl.u32 1326507024, %v1335
        %v1351 = vor.u32 %v1349, %v1350
        %vm1352 = vcmp.lt.s32.totalorder %v1333, 1
        %vm1353 = vcmp.lt.s32.totalorder %v1333, 2
        %vm1354 = vcmp.lt.s32.totalorder %v1333, 3
        %vm1355 = vcmp.lt.s32.totalorder %v1333, 4
        %v1356 = vsel %vm1352, %v1336, %v1339
        %v1357 = vsel %vm1355, %v1345, 2102212464
        %v1358 = vsel %vm1354, %v1342, %v1357
        %v1359 = vsel %vm1353, %v1356, %v1358
        %v1360 = vsel %vm1352, %v1339, %v1342
        %v1361 = vsel %vm1355, %v1348, 920167782
        %v1362 = vsel %vm1354, %v1345, %v1361
        %v1363 = vsel %vm1353, %v1360, %v1362
        %v1364 = vsel %vm1352, %v1342, %v1345
        %v1365 = vsel %vm1355, %v1351, 1326507024
        %v1366 = vsel %vm1354, %v1348, %v1365
        %v1367 = vsel %vm1353, %v1364, %v1366
        %v1368 = vshll.u32 %v1328, 8
        %v1369 = vmul.u32.u64.compose %v1368, %v1367
        %v1370 = vextract.low.u32 %v1369
        %v1371 = vextract.high.u32 %v1369
        %v1372 = vmul.u32.u64.compose %v1368, %v1363
        %v1373 = vextract.low.u32 %v1372
        %v1374 = vextract.high.u32 %v1372
        %v1375 = vmul.u32 %v1368, %v1359
        %v1376 = vadd.s32 %v1371, %v1373
        %vm1377 = vc.u32 %v1371, %v1373
        %v1378 = vadd.s32 %v1374, 1
        %v1379 = vsel %vm1377, %v1378, %v1374
        %v1380 = vadd.s32 %v1375, %v1379
        %v1381 = vadd.s32 %v1380, 536870912
        %v1382 = vshrl.u32 %v1381, 30
        %v1383 = vshll.u32 %v1382, 30
        %v1384 = vsub.s32 %v1380, %v1383
        %vm1385 = vcmp.lt.s32.totalorder %v1384, 0
        %v1386 = vsub.s32 0, %v1384
        %v1387 = vsel %vm1385, %v1386, %v1384
        %v1388 = vclz %v1387
        %v1389 = vsub.s32 %v1388, 2
        %vm1390 = vcmp.gt.s32.totalorder 0, %v1389
        %v1391 = vsel %vm1390, 0, %v1389
        %v1392 = vsub.s32 32, %v1391
        %v1393 = vshll.u32 %v1384, %v1391
        %v1394 = vshrl.u32 %v1376, %v1392
        %v1395 = vor.u32 %v1393, %v1394
        %v1396 = vsub.s32 4294967266, %v1391
        %v1397 = vadd.s32 %v1396, 127
        %v1398 = vshll.u32 %v1397, 23
        %v1399 = vor.u32 4788187, %v1398
        %v1400 = vand.u32 2147483647, %v1399
        %v1402 = vcvt.s32.f32 %v1395
        %v1403 = vmul.f32 %v1402, %v1400
        %v1404 = vxor.u32 %v1403, 2147483648
        %v1405 = vsel %vm1322, %v1404, %v1403
        %v1406 = vsub.s32 4, %v1382
        %v1407 = vsel %vm1322, %v1406, %v1382
        %v1408 = vsel %vm1321, %v578, %v1405
        %v1409 = vsel %vm1321, 0, %v1407
        %v1410 = vcosq.f32.pop %v1408
        %v1411 = vsinq.f32.pop %v1408
        %vm1412 = vweird.f32 %v578
        %v1413 = vadd.s32 %v1409, 3
        %v1414 = vand.u32 %v1413, 3
        %vm1415 = vcmp.lt.s32.totalorder %v1414, 2
        %vm1416 = vcmp.eq.s32.totalorder %v1414, 0
        %v1417 = vxor.u32 %v1411, 2147483648
        %v1418 = vsel %vm1416, %v1410, %v1417
        %vm1419 = vcmp.eq.s32.totalorder %v1414, 2
        %v1420 = vxor.u32 %v1410, 2147483648
        %v1421 = vsel %vm1419, %v1420, %v1411
        %v1422 = vsel %vm1415, %v1418, %v1421
        %v1423 = vsel %vm1412, nan, %v1422
        %v1424 = vand.u32 2147483647, %v333
        %vm1425 = vcmp.le.f32.partialorder %v1424, 0.7853982
        %vm1426 = vcmp.lt.s32.totalorder %v333, 0
        %v1427 = vand.u32 %v333, 2139095040
        %v1428 = vshrl.u32 %v1427, 23
        %v1429 = vsub.s32 %v1428, 127
        %v1430 = vand.u32 2147483647, %v333
        %v1431 = vand.u32 %v1430, 8388607
        %v1432 = vor.u32 %v1431, 8388608
        %v1433 = vsub.s32 0, %v1432
        %v1434 = vadd.s32 %v1429, 1
        %vm1435 = vcmp.gt.s32.totalorder %v1434, 0
        %v1436 = vsel %vm1435, %v1434, 0
        %v1437 = vshrl.u32 %v1436, 5
        %v1438 = vand.u32 %v1436, 31
        %v1439 = vsub.s32 32, %v1438
        %v1440 = vshrl.u32 683565275, %v1439
        %v1441 = vshll.u32 683565275, %v1438
        %v1442 = vshrl.u32 2475754826, %v1439
        %v1443 = vor.u32 %v1441, %v1442
        %v1444 = vshll.u32 2475754826, %v1438
        %v1445 = vshrl.u32 2131351028, %v1439
        %v1446 = vor.u32 %v1444, %v1445
        %v1447 = vshll.u32 2131351028, %v1438
        %v1448 = vshrl.u32 2102212464, %v1439
        %v1449 = vor.u32 %v1447, %v1448
        %v1450 = vshll.u32 2102212464, %v1438
        %v1451 = vshrl.u32 920167782, %v1439
        %v1452 = vor.u32 %v1450, %v1451
        %v1453 = vshll.u32 920167782, %v1438
        %v1454 = vshrl.u32 1326507024, %v1439
        %v1455 = vor.u32 %v1453, %v1454
        %vm1456 = vcmp.lt.s32.totalorder %v1437, 1
        %vm1457 = vcmp.lt.s32.totalorder %v1437, 2
        %vm1458 = vcmp.lt.s32.totalorder %v1437, 3
        %vm1459 = vcmp.lt.s32.totalorder %v1437, 4
        %v1460 = vsel %vm1456, %v1440, %v1443
        %v1461 = vsel %vm1459, %v1449, 2102212464
        %v1462 = vsel %vm1458, %v1446, %v1461
        %v1463 = vsel %vm1457, %v1460, %v1462
        %v1464 = vsel %vm1456, %v1443, %v1446
        %v1465 = vsel %vm1459, %v1452, 920167782
        %v1466 = vsel %vm1458, %v1449, %v1465
        %v1467 = vsel %vm1457, %v1464, %v1466
        %v1468 = vsel %vm1456, %v1446, %v1449
        %v1469 = vsel %vm1459, %v1455, 1326507024
        %v1470 = vsel %vm1458, %v1452, %v1469
        %v1471 = vsel %vm1457, %v1468, %v1470
        %v1472 = vshll.u32 %v1432, 8
        %v1473 = vmul.u32.u64.compose %v1472, %v1471
        %v1474 = vextract.low.u32 %v1473
        %v1475 = vextract.high.u32 %v1473
        %v1476 = vmul.u32.u64.compose %v1472, %v1467
        %v1477 = vextract.low.u32 %v1476
        %v1478 = vextract.high.u32 %v1476
        %v1479 = vmul.u32 %v1472, %v1463
        %v1480 = vadd.s32 %v1475, %v1477
        %vm1481 = vc.u32 %v1475, %v1477
        %v1482 = vadd.s32 %v1478, 1
        %v1483 = vsel %vm1481, %v1482, %v1478
        %v1484 = vadd.s32 %v1479, %v1483
        %v1485 = vadd.s32 %v1484, 536870912
        %v1486 = vshrl.u32 %v1485, 30
        %v1487 = vshll.u32 %v1486, 30
        %v1488 = vsub.s32 %v1484, %v1487
        %vm1489 = vcmp.lt.s32.totalorder %v1488, 0
        %v1490 = vsub.s32 0, %v1488
        %v1491 = vsel %vm1489, %v1490, %v1488
        %v1492 = vclz %v1491
        %v1493 = vsub.s32 %v1492, 2
        %vm1494 = vcmp.gt.s32.totalorder 0, %v1493
        %v1495 = vsel %vm1494, 0, %v1493
        %v1496 = vsub.s32 32, %v1495
        %v1497 = vshll.u32 %v1488, %v1495
        %v1498 = vshrl.u32 %v1480, %v1496
        %v1499 = vor.u32 %v1497, %v1498
        %v1500 = vsub.s32 4294967266, %v1495
        %v1501 = vadd.s32 %v1500, 127
        %v1502 = vshll.u32 %v1501, 23
        %v1503 = vor.u32 4788187, %v1502
        %v1504 = vand.u32 2147483647, %v1503
        %v1506 = vcvt.s32.f32 %v1499
        %v1507 = vmul.f32 %v1506, %v1504
        %v1508 = vxor.u32 %v1507, 2147483648
        %v1509 = vsel %vm1426, %v1508, %v1507
        %v1510 = vsub.s32 4, %v1486
        %v1511 = vsel %vm1426, %v1510, %v1486
        %v1512 = vsel %vm1425, %v333, %v1509
        %v1513 = vsel %vm1425, 0, %v1511
        %v1514 = vcosq.f32.pop %v1512
        %v1515 = vsinq.f32.pop %v1512
        %vm1516 = vweird.f32 %v333
        %v1517 = vadd.s32 %v1513, 3
        %v1518 = vand.u32 %v1517, 3
        %vm1519 = vcmp.lt.s32.totalorder %v1518, 2
        %vm1520 = vcmp.eq.s32.totalorder %v1518, 0
        %v1521 = vxor.u32 %v1515, 2147483648
        %v1522 = vsel %vm1520, %v1514, %v1521
        %vm1523 = vcmp.eq.s32.totalorder %v1518, 2
        %v1524 = vxor.u32 %v1514, 2147483648
        %v1525 = vsel %vm1523, %v1524, %v1515
        %v1526 = vsel %vm1519, %v1522, %v1525
        %v1527 = vsel %vm1516, nan, %v1526
        %v1528 = vand.u32 2147483647, %v335
        %vm1529 = vcmp.le.f32.partialorder %v1528, 0.7853982
        %vm1530 = vcmp.lt.s32.totalorder %v335, 0
        %v1531 = vand.u32 %v335, 2139095040
        %v1532 = vshrl.u32 %v1531, 23
        %v1533 = vsub.s32 %v1532, 127
        %v1534 = vand.u32 2147483647, %v335
        %v1535 = vand.u32 %v1534, 8388607
        %v1536 = vor.u32 %v1535, 8388608
        %v1537 = vsub.s32 0, %v1536
        %v1538 = vadd.s32 %v1533, 1
        %vm1539 = vcmp.gt.s32.totalorder %v1538, 0
        %v1540 = vsel %vm1539, %v1538, 0
        %v1541 = vshrl.u32 %v1540, 5
        %v1542 = vand.u32 %v1540, 31
        %v1543 = vsub.s32 32, %v1542
        %v1544 = vshrl.u32 683565275, %v1543
        %v1545 = vshll.u32 683565275, %v1542
        %v1546 = vshrl.u32 2475754826, %v1543
        %v1547 = vor.u32 %v1545, %v1546
        %v1548 = vshll.u32 2475754826, %v1542
        %v1549 = vshrl.u32 2131351028, %v1543
        %v1550 = vor.u32 %v1548, %v1549
        %v1551 = vshll.u32 2131351028, %v1542
        %v1552 = vshrl.u32 2102212464, %v1543
        %v1553 = vor.u32 %v1551, %v1552
        %v1554 = vshll.u32 2102212464, %v1542
        %v1555 = vshrl.u32 920167782, %v1543
        %v1556 = vor.u32 %v1554, %v1555
        %v1557 = vshll.u32 920167782, %v1542
        %v1558 = vshrl.u32 1326507024, %v1543
        %v1559 = vor.u32 %v1557, %v1558
        %vm1560 = vcmp.lt.s32.totalorder %v1541, 1
        %vm1561 = vcmp.lt.s32.totalorder %v1541, 2
        %vm1562 = vcmp.lt.s32.totalorder %v1541, 3
        %vm1563 = vcmp.lt.s32.totalorder %v1541, 4
        %v1564 = vsel %vm1560, %v1544, %v1547
        %v1565 = vsel %vm1563, %v1553, 2102212464
        %v1566 = vsel %vm1562, %v1550, %v1565
        %v1567 = vsel %vm1561, %v1564, %v1566
        %v1568 = vsel %vm1560, %v1547, %v1550
        %v1569 = vsel %vm1563, %v1556, 920167782
        %v1570 = vsel %vm1562, %v1553, %v1569
        %v1571 = vsel %vm1561, %v1568, %v1570
        %v1572 = vsel %vm1560, %v1550, %v1553
        %v1573 = vsel %vm1563, %v1559, 1326507024
        %v1574 = vsel %vm1562, %v1556, %v1573
        %v1575 = vsel %vm1561, %v1572, %v1574
        %v1576 = vshll.u32 %v1536, 8
        %v1577 = vmul.u32.u64.compose %v1576, %v1575
        %v1578 = vextract.low.u32 %v1577
        %v1579 = vextract.high.u32 %v1577
        %v1580 = vmul.u32.u64.compose %v1576, %v1571
        %v1581 = vextract.low.u32 %v1580
        %v1582 = vextract.high.u32 %v1580
        %v1583 = vmul.u32 %v1576, %v1567
        %v1584 = vadd.s32 %v1579, %v1581
        %vm1585 = vc.u32 %v1579, %v1581
        %v1586 = vadd.s32 %v1582, 1
        %v1587 = vsel %vm1585, %v1586, %v1582
        %v1588 = vadd.s32 %v1583, %v1587
        %v1589 = vadd.s32 %v1588, 536870912
        %v1590 = vshrl.u32 %v1589, 30
        %v1591 = vshll.u32 %v1590, 30
        %v1592 = vsub.s32 %v1588, %v1591
        %vm1593 = vcmp.lt.s32.totalorder %v1592, 0
        %v1594 = vsub.s32 0, %v1592
        %v1595 = vsel %vm1593, %v1594, %v1592
        %v1596 = vclz %v1595
        %v1597 = vsub.s32 %v1596, 2
        %vm1598 = vcmp.gt.s32.totalorder 0, %v1597
        %v1599 = vsel %vm1598, 0, %v1597
        %v1600 = vsub.s32 32, %v1599
        %v1601 = vshll.u32 %v1592, %v1599
        %v1602 = vshrl.u32 %v1584, %v1600
        %v1603 = vor.u32 %v1601, %v1602
        %v1604 = vsub.s32 4294967266, %v1599
        %v1605 = vadd.s32 %v1604, 127
        %v1606 = vshll.u32 %v1605, 23
        %v1607 = vor.u32 4788187, %v1606
        %v1608 = vand.u32 2147483647, %v1607
        %v1610 = vcvt.s32.f32 %v1603
        %v1611 = vmul.f32 %v1610, %v1608
        %v1612 = vxor.u32 %v1611, 2147483648
        %v1613 = vsel %vm1530, %v1612, %v1611
        %v1614 = vsub.s32 4, %v1590
        %v1615 = vsel %vm1530, %v1614, %v1590
        %v1616 = vsel %vm1529, %v335, %v1613
        %v1617 = vsel %vm1529, 0, %v1615
        %v1618 = vcosq.f32.pop %v1616
        %v1619 = vsinq.f32.pop %v1616
        %vm1620 = vweird.f32 %v335
        %v1621 = vadd.s32 %v1617, 3
        %v1622 = vand.u32 %v1621, 3
        %vm1623 = vcmp.lt.s32.totalorder %v1622, 2
        %vm1624 = vcmp.eq.s32.totalorder %v1622, 0
        %v1625 = vxor.u32 %v1619, 2147483648
        %v1626 = vsel %vm1624, %v1618, %v1625
        %vm1627 = vcmp.eq.s32.totalorder %v1622, 2
        %v1628 = vxor.u32 %v1618, 2147483648
        %v1629 = vsel %vm1627, %v1628, %v1619
        %v1630 = vsel %vm1623, %v1626, %v1629
        %v1631 = vsel %vm1620, nan, %v1630
        %v1632 = vand.u32 2147483647, %v416
        %vm1633 = vcmp.le.f32.partialorder %v1632, 0.7853982
        %vm1634 = vcmp.lt.s32.totalorder %v416, 0
        %v1635 = vand.u32 %v416, 2139095040
        %v1636 = vshrl.u32 %v1635, 23
        %v1637 = vsub.s32 %v1636, 127
        %v1638 = vand.u32 2147483647, %v416
        %v1639 = vand.u32 %v1638, 8388607
        %v1640 = vor.u32 %v1639, 8388608
        %v1641 = vsub.s32 0, %v1640
        %v1642 = vadd.s32 %v1637, 1
        %vm1643 = vcmp.gt.s32.totalorder %v1642, 0
        %v1644 = vsel %vm1643, %v1642, 0
        %v1645 = vshrl.u32 %v1644, 5
        %v1646 = vand.u32 %v1644, 31
        %v1647 = vsub.s32 32, %v1646
        %v1648 = vshrl.u32 683565275, %v1647
        %v1649 = vshll.u32 683565275, %v1646
        %v1650 = vshrl.u32 2475754826, %v1647
        %v1651 = vor.u32 %v1649, %v1650
        %v1652 = vshll.u32 2475754826, %v1646
        %v1653 = vshrl.u32 2131351028, %v1647
        %v1654 = vor.u32 %v1652, %v1653
        %v1655 = vshll.u32 2131351028, %v1646
        %v1656 = vshrl.u32 2102212464, %v1647
        %v1657 = vor.u32 %v1655, %v1656
        %v1658 = vshll.u32 2102212464, %v1646
        %v1659 = vshrl.u32 920167782, %v1647
        %v1660 = vor.u32 %v1658, %v1659
        %v1661 = vshll.u32 920167782, %v1646
        %v1662 = vshrl.u32 1326507024, %v1647
        %v1663 = vor.u32 %v1661, %v1662
        %vm1664 = vcmp.lt.s32.totalorder %v1645, 1
        %vm1665 = vcmp.lt.s32.totalorder %v1645, 2
        %vm1666 = vcmp.lt.s32.totalorder %v1645, 3
        %vm1667 = vcmp.lt.s32.totalorder %v1645, 4
        %v1668 = vsel %vm1664, %v1648, %v1651
        %v1669 = vsel %vm1667, %v1657, 2102212464
        %v1670 = vsel %vm1666, %v1654, %v1669
        %v1671 = vsel %vm1665, %v1668, %v1670
        %v1672 = vsel %vm1664, %v1651, %v1654
        %v1673 = vsel %vm1667, %v1660, 920167782
        %v1674 = vsel %vm1666, %v1657, %v1673
        %v1675 = vsel %vm1665, %v1672, %v1674
        %v1676 = vsel %vm1664, %v1654, %v1657
        %v1677 = vsel %vm1667, %v1663, 1326507024
        %v1678 = vsel %vm1666, %v1660, %v1677
        %v1679 = vsel %vm1665, %v1676, %v1678
        %v1680 = vshll.u32 %v1640, 8
        %v1681 = vmul.u32.u64.compose %v1680, %v1679
        %v1682 = vextract.low.u32 %v1681
        %v1683 = vextract.high.u32 %v1681
        %v1684 = vmul.u32.u64.compose %v1680, %v1675
        %v1685 = vextract.low.u32 %v1684
        %v1686 = vextract.high.u32 %v1684
        %v1687 = vmul.u32 %v1680, %v1671
        %v1688 = vadd.s32 %v1683, %v1685
        %vm1689 = vc.u32 %v1683, %v1685
        %v1690 = vadd.s32 %v1686, 1
        %v1691 = vsel %vm1689, %v1690, %v1686
        %v1692 = vadd.s32 %v1687, %v1691
        %v1693 = vadd.s32 %v1692, 536870912
        %v1694 = vshrl.u32 %v1693, 30
        %v1695 = vshll.u32 %v1694, 30
        %v1696 = vsub.s32 %v1692, %v1695
        %vm1697 = vcmp.lt.s32.totalorder %v1696, 0
        %v1698 = vsub.s32 0, %v1696
        %v1699 = vsel %vm1697, %v1698, %v1696
        %v1700 = vclz %v1699
        %v1701 = vsub.s32 %v1700, 2
        %vm1702 = vcmp.gt.s32.totalorder 0, %v1701
        %v1703 = vsel %vm1702, 0, %v1701
        %v1704 = vsub.s32 32, %v1703
        %v1705 = vshll.u32 %v1696, %v1703
        %v1706 = vshrl.u32 %v1688, %v1704
        %v1707 = vor.u32 %v1705, %v1706
        %v1708 = vsub.s32 4294967266, %v1703
        %v1709 = vadd.s32 %v1708, 127
        %v1710 = vshll.u32 %v1709, 23
        %v1711 = vor.u32 4788187, %v1710
        %v1712 = vand.u32 2147483647, %v1711
        %v1714 = vcvt.s32.f32 %v1707
        %v1715 = vmul.f32 %v1714, %v1712
        %v1716 = vxor.u32 %v1715, 2147483648
        %v1717 = vsel %vm1634, %v1716, %v1715
        %v1718 = vsub.s32 4, %v1694
        %v1719 = vsel %vm1634, %v1718, %v1694
        %v1720 = vsel %vm1633, %v416, %v1717
        %v1721 = vsel %vm1633, 0, %v1719
        %v1722 = vcosq.f32.pop %v1720
        %v1723 = vsinq.f32.pop %v1720
        %vm1724 = vweird.f32 %v416
        %v1725 = vadd.s32 %v1721, 3
        %v1726 = vand.u32 %v1725, 3
        %vm1727 = vcmp.lt.s32.totalorder %v1726, 2
        %vm1728 = vcmp.eq.s32.totalorder %v1726, 0
        %v1729 = vxor.u32 %v1723, 2147483648
        %v1730 = vsel %vm1728, %v1722, %v1729
        %vm1731 = vcmp.eq.s32.totalorder %v1726, 2
        %v1732 = vxor.u32 %v1722, 2147483648
        %v1733 = vsel %vm1731, %v1732, %v1723
        %v1734 = vsel %vm1727, %v1730, %v1733
        %v1735 = vsel %vm1724, nan, %v1734
        %v1736 = vand.u32 2147483647, %v418
        %vm1737 = vcmp.le.f32.partialorder %v1736, 0.7853982
        %vm1738 = vcmp.lt.s32.totalorder %v418, 0
        %v1739 = vand.u32 %v418, 2139095040
        %v1740 = vshrl.u32 %v1739, 23
        %v1741 = vsub.s32 %v1740, 127
        %v1742 = vand.u32 2147483647, %v418
        %v1743 = vand.u32 %v1742, 8388607
        %v1744 = vor.u32 %v1743, 8388608
        %v1745 = vsub.s32 0, %v1744
        %v1746 = vadd.s32 %v1741, 1
        %vm1747 = vcmp.gt.s32.totalorder %v1746, 0
        %v1748 = vsel %vm1747, %v1746, 0
        %v1749 = vshrl.u32 %v1748, 5
        %v1750 = vand.u32 %v1748, 31
        %v1751 = vsub.s32 32, %v1750
        %v1752 = vshrl.u32 683565275, %v1751
        %v1753 = vshll.u32 683565275, %v1750
        %v1754 = vshrl.u32 2475754826, %v1751
        %v1755 = vor.u32 %v1753, %v1754
        %v1756 = vshll.u32 2475754826, %v1750
        %v1757 = vshrl.u32 2131351028, %v1751
        %v1758 = vor.u32 %v1756, %v1757
        %v1759 = vshll.u32 2131351028, %v1750
        %v1760 = vshrl.u32 2102212464, %v1751
        %v1761 = vor.u32 %v1759, %v1760
        %v1762 = vshll.u32 2102212464, %v1750
        %v1763 = vshrl.u32 920167782, %v1751
        %v1764 = vor.u32 %v1762, %v1763
        %v1765 = vshll.u32 920167782, %v1750
        %v1766 = vshrl.u32 1326507024, %v1751
        %v1767 = vor.u32 %v1765, %v1766
        %vm1768 = vcmp.lt.s32.totalorder %v1749, 1
        %vm1769 = vcmp.lt.s32.totalorder %v1749, 2
        %vm1770 = vcmp.lt.s32.totalorder %v1749, 3
        %vm1771 = vcmp.lt.s32.totalorder %v1749, 4
        %v1772 = vsel %vm1768, %v1752, %v1755
        %v1773 = vsel %vm1771, %v1761, 2102212464
        %v1774 = vsel %vm1770, %v1758, %v1773
        %v1775 = vsel %vm1769, %v1772, %v1774
        %v1776 = vsel %vm1768, %v1755, %v1758
        %v1777 = vsel %vm1771, %v1764, 920167782
        %v1778 = vsel %vm1770, %v1761, %v1777
        %v1779 = vsel %vm1769, %v1776, %v1778
        %v1780 = vsel %vm1768, %v1758, %v1761
        %v1781 = vsel %vm1771, %v1767, 1326507024
        %v1782 = vsel %vm1770, %v1764, %v1781
        %v1783 = vsel %vm1769, %v1780, %v1782
        %v1784 = vshll.u32 %v1744, 8
        %v1785 = vmul.u32.u64.compose %v1784, %v1783
        %v1786 = vextract.low.u32 %v1785
        %v1787 = vextract.high.u32 %v1785
        %v1788 = vmul.u32.u64.compose %v1784, %v1779
        %v1789 = vextract.low.u32 %v1788
        %v1790 = vextract.high.u32 %v1788
        %v1791 = vmul.u32 %v1784, %v1775
        %v1792 = vadd.s32 %v1787, %v1789
        %vm1793 = vc.u32 %v1787, %v1789
        %v1794 = vadd.s32 %v1790, 1
        %v1795 = vsel %vm1793, %v1794, %v1790
        %v1796 = vadd.s32 %v1791, %v1795
        %v1797 = vadd.s32 %v1796, 536870912
        %v1798 = vshrl.u32 %v1797, 30
        %v1799 = vshll.u32 %v1798, 30
        %v1800 = vsub.s32 %v1796, %v1799
        %vm1801 = vcmp.lt.s32.totalorder %v1800, 0
        %v1802 = vsub.s32 0, %v1800
        %v1803 = vsel %vm1801, %v1802, %v1800
        %v1804 = vclz %v1803
        %v1805 = vsub.s32 %v1804, 2
        %vm1806 = vcmp.gt.s32.totalorder 0, %v1805
        %v1807 = vsel %vm1806, 0, %v1805
        %v1808 = vsub.s32 32, %v1807
        %v1809 = vshll.u32 %v1800, %v1807
        %v1810 = vshrl.u32 %v1792, %v1808
        %v1811 = vor.u32 %v1809, %v1810
        %v1812 = vsub.s32 4294967266, %v1807
        %v1813 = vadd.s32 %v1812, 127
        %v1814 = vshll.u32 %v1813, 23
        %v1815 = vor.u32 4788187, %v1814
        %v1816 = vand.u32 2147483647, %v1815
        %v1818 = vcvt.s32.f32 %v1811
        %v1819 = vmul.f32 %v1818, %v1816
        %v1820 = vxor.u32 %v1819, 2147483648
        %v1821 = vsel %vm1738, %v1820, %v1819
        %v1822 = vsub.s32 4, %v1798
        %v1823 = vsel %vm1738, %v1822, %v1798
        %v1824 = vsel %vm1737, %v418, %v1821
        %v1825 = vsel %vm1737, 0, %v1823
        %v1826 = vcosq.f32.pop %v1824
        %v1827 = vsinq.f32.pop %v1824
        %vm1828 = vweird.f32 %v418
        %v1829 = vadd.s32 %v1825, 3
        %v1830 = vand.u32 %v1829, 3
        %vm1831 = vcmp.lt.s32.totalorder %v1830, 2
        %vm1832 = vcmp.eq.s32.totalorder %v1830, 0
        %v1833 = vxor.u32 %v1827, 2147483648
        %v1834 = vsel %vm1832, %v1826, %v1833
        %vm1835 = vcmp.eq.s32.totalorder %v1830, 2
        %v1836 = vxor.u32 %v1826, 2147483648
        %v1837 = vsel %vm1835, %v1836, %v1827
        %v1838 = vsel %vm1831, %v1834, %v1837
        %v1839 = vsel %vm1828, nan, %v1838
        %v1840 = vand.u32 2147483647, %v499
        %vm1841 = vcmp.le.f32.partialorder %v1840, 0.7853982
        %vm1842 = vcmp.lt.s32.totalorder %v499, 0
        %v1843 = vand.u32 %v499, 2139095040
        %v1844 = vshrl.u32 %v1843, 23
        %v1845 = vsub.s32 %v1844, 127
        %v1846 = vand.u32 2147483647, %v499
        %v1847 = vand.u32 %v1846, 8388607
        %v1848 = vor.u32 %v1847, 8388608
        %v1849 = vsub.s32 0, %v1848
        %v1850 = vadd.s32 %v1845, 1
        %vm1851 = vcmp.gt.s32.totalorder %v1850, 0
        %v1852 = vsel %vm1851, %v1850, 0
        %v1853 = vshrl.u32 %v1852, 5
        %v1854 = vand.u32 %v1852, 31
        %v1855 = vsub.s32 32, %v1854
        %v1856 = vshrl.u32 683565275, %v1855
        %v1857 = vshll.u32 683565275, %v1854
        %v1858 = vshrl.u32 2475754826, %v1855
        %v1859 = vor.u32 %v1857, %v1858
        %v1860 = vshll.u32 2475754826, %v1854
        %v1861 = vshrl.u32 2131351028, %v1855
        %v1862 = vor.u32 %v1860, %v1861
        %v1863 = vshll.u32 2131351028, %v1854
        %v1864 = vshrl.u32 2102212464, %v1855
        %v1865 = vor.u32 %v1863, %v1864
        %v1866 = vshll.u32 2102212464, %v1854
        %v1867 = vshrl.u32 920167782, %v1855
        %v1868 = vor.u32 %v1866, %v1867
        %v1869 = vshll.u32 920167782, %v1854
        %v1870 = vshrl.u32 1326507024, %v1855
        %v1871 = vor.u32 %v1869, %v1870
        %vm1872 = vcmp.lt.s32.totalorder %v1853, 1
        %vm1873 = vcmp.lt.s32.totalorder %v1853, 2
        %vm1874 = vcmp.lt.s32.totalorder %v1853, 3
        %vm1875 = vcmp.lt.s32.totalorder %v1853, 4
        %v1876 = vsel %vm1872, %v1856, %v1859
        %v1877 = vsel %vm1875, %v1865, 2102212464
        %v1878 = vsel %vm1874, %v1862, %v1877
        %v1879 = vsel %vm1873, %v1876, %v1878
        %v1880 = vsel %vm1872, %v1859, %v1862
        %v1881 = vsel %vm1875, %v1868, 920167782
        %v1882 = vsel %vm1874, %v1865, %v1881
        %v1883 = vsel %vm1873, %v1880, %v1882
        %v1884 = vsel %vm1872, %v1862, %v1865
        %v1885 = vsel %vm1875, %v1871, 1326507024
        %v1886 = vsel %vm1874, %v1868, %v1885
        %v1887 = vsel %vm1873, %v1884, %v1886
        %v1888 = vshll.u32 %v1848, 8
        %v1889 = vmul.u32.u64.compose %v1888, %v1887
        %v1890 = vextract.low.u32 %v1889
        %v1891 = vextract.high.u32 %v1889
        %v1892 = vmul.u32.u64.compose %v1888, %v1883
        %v1893 = vextract.low.u32 %v1892
        %v1894 = vextract.high.u32 %v1892
        %v1895 = vmul.u32 %v1888, %v1879
        %v1896 = vadd.s32 %v1891, %v1893
        %vm1897 = vc.u32 %v1891, %v1893
        %v1898 = vadd.s32 %v1894, 1
        %v1899 = vsel %vm1897, %v1898, %v1894
        %v1900 = vadd.s32 %v1895, %v1899
        %v1901 = vadd.s32 %v1900, 536870912
        %v1902 = vshrl.u32 %v1901, 30
        %v1903 = vshll.u32 %v1902, 30
        %v1904 = vsub.s32 %v1900, %v1903
        %vm1905 = vcmp.lt.s32.totalorder %v1904, 0
        %v1906 = vsub.s32 0, %v1904
        %v1907 = vsel %vm1905, %v1906, %v1904
        %v1908 = vclz %v1907
        %v1909 = vsub.s32 %v1908, 2
        %vm1910 = vcmp.gt.s32.totalorder 0, %v1909
        %v1911 = vsel %vm1910, 0, %v1909
        %v1912 = vsub.s32 32, %v1911
        %v1913 = vshll.u32 %v1904, %v1911
        %v1914 = vshrl.u32 %v1896, %v1912
        %v1915 = vor.u32 %v1913, %v1914
        %v1916 = vsub.s32 4294967266, %v1911
        %v1917 = vadd.s32 %v1916, 127
        %v1918 = vshll.u32 %v1917, 23
        %v1919 = vor.u32 4788187, %v1918
        %v1920 = vand.u32 2147483647, %v1919
        %v1922 = vcvt.s32.f32 %v1915
        %v1923 = vmul.f32 %v1922, %v1920
        %v1924 = vxor.u32 %v1923, 2147483648
        %v1925 = vsel %vm1842, %v1924, %v1923
        %v1926 = vsub.s32 4, %v1902
        %v1927 = vsel %vm1842, %v1926, %v1902
        %v1928 = vsel %vm1841, %v499, %v1925
        %v1929 = vsel %vm1841, 0, %v1927
        %v1930 = vcosq.f32.pop %v1928
        %v1931 = vsinq.f32.pop %v1928
        %vm1932 = vweird.f32 %v499
        %v1933 = vadd.s32 %v1929, 3
        %v1934 = vand.u32 %v1933, 3
        %vm1935 = vcmp.lt.s32.totalorder %v1934, 2
        %vm1936 = vcmp.eq.s32.totalorder %v1934, 0
        %v1937 = vxor.u32 %v1931, 2147483648
        %v1938 = vsel %vm1936, %v1930, %v1937
        %vm1939 = vcmp.eq.s32.totalorder %v1934, 2
        %v1940 = vxor.u32 %v1930, 2147483648
        %v1941 = vsel %vm1939, %v1940, %v1931
        %v1942 = vsel %vm1935, %v1938, %v1941
        %v1943 = vsel %vm1932, nan, %v1942
        %v1944 = vand.u32 2147483647, %v501
        %vm1945 = vcmp.le.f32.partialorder %v1944, 0.7853982
        %vm1946 = vcmp.lt.s32.totalorder %v501, 0
        %v1947 = vand.u32 %v501, 2139095040
        %v1948 = vshrl.u32 %v1947, 23
        %v1949 = vsub.s32 %v1948, 127
        %v1950 = vand.u32 2147483647, %v501
        %v1951 = vand.u32 %v1950, 8388607
        %v1952 = vor.u32 %v1951, 8388608
        %v1953 = vsub.s32 0, %v1952
        %v1954 = vadd.s32 %v1949, 1
        %vm1955 = vcmp.gt.s32.totalorder %v1954, 0
        %v1956 = vsel %vm1955, %v1954, 0
        %v1957 = vshrl.u32 %v1956, 5
        %v1958 = vand.u32 %v1956, 31
        %v1959 = vsub.s32 32, %v1958
        %v1960 = vshrl.u32 683565275, %v1959
        %v1961 = vshll.u32 683565275, %v1958
        %v1962 = vshrl.u32 2475754826, %v1959
        %v1963 = vor.u32 %v1961, %v1962
        %v1964 = vshll.u32 2475754826, %v1958
        %v1965 = vshrl.u32 2131351028, %v1959
        %v1966 = vor.u32 %v1964, %v1965
        %v1967 = vshll.u32 2131351028, %v1958
        %v1968 = vshrl.u32 2102212464, %v1959
        %v1969 = vor.u32 %v1967, %v1968
        %v1970 = vshll.u32 2102212464, %v1958
        %v1971 = vshrl.u32 920167782, %v1959
        %v1972 = vor.u32 %v1970, %v1971
        %v1973 = vshll.u32 920167782, %v1958
        %v1974 = vshrl.u32 1326507024, %v1959
        %v1975 = vor.u32 %v1973, %v1974
        %vm1976 = vcmp.lt.s32.totalorder %v1957, 1
        %vm1977 = vcmp.lt.s32.totalorder %v1957, 2
        %vm1978 = vcmp.lt.s32.totalorder %v1957, 3
        %vm1979 = vcmp.lt.s32.totalorder %v1957, 4
        %v1980 = vsel %vm1976, %v1960, %v1963
        %v1981 = vsel %vm1979, %v1969, 2102212464
        %v1982 = vsel %vm1978, %v1966, %v1981
        %v1983 = vsel %vm1977, %v1980, %v1982
        %v1984 = vsel %vm1976, %v1963, %v1966
        %v1985 = vsel %vm1979, %v1972, 920167782
        %v1986 = vsel %vm1978, %v1969, %v1985
        %v1987 = vsel %vm1977, %v1984, %v1986
        %v1988 = vsel %vm1976, %v1966, %v1969
        %v1989 = vsel %vm1979, %v1975, 1326507024
        %v1990 = vsel %vm1978, %v1972, %v1989
        %v1991 = vsel %vm1977, %v1988, %v1990
        %v1992 = vshll.u32 %v1952, 8
        %v1993 = vmul.u32.u64.compose %v1992, %v1991
        %v1994 = vextract.low.u32 %v1993
        %v1995 = vextract.high.u32 %v1993
        %v1996 = vmul.u32.u64.compose %v1992, %v1987
        %v1997 = vextract.low.u32 %v1996
        %v1998 = vextract.high.u32 %v1996
        %v1999 = vmul.u32 %v1992, %v1983
        %v2000 = vadd.s32 %v1995, %v1997
        %vm2001 = vc.u32 %v1995, %v1997
        %v2002 = vadd.s32 %v1998, 1
        %v2003 = vsel %vm2001, %v2002, %v1998
        %v2004 = vadd.s32 %v1999, %v2003
        %v2005 = vadd.s32 %v2004, 536870912
        %v2006 = vshrl.u32 %v2005, 30
        %v2007 = vshll.u32 %v2006, 30
        %v2008 = vsub.s32 %v2004, %v2007
        %vm2009 = vcmp.lt.s32.totalorder %v2008, 0
        %v2010 = vsub.s32 0, %v2008
        %v2011 = vsel %vm2009, %v2010, %v2008
        %v2012 = vclz %v2011
        %v2013 = vsub.s32 %v2012, 2
        %vm2014 = vcmp.gt.s32.totalorder 0, %v2013
        %v2015 = vsel %vm2014, 0, %v2013
        %v2016 = vsub.s32 32, %v2015
        %v2017 = vshll.u32 %v2008, %v2015
        %v2018 = vshrl.u32 %v2000, %v2016
        %v2019 = vor.u32 %v2017, %v2018
        %v2020 = vsub.s32 4294967266, %v2015
        %v2021 = vadd.s32 %v2020, 127
        %v2022 = vshll.u32 %v2021, 23
        %v2023 = vor.u32 4788187, %v2022
        %v2024 = vand.u32 2147483647, %v2023
        %v2026 = vcvt.s32.f32 %v2019
        %v2027 = vmul.f32 %v2026, %v2024
        %v2028 = vxor.u32 %v2027, 2147483648
        %v2029 = vsel %vm1946, %v2028, %v2027
        %v2030 = vsub.s32 4, %v2006
        %v2031 = vsel %vm1946, %v2030, %v2006
        %v2032 = vsel %vm1945, %v501, %v2029
        %v2033 = vsel %vm1945, 0, %v2031
        %v2034 = vcosq.f32.pop %v2032
        %v2035 = vsinq.f32.pop %v2032
        %vm2036 = vweird.f32 %v501
        %v2037 = vadd.s32 %v2033, 3
        %v2038 = vand.u32 %v2037, 3
        %vm2039 = vcmp.lt.s32.totalorder %v2038, 2
        %vm2040 = vcmp.eq.s32.totalorder %v2038, 0
        %v2041 = vxor.u32 %v2035, 2147483648
        %v2042 = vsel %vm2040, %v2034, %v2041
        %vm2043 = vcmp.eq.s32.totalorder %v2038, 2
        %v2044 = vxor.u32 %v2034, 2147483648
        %v2045 = vsel %vm2043, %v2044, %v2035
        %v2046 = vsel %vm2039, %v2042, %v2045
        %v2047 = vsel %vm2036, nan, %v2046
        %v2048 = vand.u32 2147483647, %v582
        %vm2049 = vcmp.le.f32.partialorder %v2048, 0.7853982
        %vm2050 = vcmp.lt.s32.totalorder %v582, 0
        %v2051 = vand.u32 %v582, 2139095040
        %v2052 = vshrl.u32 %v2051, 23
        %v2053 = vsub.s32 %v2052, 127
        %v2054 = vand.u32 2147483647, %v582
        %v2055 = vand.u32 %v2054, 8388607
        %v2056 = vor.u32 %v2055, 8388608
        %v2057 = vsub.s32 0, %v2056
        %v2058 = vadd.s32 %v2053, 1
        %vm2059 = vcmp.gt.s32.totalorder %v2058, 0
        %v2060 = vsel %vm2059, %v2058, 0
        %v2061 = vshrl.u32 %v2060, 5
        %v2062 = vand.u32 %v2060, 31
        %v2063 = vsub.s32 32, %v2062
        %v2064 = vshrl.u32 683565275, %v2063
        %v2065 = vshll.u32 683565275, %v2062
        %v2066 = vshrl.u32 2475754826, %v2063
        %v2067 = vor.u32 %v2065, %v2066
        %v2068 = vshll.u32 2475754826, %v2062
        %v2069 = vshrl.u32 2131351028, %v2063
        %v2070 = vor.u32 %v2068, %v2069
        %v2071 = vshll.u32 2131351028, %v2062
        %v2072 = vshrl.u32 2102212464, %v2063
        %v2073 = vor.u32 %v2071, %v2072
        %v2074 = vshll.u32 2102212464, %v2062
        %v2075 = vshrl.u32 920167782, %v2063
        %v2076 = vor.u32 %v2074, %v2075
        %v2077 = vshll.u32 920167782, %v2062
        %v2078 = vshrl.u32 1326507024, %v2063
        %v2079 = vor.u32 %v2077, %v2078
        %vm2080 = vcmp.lt.s32.totalorder %v2061, 1
        %vm2081 = vcmp.lt.s32.totalorder %v2061, 2
        %vm2082 = vcmp.lt.s32.totalorder %v2061, 3
        %vm2083 = vcmp.lt.s32.totalorder %v2061, 4
        %v2084 = vsel %vm2080, %v2064, %v2067
        %v2085 = vsel %vm2083, %v2073, 2102212464
        %v2086 = vsel %vm2082, %v2070, %v2085
        %v2087 = vsel %vm2081, %v2084, %v2086
        %v2088 = vsel %vm2080, %v2067, %v2070
        %v2089 = vsel %vm2083, %v2076, 920167782
        %v2090 = vsel %vm2082, %v2073, %v2089
        %v2091 = vsel %vm2081, %v2088, %v2090
        %v2092 = vsel %vm2080, %v2070, %v2073
        %v2093 = vsel %vm2083, %v2079, 1326507024
        %v2094 = vsel %vm2082, %v2076, %v2093
        %v2095 = vsel %vm2081, %v2092, %v2094
        %v2096 = vshll.u32 %v2056, 8
        %v2097 = vmul.u32.u64.compose %v2096, %v2095
        %v2098 = vextract.low.u32 %v2097
        %v2099 = vextract.high.u32 %v2097
        %v2100 = vmul.u32.u64.compose %v2096, %v2091
        %v2101 = vextract.low.u32 %v2100
        %v2102 = vextract.high.u32 %v2100
        %v2103 = vmul.u32 %v2096, %v2087
        %v2104 = vadd.s32 %v2099, %v2101
        %vm2105 = vc.u32 %v2099, %v2101
        %v2106 = vadd.s32 %v2102, 1
        %v2107 = vsel %vm2105, %v2106, %v2102
        %v2108 = vadd.s32 %v2103, %v2107
        %v2109 = vadd.s32 %v2108, 536870912
        %v2110 = vshrl.u32 %v2109, 30
        %v2111 = vshll.u32 %v2110, 30
        %v2112 = vsub.s32 %v2108, %v2111
        %vm2113 = vcmp.lt.s32.totalorder %v2112, 0
        %v2114 = vsub.s32 0, %v2112
        %v2115 = vsel %vm2113, %v2114, %v2112
        %v2116 = vclz %v2115
        %v2117 = vsub.s32 %v2116, 2
        %vm2118 = vcmp.gt.s32.totalorder 0, %v2117
        %v2119 = vsel %vm2118, 0, %v2117
        %v2120 = vsub.s32 32, %v2119
        %v2121 = vshll.u32 %v2112, %v2119
        %v2122 = vshrl.u32 %v2104, %v2120
        %v2123 = vor.u32 %v2121, %v2122
        %v2124 = vsub.s32 4294967266, %v2119
        %v2125 = vadd.s32 %v2124, 127
        %v2126 = vshll.u32 %v2125, 23
        %v2127 = vor.u32 4788187, %v2126
        %v2128 = vand.u32 2147483647, %v2127
        %v2130 = vcvt.s32.f32 %v2123
        %v2131 = vmul.f32 %v2130, %v2128
        %v2132 = vxor.u32 %v2131, 2147483648
        %v2133 = vsel %vm2050, %v2132, %v2131
        %v2134 = vsub.s32 4, %v2110
        %v2135 = vsel %vm2050, %v2134, %v2110
        %v2136 = vsel %vm2049, %v582, %v2133
        %v2137 = vsel %vm2049, 0, %v2135
        %v2138 = vcosq.f32.pop %v2136
        %v2139 = vsinq.f32.pop %v2136
        %vm2140 = vweird.f32 %v582
        %v2141 = vadd.s32 %v2137, 3
        %v2142 = vand.u32 %v2141, 3
        %vm2143 = vcmp.lt.s32.totalorder %v2142, 2
        %vm2144 = vcmp.eq.s32.totalorder %v2142, 0
        %v2145 = vxor.u32 %v2139, 2147483648
        %v2146 = vsel %vm2144, %v2138, %v2145
        %vm2147 = vcmp.eq.s32.totalorder %v2142, 2
        %v2148 = vxor.u32 %v2138, 2147483648
        %v2149 = vsel %vm2147, %v2148, %v2139
        %v2150 = vsel %vm2143, %v2146, %v2149
        %v2151 = vsel %vm2140, nan, %v2150
        %v2152 = vand.u32 2147483647, %v584
        %vm2153 = vcmp.le.f32.partialorder %v2152, 0.7853982
        %vm2154 = vcmp.lt.s32.totalorder %v584, 0
        %v2155 = vand.u32 %v584, 2139095040
        %v2156 = vshrl.u32 %v2155, 23
        %v2157 = vsub.s32 %v2156, 127
        %v2158 = vand.u32 2147483647, %v584
        %v2159 = vand.u32 %v2158, 8388607
        %v2160 = vor.u32 %v2159, 8388608
        %v2161 = vsub.s32 0, %v2160
        %v2162 = vadd.s32 %v2157, 1
        %vm2163 = vcmp.gt.s32.totalorder %v2162, 0
        %v2164 = vsel %vm2163, %v2162, 0
        %v2165 = vshrl.u32 %v2164, 5
        %v2166 = vand.u32 %v2164, 31
        %v2167 = vsub.s32 32, %v2166
        %v2168 = vshrl.u32 683565275, %v2167
        %v2169 = vshll.u32 683565275, %v2166
        %v2170 = vshrl.u32 2475754826, %v2167
        %v2171 = vor.u32 %v2169, %v2170
        %v2172 = vshll.u32 2475754826, %v2166
        %v2173 = vshrl.u32 2131351028, %v2167
        %v2174 = vor.u32 %v2172, %v2173
        %v2175 = vshll.u32 2131351028, %v2166
        %v2176 = vshrl.u32 2102212464, %v2167
        %v2177 = vor.u32 %v2175, %v2176
        %v2178 = vshll.u32 2102212464, %v2166
        %v2179 = vshrl.u32 920167782, %v2167
        %v2180 = vor.u32 %v2178, %v2179
        %v2181 = vshll.u32 920167782, %v2166
        %v2182 = vshrl.u32 1326507024, %v2167
        %v2183 = vor.u32 %v2181, %v2182
        %vm2184 = vcmp.lt.s32.totalorder %v2165, 1
        %vm2185 = vcmp.lt.s32.totalorder %v2165, 2
        %vm2186 = vcmp.lt.s32.totalorder %v2165, 3
        %vm2187 = vcmp.lt.s32.totalorder %v2165, 4
        %v2188 = vsel %vm2184, %v2168, %v2171
        %v2189 = vsel %vm2187, %v2177, 2102212464
        %v2190 = vsel %vm2186, %v2174, %v2189
        %v2191 = vsel %vm2185, %v2188, %v2190
        %v2192 = vsel %vm2184, %v2171, %v2174
        %v2193 = vsel %vm2187, %v2180, 920167782
        %v2194 = vsel %vm2186, %v2177, %v2193
        %v2195 = vsel %vm2185, %v2192, %v2194
        %v2196 = vsel %vm2184, %v2174, %v2177
        %v2197 = vsel %vm2187, %v2183, 1326507024
        %v2198 = vsel %vm2186, %v2180, %v2197
        %v2199 = vsel %vm2185, %v2196, %v2198
        %v2200 = vshll.u32 %v2160, 8
        %v2201 = vmul.u32.u64.compose %v2200, %v2199
        %v2202 = vextract.low.u32 %v2201
        %v2203 = vextract.high.u32 %v2201
        %v2204 = vmul.u32.u64.compose %v2200, %v2195
        %v2205 = vextract.low.u32 %v2204
        %v2206 = vextract.high.u32 %v2204
        %v2207 = vmul.u32 %v2200, %v2191
        %v2208 = vadd.s32 %v2203, %v2205
        %vm2209 = vc.u32 %v2203, %v2205
        %v2210 = vadd.s32 %v2206, 1
        %v2211 = vsel %vm2209, %v2210, %v2206
        %v2212 = vadd.s32 %v2207, %v2211
        %v2213 = vadd.s32 %v2212, 536870912
        %v2214 = vshrl.u32 %v2213, 30
        %v2215 = vshll.u32 %v2214, 30
        %v2216 = vsub.s32 %v2212, %v2215
        %vm2217 = vcmp.lt.s32.totalorder %v2216, 0
        %v2218 = vsub.s32 0, %v2216
        %v2219 = vsel %vm2217, %v2218, %v2216
        %v2220 = vclz %v2219
        %v2221 = vsub.s32 %v2220, 2
        %vm2222 = vcmp.gt.s32.totalorder 0, %v2221
        %v2223 = vsel %vm2222, 0, %v2221
        %v2224 = vsub.s32 32, %v2223
        %v2225 = vshll.u32 %v2216, %v2223
        %v2226 = vshrl.u32 %v2208, %v2224
        %v2227 = vor.u32 %v2225, %v2226
        %v2228 = vsub.s32 4294967266, %v2223
        %v2229 = vadd.s32 %v2228, 127
        %v2230 = vshll.u32 %v2229, 23
        %v2231 = vor.u32 4788187, %v2230
        %v2232 = vand.u32 2147483647, %v2231
        %v2234 = vcvt.s32.f32 %v2227
        %v2235 = vmul.f32 %v2234, %v2232
        %v2236 = vxor.u32 %v2235, 2147483648
        %v2237 = vsel %vm2154, %v2236, %v2235
        %v2238 = vsub.s32 4, %v2214
        %v2239 = vsel %vm2154, %v2238, %v2214
        %v2240 = vsel %vm2153, %v584, %v2237
        %v2241 = vsel %vm2153, 0, %v2239
        %v2242 = vcosq.f32.pop %v2240
        %v2243 = vsinq.f32.pop %v2240
        %vm2244 = vweird.f32 %v584
        %v2245 = vadd.s32 %v2241, 3
        %v2246 = vand.u32 %v2245, 3
        %vm2247 = vcmp.lt.s32.totalorder %v2246, 2
        %vm2248 = vcmp.eq.s32.totalorder %v2246, 0
        %v2249 = vxor.u32 %v2243, 2147483648
        %v2250 = vsel %vm2248, %v2242, %v2249
        %vm2251 = vcmp.eq.s32.totalorder %v2246, 2
        %v2252 = vxor.u32 %v2242, 2147483648
        %v2253 = vsel %vm2251, %v2252, %v2243
        %v2254 = vsel %vm2247, %v2250, %v2253
        %v2255 = vsel %vm2244, nan, %v2254
        %v2256 = vand.u32 2147483647, %v339
        %vm2257 = vcmp.le.f32.partialorder %v2256, 0.7853982
        %vm2258 = vcmp.lt.s32.totalorder %v339, 0
        %v2259 = vand.u32 %v339, 2139095040
        %v2260 = vshrl.u32 %v2259, 23
        %v2261 = vsub.s32 %v2260, 127
        %v2262 = vand.u32 2147483647, %v339
        %v2263 = vand.u32 %v2262, 8388607
        %v2264 = vor.u32 %v2263, 8388608
        %v2265 = vsub.s32 0, %v2264
        %v2266 = vadd.s32 %v2261, 1
        %vm2267 = vcmp.gt.s32.totalorder %v2266, 0
        %v2268 = vsel %vm2267, %v2266, 0
        %v2269 = vshrl.u32 %v2268, 5
        %v2270 = vand.u32 %v2268, 31
        %v2271 = vsub.s32 32, %v2270
        %v2272 = vshrl.u32 683565275, %v2271
        %v2273 = vshll.u32 683565275, %v2270
        %v2274 = vshrl.u32 2475754826, %v2271
        %v2275 = vor.u32 %v2273, %v2274
        %v2276 = vshll.u32 2475754826, %v2270
        %v2277 = vshrl.u32 2131351028, %v2271
        %v2278 = vor.u32 %v2276, %v2277
        %v2279 = vshll.u32 2131351028, %v2270
        %v2280 = vshrl.u32 2102212464, %v2271
        %v2281 = vor.u32 %v2279, %v2280
        %v2282 = vshll.u32 2102212464, %v2270
        %v2283 = vshrl.u32 920167782, %v2271
        %v2284 = vor.u32 %v2282, %v2283
        %v2285 = vshll.u32 920167782, %v2270
        %v2286 = vshrl.u32 1326507024, %v2271
        %v2287 = vor.u32 %v2285, %v2286
        %vm2288 = vcmp.lt.s32.totalorder %v2269, 1
        %vm2289 = vcmp.lt.s32.totalorder %v2269, 2
        %vm2290 = vcmp.lt.s32.totalorder %v2269, 3
        %vm2291 = vcmp.lt.s32.totalorder %v2269, 4
        %v2292 = vsel %vm2288, %v2272, %v2275
        %v2293 = vsel %vm2291, %v2281, 2102212464
        %v2294 = vsel %vm2290, %v2278, %v2293
        %v2295 = vsel %vm2289, %v2292, %v2294
        %v2296 = vsel %vm2288, %v2275, %v2278
        %v2297 = vsel %vm2291, %v2284, 920167782
        %v2298 = vsel %vm2290, %v2281, %v2297
        %v2299 = vsel %vm2289, %v2296, %v2298
        %v2300 = vsel %vm2288, %v2278, %v2281
        %v2301 = vsel %vm2291, %v2287, 1326507024
        %v2302 = vsel %vm2290, %v2284, %v2301
        %v2303 = vsel %vm2289, %v2300, %v2302
        %v2304 = vshll.u32 %v2264, 8
        %v2305 = vmul.u32.u64.compose %v2304, %v2303
        %v2306 = vextract.low.u32 %v2305
        %v2307 = vextract.high.u32 %v2305
        %v2308 = vmul.u32.u64.compose %v2304, %v2299
        %v2309 = vextract.low.u32 %v2308
        %v2310 = vextract.high.u32 %v2308
        %v2311 = vmul.u32 %v2304, %v2295
        %v2312 = vadd.s32 %v2307, %v2309
        %vm2313 = vc.u32 %v2307, %v2309
        %v2314 = vadd.s32 %v2310, 1
        %v2315 = vsel %vm2313, %v2314, %v2310
        %v2316 = vadd.s32 %v2311, %v2315
        %v2317 = vadd.s32 %v2316, 536870912
        %v2318 = vshrl.u32 %v2317, 30
        %v2319 = vshll.u32 %v2318, 30
        %v2320 = vsub.s32 %v2316, %v2319
        %vm2321 = vcmp.lt.s32.totalorder %v2320, 0
        %v2322 = vsub.s32 0, %v2320
        %v2323 = vsel %vm2321, %v2322, %v2320
        %v2324 = vclz %v2323
        %v2325 = vsub.s32 %v2324, 2
        %vm2326 = vcmp.gt.s32.totalorder 0, %v2325
        %v2327 = vsel %vm2326, 0, %v2325
        %v2328 = vsub.s32 32, %v2327
        %v2329 = vshll.u32 %v2320, %v2327
        %v2330 = vshrl.u32 %v2312, %v2328
        %v2331 = vor.u32 %v2329, %v2330
        %v2332 = vsub.s32 4294967266, %v2327
        %v2333 = vadd.s32 %v2332, 127
        %v2334 = vshll.u32 %v2333, 23
        %v2335 = vor.u32 4788187, %v2334
        %v2336 = vand.u32 2147483647, %v2335
        %v2338 = vcvt.s32.f32 %v2331
        %v2339 = vmul.f32 %v2338, %v2336
        %v2340 = vxor.u32 %v2339, 2147483648
        %v2341 = vsel %vm2258, %v2340, %v2339
        %v2342 = vsub.s32 4, %v2318
        %v2343 = vsel %vm2258, %v2342, %v2318
        %v2344 = vsel %vm2257, %v339, %v2341
        %v2345 = vsel %vm2257, 0, %v2343
        %v2346 = vcosq.f32.pop %v2344
        %v2347 = vsinq.f32.pop %v2344
        %vm2348 = vweird.f32 %v339
        %v2349 = vadd.s32 %v2345, 3
        %v2350 = vand.u32 %v2349, 3
        %vm2351 = vcmp.lt.s32.totalorder %v2350, 2
        %vm2352 = vcmp.eq.s32.totalorder %v2350, 0
        %v2353 = vxor.u32 %v2347, 2147483648
        %v2354 = vsel %vm2352, %v2346, %v2353
        %vm2355 = vcmp.eq.s32.totalorder %v2350, 2
        %v2356 = vxor.u32 %v2346, 2147483648
        %v2357 = vsel %vm2355, %v2356, %v2347
        %v2358 = vsel %vm2351, %v2354, %v2357
        %v2359 = vsel %vm2348, nan, %v2358
        %v2360 = vand.u32 2147483647, %v341
        %vm2361 = vcmp.le.f32.partialorder %v2360, 0.7853982
        %vm2362 = vcmp.lt.s32.totalorder %v341, 0
        %v2363 = vand.u32 %v341, 2139095040
        %v2364 = vshrl.u32 %v2363, 23
        %v2365 = vsub.s32 %v2364, 127
        %v2366 = vand.u32 2147483647, %v341
        %v2367 = vand.u32 %v2366, 8388607
        %v2368 = vor.u32 %v2367, 8388608
        %v2369 = vsub.s32 0, %v2368
        %v2370 = vadd.s32 %v2365, 1
        %vm2371 = vcmp.gt.s32.totalorder %v2370, 0
        %v2372 = vsel %vm2371, %v2370, 0
        %v2373 = vshrl.u32 %v2372, 5
        %v2374 = vand.u32 %v2372, 31
        %v2375 = vsub.s32 32, %v2374
        %v2376 = vshrl.u32 683565275, %v2375
        %v2377 = vshll.u32 683565275, %v2374
        %v2378 = vshrl.u32 2475754826, %v2375
        %v2379 = vor.u32 %v2377, %v2378
        %v2380 = vshll.u32 2475754826, %v2374
        %v2381 = vshrl.u32 2131351028, %v2375
        %v2382 = vor.u32 %v2380, %v2381
        %v2383 = vshll.u32 2131351028, %v2374
        %v2384 = vshrl.u32 2102212464, %v2375
        %v2385 = vor.u32 %v2383, %v2384
        %v2386 = vshll.u32 2102212464, %v2374
        %v2387 = vshrl.u32 920167782, %v2375
        %v2388 = vor.u32 %v2386, %v2387
        %v2389 = vshll.u32 920167782, %v2374
        %v2390 = vshrl.u32 1326507024, %v2375
        %v2391 = vor.u32 %v2389, %v2390
        %vm2392 = vcmp.lt.s32.totalorder %v2373, 1
        %vm2393 = vcmp.lt.s32.totalorder %v2373, 2
        %vm2394 = vcmp.lt.s32.totalorder %v2373, 3
        %vm2395 = vcmp.lt.s32.totalorder %v2373, 4
        %v2396 = vsel %vm2392, %v2376, %v2379
        %v2397 = vsel %vm2395, %v2385, 2102212464
        %v2398 = vsel %vm2394, %v2382, %v2397
        %v2399 = vsel %vm2393, %v2396, %v2398
        %v2400 = vsel %vm2392, %v2379, %v2382
        %v2401 = vsel %vm2395, %v2388, 920167782
        %v2402 = vsel %vm2394, %v2385, %v2401
        %v2403 = vsel %vm2393, %v2400, %v2402
        %v2404 = vsel %vm2392, %v2382, %v2385
        %v2405 = vsel %vm2395, %v2391, 1326507024
        %v2406 = vsel %vm2394, %v2388, %v2405
        %v2407 = vsel %vm2393, %v2404, %v2406
        %v2408 = vshll.u32 %v2368, 8
        %v2409 = vmul.u32.u64.compose %v2408, %v2407
        %v2410 = vextract.low.u32 %v2409
        %v2411 = vextract.high.u32 %v2409
        %v2412 = vmul.u32.u64.compose %v2408, %v2403
        %v2413 = vextract.low.u32 %v2412
        %v2414 = vextract.high.u32 %v2412
        %v2415 = vmul.u32 %v2408, %v2399
        %v2416 = vadd.s32 %v2411, %v2413
        %vm2417 = vc.u32 %v2411, %v2413
        %v2418 = vadd.s32 %v2414, 1
        %v2419 = vsel %vm2417, %v2418, %v2414
        %v2420 = vadd.s32 %v2415, %v2419
        %v2421 = vadd.s32 %v2420, 536870912
        %v2422 = vshrl.u32 %v2421, 30
        %v2423 = vshll.u32 %v2422, 30
        %v2424 = vsub.s32 %v2420, %v2423
        %vm2425 = vcmp.lt.s32.totalorder %v2424, 0
        %v2426 = vsub.s32 0, %v2424
        %v2427 = vsel %vm2425, %v2426, %v2424
        %v2428 = vclz %v2427
        %v2429 = vsub.s32 %v2428, 2
        %vm2430 = vcmp.gt.s32.totalorder 0, %v2429
        %v2431 = vsel %vm2430, 0, %v2429
        %v2432 = vsub.s32 32, %v2431
        %v2433 = vshll.u32 %v2424, %v2431
        %v2434 = vshrl.u32 %v2416, %v2432
        %v2435 = vor.u32 %v2433, %v2434
        %v2436 = vsub.s32 4294967266, %v2431
        %v2437 = vadd.s32 %v2436, 127
        %v2438 = vshll.u32 %v2437, 23
        %v2439 = vor.u32 4788187, %v2438
        %v2440 = vand.u32 2147483647, %v2439
        %v2442 = vcvt.s32.f32 %v2435
        %v2443 = vmul.f32 %v2442, %v2440
        %v2444 = vxor.u32 %v2443, 2147483648
        %v2445 = vsel %vm2362, %v2444, %v2443
        %v2446 = vsub.s32 4, %v2422
        %v2447 = vsel %vm2362, %v2446, %v2422
        %v2448 = vsel %vm2361, %v341, %v2445
        %v2449 = vsel %vm2361, 0, %v2447
        %v2450 = vcosq.f32.pop %v2448
        %v2451 = vsinq.f32.pop %v2448
        %vm2452 = vweird.f32 %v341
        %v2453 = vadd.s32 %v2449, 3
        %v2454 = vand.u32 %v2453, 3
        %vm2455 = vcmp.lt.s32.totalorder %v2454, 2
        %vm2456 = vcmp.eq.s32.totalorder %v2454, 0
        %v2457 = vxor.u32 %v2451, 2147483648
        %v2458 = vsel %vm2456, %v2450, %v2457
        %vm2459 = vcmp.eq.s32.totalorder %v2454, 2
        %v2460 = vxor.u32 %v2450, 2147483648
        %v2461 = vsel %vm2459, %v2460, %v2451
        %v2462 = vsel %vm2455, %v2458, %v2461
        %v2463 = vsel %vm2452, nan, %v2462
        %v2464 = vand.u32 2147483647, %v422
        %vm2465 = vcmp.le.f32.partialorder %v2464, 0.7853982
        %vm2466 = vcmp.lt.s32.totalorder %v422, 0
        %v2467 = vand.u32 %v422, 2139095040
        %v2468 = vshrl.u32 %v2467, 23
        %v2469 = vsub.s32 %v2468, 127
        %v2470 = vand.u32 2147483647, %v422
        %v2471 = vand.u32 %v2470, 8388607
        %v2472 = vor.u32 %v2471, 8388608
        %v2473 = vsub.s32 0, %v2472
        %v2474 = vadd.s32 %v2469, 1
        %vm2475 = vcmp.gt.s32.totalorder %v2474, 0
        %v2476 = vsel %vm2475, %v2474, 0
        %v2477 = vshrl.u32 %v2476, 5
        %v2478 = vand.u32 %v2476, 31
        %v2479 = vsub.s32 32, %v2478
        %v2480 = vshrl.u32 683565275, %v2479
        %v2481 = vshll.u32 683565275, %v2478
        %v2482 = vshrl.u32 2475754826, %v2479
        %v2483 = vor.u32 %v2481, %v2482
        %v2484 = vshll.u32 2475754826, %v2478
        %v2485 = vshrl.u32 2131351028, %v2479
        %v2486 = vor.u32 %v2484, %v2485
        %v2487 = vshll.u32 2131351028, %v2478
        %v2488 = vshrl.u32 2102212464, %v2479
        %v2489 = vor.u32 %v2487, %v2488
        %v2490 = vshll.u32 2102212464, %v2478
        %v2491 = vshrl.u32 920167782, %v2479
        %v2492 = vor.u32 %v2490, %v2491
        %v2493 = vshll.u32 920167782, %v2478
        %v2494 = vshrl.u32 1326507024, %v2479
        %v2495 = vor.u32 %v2493, %v2494
        %vm2496 = vcmp.lt.s32.totalorder %v2477, 1
        %vm2497 = vcmp.lt.s32.totalorder %v2477, 2
        %vm2498 = vcmp.lt.s32.totalorder %v2477, 3
        %vm2499 = vcmp.lt.s32.totalorder %v2477, 4
        %v2500 = vsel %vm2496, %v2480, %v2483
        %v2501 = vsel %vm2499, %v2489, 2102212464
        %v2502 = vsel %vm2498, %v2486, %v2501
        %v2503 = vsel %vm2497, %v2500, %v2502
        %v2504 = vsel %vm2496, %v2483, %v2486
        %v2505 = vsel %vm2499, %v2492, 920167782
        %v2506 = vsel %vm2498, %v2489, %v2505
        %v2507 = vsel %vm2497, %v2504, %v2506
        %v2508 = vsel %vm2496, %v2486, %v2489
        %v2509 = vsel %vm2499, %v2495, 1326507024
        %v2510 = vsel %vm2498, %v2492, %v2509
        %v2511 = vsel %vm2497, %v2508, %v2510
        %v2512 = vshll.u32 %v2472, 8
        %v2513 = vmul.u32.u64.compose %v2512, %v2511
        %v2514 = vextract.low.u32 %v2513
        %v2515 = vextract.high.u32 %v2513
        %v2516 = vmul.u32.u64.compose %v2512, %v2507
        %v2517 = vextract.low.u32 %v2516
        %v2518 = vextract.high.u32 %v2516
        %v2519 = vmul.u32 %v2512, %v2503
        %v2520 = vadd.s32 %v2515, %v2517
        %vm2521 = vc.u32 %v2515, %v2517
        %v2522 = vadd.s32 %v2518, 1
        %v2523 = vsel %vm2521, %v2522, %v2518
        %v2524 = vadd.s32 %v2519, %v2523
        %v2525 = vadd.s32 %v2524, 536870912
        %v2526 = vshrl.u32 %v2525, 30
        %v2527 = vshll.u32 %v2526, 30
        %v2528 = vsub.s32 %v2524, %v2527
        %vm2529 = vcmp.lt.s32.totalorder %v2528, 0
        %v2530 = vsub.s32 0, %v2528
        %v2531 = vsel %vm2529, %v2530, %v2528
        %v2532 = vclz %v2531
        %v2533 = vsub.s32 %v2532, 2
        %vm2534 = vcmp.gt.s32.totalorder 0, %v2533
        %v2535 = vsel %vm2534, 0, %v2533
        %v2536 = vsub.s32 32, %v2535
        %v2537 = vshll.u32 %v2528, %v2535
        %v2538 = vshrl.u32 %v2520, %v2536
        %v2539 = vor.u32 %v2537, %v2538
        %v2540 = vsub.s32 4294967266, %v2535
        %v2541 = vadd.s32 %v2540, 127
        %v2542 = vshll.u32 %v2541, 23
        %v2543 = vor.u32 4788187, %v2542
        %v2544 = vand.u32 2147483647, %v2543
        %v2546 = vcvt.s32.f32 %v2539
        %v2547 = vmul.f32 %v2546, %v2544
        %v2548 = vxor.u32 %v2547, 2147483648
        %v2549 = vsel %vm2466, %v2548, %v2547
        %v2550 = vsub.s32 4, %v2526
        %v2551 = vsel %vm2466, %v2550, %v2526
        %v2552 = vsel %vm2465, %v422, %v2549
        %v2553 = vsel %vm2465, 0, %v2551
        %v2554 = vcosq.f32.pop %v2552
        %v2555 = vsinq.f32.pop %v2552
        %vm2556 = vweird.f32 %v422
        %v2557 = vadd.s32 %v2553, 3
        %v2558 = vand.u32 %v2557, 3
        %vm2559 = vcmp.lt.s32.totalorder %v2558, 2
        %vm2560 = vcmp.eq.s32.totalorder %v2558, 0
        %v2561 = vxor.u32 %v2555, 2147483648
        %v2562 = vsel %vm2560, %v2554, %v2561
        %vm2563 = vcmp.eq.s32.totalorder %v2558, 2
        %v2564 = vxor.u32 %v2554, 2147483648
        %v2565 = vsel %vm2563, %v2564, %v2555
        %v2566 = vsel %vm2559, %v2562, %v2565
        %v2567 = vsel %vm2556, nan, %v2566
        %v2568 = vand.u32 2147483647, %v424
        %vm2569 = vcmp.le.f32.partialorder %v2568, 0.7853982
        %vm2570 = vcmp.lt.s32.totalorder %v424, 0
        %v2571 = vand.u32 %v424, 2139095040
        %v2572 = vshrl.u32 %v2571, 23
        %v2573 = vsub.s32 %v2572, 127
        %v2574 = vand.u32 2147483647, %v424
        %v2575 = vand.u32 %v2574, 8388607
        %v2576 = vor.u32 %v2575, 8388608
        %v2577 = vsub.s32 0, %v2576
        %v2578 = vadd.s32 %v2573, 1
        %vm2579 = vcmp.gt.s32.totalorder %v2578, 0
        %v2580 = vsel %vm2579, %v2578, 0
        %v2581 = vshrl.u32 %v2580, 5
        %v2582 = vand.u32 %v2580, 31
        %v2583 = vsub.s32 32, %v2582
        %v2584 = vshrl.u32 683565275, %v2583
        %v2585 = vshll.u32 683565275, %v2582
        %v2586 = vshrl.u32 2475754826, %v2583
        %v2587 = vor.u32 %v2585, %v2586
        %v2588 = vshll.u32 2475754826, %v2582
        %v2589 = vshrl.u32 2131351028, %v2583
        %v2590 = vor.u32 %v2588, %v2589
        %v2591 = vshll.u32 2131351028, %v2582
        %v2592 = vshrl.u32 2102212464, %v2583
        %v2593 = vor.u32 %v2591, %v2592
        %v2594 = vshll.u32 2102212464, %v2582
        %v2595 = vshrl.u32 920167782, %v2583
        %v2596 = vor.u32 %v2594, %v2595
        %v2597 = vshll.u32 920167782, %v2582
        %v2598 = vshrl.u32 1326507024, %v2583
        %v2599 = vor.u32 %v2597, %v2598
        %vm2600 = vcmp.lt.s32.totalorder %v2581, 1
        %vm2601 = vcmp.lt.s32.totalorder %v2581, 2
        %vm2602 = vcmp.lt.s32.totalorder %v2581, 3
        %vm2603 = vcmp.lt.s32.totalorder %v2581, 4
        %v2604 = vsel %vm2600, %v2584, %v2587
        %v2605 = vsel %vm2603, %v2593, 2102212464
        %v2606 = vsel %vm2602, %v2590, %v2605
        %v2607 = vsel %vm2601, %v2604, %v2606
        %v2608 = vsel %vm2600, %v2587, %v2590
        %v2609 = vsel %vm2603, %v2596, 920167782
        %v2610 = vsel %vm2602, %v2593, %v2609
        %v2611 = vsel %vm2601, %v2608, %v2610
        %v2612 = vsel %vm2600, %v2590, %v2593
        %v2613 = vsel %vm2603, %v2599, 1326507024
        %v2614 = vsel %vm2602, %v2596, %v2613
        %v2615 = vsel %vm2601, %v2612, %v2614
        %v2616 = vshll.u32 %v2576, 8
        %v2617 = vmul.u32.u64.compose %v2616, %v2615
        %v2618 = vextract.low.u32 %v2617
        %v2619 = vextract.high.u32 %v2617
        %v2620 = vmul.u32.u64.compose %v2616, %v2611
        %v2621 = vextract.low.u32 %v2620
        %v2622 = vextract.high.u32 %v2620
        %v2623 = vmul.u32 %v2616, %v2607
        %v2624 = vadd.s32 %v2619, %v2621
        %vm2625 = vc.u32 %v2619, %v2621
        %v2626 = vadd.s32 %v2622, 1
        %v2627 = vsel %vm2625, %v2626, %v2622
        %v2628 = vadd.s32 %v2623, %v2627
        %v2629 = vadd.s32 %v2628, 536870912
        %v2630 = vshrl.u32 %v2629, 30
        %v2631 = vshll.u32 %v2630, 30
        %v2632 = vsub.s32 %v2628, %v2631
        %vm2633 = vcmp.lt.s32.totalorder %v2632, 0
        %v2634 = vsub.s32 0, %v2632
        %v2635 = vsel %vm2633, %v2634, %v2632
        %v2636 = vclz %v2635
        %v2637 = vsub.s32 %v2636, 2
        %vm2638 = vcmp.gt.s32.totalorder 0, %v2637
        %v2639 = vsel %vm2638, 0, %v2637
        %v2640 = vsub.s32 32, %v2639
        %v2641 = vshll.u32 %v2632, %v2639
        %v2642 = vshrl.u32 %v2624, %v2640
        %v2643 = vor.u32 %v2641, %v2642
        %v2644 = vsub.s32 4294967266, %v2639
        %v2645 = vadd.s32 %v2644, 127
        %v2646 = vshll.u32 %v2645, 23
        %v2647 = vor.u32 4788187, %v2646
        %v2648 = vand.u32 2147483647, %v2647
        %v2650 = vcvt.s32.f32 %v2643
        %v2651 = vmul.f32 %v2650, %v2648
        %v2652 = vxor.u32 %v2651, 2147483648
        %v2653 = vsel %vm2570, %v2652, %v2651
        %v2654 = vsub.s32 4, %v2630
        %v2655 = vsel %vm2570, %v2654, %v2630
        %v2656 = vsel %vm2569, %v424, %v2653
        %v2657 = vsel %vm2569, 0, %v2655
        %v2658 = vcosq.f32.pop %v2656
        %v2659 = vsinq.f32.pop %v2656
        %vm2660 = vweird.f32 %v424
        %v2661 = vadd.s32 %v2657, 3
        %v2662 = vand.u32 %v2661, 3
        %vm2663 = vcmp.lt.s32.totalorder %v2662, 2
        %vm2664 = vcmp.eq.s32.totalorder %v2662, 0
        %v2665 = vxor.u32 %v2659, 2147483648
        %v2666 = vsel %vm2664, %v2658, %v2665
        %vm2667 = vcmp.eq.s32.totalorder %v2662, 2
        %v2668 = vxor.u32 %v2658, 2147483648
        %v2669 = vsel %vm2667, %v2668, %v2659
        %v2670 = vsel %vm2663, %v2666, %v2669
        %v2671 = vsel %vm2660, nan, %v2670
        %v2672 = vand.u32 2147483647, %v505
        %vm2673 = vcmp.le.f32.partialorder %v2672, 0.7853982
        %vm2674 = vcmp.lt.s32.totalorder %v505, 0
        %v2675 = vand.u32 %v505, 2139095040
        %v2676 = vshrl.u32 %v2675, 23
        %v2677 = vsub.s32 %v2676, 127
        %v2678 = vand.u32 2147483647, %v505
        %v2679 = vand.u32 %v2678, 8388607
        %v2680 = vor.u32 %v2679, 8388608
        %v2681 = vsub.s32 0, %v2680
        %v2682 = vadd.s32 %v2677, 1
        %vm2683 = vcmp.gt.s32.totalorder %v2682, 0
        %v2684 = vsel %vm2683, %v2682, 0
        %v2685 = vshrl.u32 %v2684, 5
        %v2686 = vand.u32 %v2684, 31
        %v2687 = vsub.s32 32, %v2686
        %v2688 = vshrl.u32 683565275, %v2687
        %v2689 = vshll.u32 683565275, %v2686
        %v2690 = vshrl.u32 2475754826, %v2687
        %v2691 = vor.u32 %v2689, %v2690
        %v2692 = vshll.u32 2475754826, %v2686
        %v2693 = vshrl.u32 2131351028, %v2687
        %v2694 = vor.u32 %v2692, %v2693
        %v2695 = vshll.u32 2131351028, %v2686
        %v2696 = vshrl.u32 2102212464, %v2687
        %v2697 = vor.u32 %v2695, %v2696
        %v2698 = vshll.u32 2102212464, %v2686
        %v2699 = vshrl.u32 920167782, %v2687
        %v2700 = vor.u32 %v2698, %v2699
        %v2701 = vshll.u32 920167782, %v2686
        %v2702 = vshrl.u32 1326507024, %v2687
        %v2703 = vor.u32 %v2701, %v2702
        %vm2704 = vcmp.lt.s32.totalorder %v2685, 1
        %vm2705 = vcmp.lt.s32.totalorder %v2685, 2
        %vm2706 = vcmp.lt.s32.totalorder %v2685, 3
        %vm2707 = vcmp.lt.s32.totalorder %v2685, 4
        %v2708 = vsel %vm2704, %v2688, %v2691
        %v2709 = vsel %vm2707, %v2697, 2102212464
        %v2710 = vsel %vm2706, %v2694, %v2709
        %v2711 = vsel %vm2705, %v2708, %v2710
        %v2712 = vsel %vm2704, %v2691, %v2694
        %v2713 = vsel %vm2707, %v2700, 920167782
        %v2714 = vsel %vm2706, %v2697, %v2713
        %v2715 = vsel %vm2705, %v2712, %v2714
        %v2716 = vsel %vm2704, %v2694, %v2697
        %v2717 = vsel %vm2707, %v2703, 1326507024
        %v2718 = vsel %vm2706, %v2700, %v2717
        %v2719 = vsel %vm2705, %v2716, %v2718
        %v2720 = vshll.u32 %v2680, 8
        %v2721 = vmul.u32.u64.compose %v2720, %v2719
        %v2722 = vextract.low.u32 %v2721
        %v2723 = vextract.high.u32 %v2721
        %v2724 = vmul.u32.u64.compose %v2720, %v2715
        %v2725 = vextract.low.u32 %v2724
        %v2726 = vextract.high.u32 %v2724
        %v2727 = vmul.u32 %v2720, %v2711
        %v2728 = vadd.s32 %v2723, %v2725
        %vm2729 = vc.u32 %v2723, %v2725
        %v2730 = vadd.s32 %v2726, 1
        %v2731 = vsel %vm2729, %v2730, %v2726
        %v2732 = vadd.s32 %v2727, %v2731
        %v2733 = vadd.s32 %v2732, 536870912
        %v2734 = vshrl.u32 %v2733, 30
        %v2735 = vshll.u32 %v2734, 30
        %v2736 = vsub.s32 %v2732, %v2735
        %vm2737 = vcmp.lt.s32.totalorder %v2736, 0
        %v2738 = vsub.s32 0, %v2736
        %v2739 = vsel %vm2737, %v2738, %v2736
        %v2740 = vclz %v2739
        %v2741 = vsub.s32 %v2740, 2
        %vm2742 = vcmp.gt.s32.totalorder 0, %v2741
        %v2743 = vsel %vm2742, 0, %v2741
        %v2744 = vsub.s32 32, %v2743
        %v2745 = vshll.u32 %v2736, %v2743
        %v2746 = vshrl.u32 %v2728, %v2744
        %v2747 = vor.u32 %v2745, %v2746
        %v2748 = vsub.s32 4294967266, %v2743
        %v2749 = vadd.s32 %v2748, 127
        %v2750 = vshll.u32 %v2749, 23
        %v2751 = vor.u32 4788187, %v2750
        %v2752 = vand.u32 2147483647, %v2751
        %v2754 = vcvt.s32.f32 %v2747
        %v2755 = vmul.f32 %v2754, %v2752
        %v2756 = vxor.u32 %v2755, 2147483648
        %v2757 = vsel %vm2674, %v2756, %v2755
        %v2758 = vsub.s32 4, %v2734
        %v2759 = vsel %vm2674, %v2758, %v2734
        %v2760 = vsel %vm2673, %v505, %v2757
        %v2761 = vsel %vm2673, 0, %v2759
        %v2762 = vcosq.f32.pop %v2760
        %v2763 = vsinq.f32.pop %v2760
        %vm2764 = vweird.f32 %v505
        %v2765 = vadd.s32 %v2761, 3
        %v2766 = vand.u32 %v2765, 3
        %vm2767 = vcmp.lt.s32.totalorder %v2766, 2
        %vm2768 = vcmp.eq.s32.totalorder %v2766, 0
        %v2769 = vxor.u32 %v2763, 2147483648
        %v2770 = vsel %vm2768, %v2762, %v2769
        %vm2771 = vcmp.eq.s32.totalorder %v2766, 2
        %v2772 = vxor.u32 %v2762, 2147483648
        %v2773 = vsel %vm2771, %v2772, %v2763
        %v2774 = vsel %vm2767, %v2770, %v2773
        %v2775 = vsel %vm2764, nan, %v2774
        %v2776 = vand.u32 2147483647, %v507
        %vm2777 = vcmp.le.f32.partialorder %v2776, 0.7853982
        %vm2778 = vcmp.lt.s32.totalorder %v507, 0
        %v2779 = vand.u32 %v507, 2139095040
        %v2780 = vshrl.u32 %v2779, 23
        %v2781 = vsub.s32 %v2780, 127
        %v2782 = vand.u32 2147483647, %v507
        %v2783 = vand.u32 %v2782, 8388607
        %v2784 = vor.u32 %v2783, 8388608
        %v2785 = vsub.s32 0, %v2784
        %v2786 = vadd.s32 %v2781, 1
        %vm2787 = vcmp.gt.s32.totalorder %v2786, 0
        %v2788 = vsel %vm2787, %v2786, 0
        %v2789 = vshrl.u32 %v2788, 5
        %v2790 = vand.u32 %v2788, 31
        %v2791 = vsub.s32 32, %v2790
        %v2792 = vshrl.u32 683565275, %v2791
        %v2793 = vshll.u32 683565275, %v2790
        %v2794 = vshrl.u32 2475754826, %v2791
        %v2795 = vor.u32 %v2793, %v2794
        %v2796 = vshll.u32 2475754826, %v2790
        %v2797 = vshrl.u32 2131351028, %v2791
        %v2798 = vor.u32 %v2796, %v2797
        %v2799 = vshll.u32 2131351028, %v2790
        %v2800 = vshrl.u32 2102212464, %v2791
        %v2801 = vor.u32 %v2799, %v2800
        %v2802 = vshll.u32 2102212464, %v2790
        %v2803 = vshrl.u32 920167782, %v2791
        %v2804 = vor.u32 %v2802, %v2803
        %v2805 = vshll.u32 920167782, %v2790
        %v2806 = vshrl.u32 1326507024, %v2791
        %v2807 = vor.u32 %v2805, %v2806
        %vm2808 = vcmp.lt.s32.totalorder %v2789, 1
        %vm2809 = vcmp.lt.s32.totalorder %v2789, 2
        %vm2810 = vcmp.lt.s32.totalorder %v2789, 3
        %vm2811 = vcmp.lt.s32.totalorder %v2789, 4
        %v2812 = vsel %vm2808, %v2792, %v2795
        %v2813 = vsel %vm2811, %v2801, 2102212464
        %v2814 = vsel %vm2810, %v2798, %v2813
        %v2815 = vsel %vm2809, %v2812, %v2814
        %v2816 = vsel %vm2808, %v2795, %v2798
        %v2817 = vsel %vm2811, %v2804, 920167782
        %v2818 = vsel %vm2810, %v2801, %v2817
        %v2819 = vsel %vm2809, %v2816, %v2818
        %v2820 = vsel %vm2808, %v2798, %v2801
        %v2821 = vsel %vm2811, %v2807, 1326507024
        %v2822 = vsel %vm2810, %v2804, %v2821
        %v2823 = vsel %vm2809, %v2820, %v2822
        %v2824 = vshll.u32 %v2784, 8
        %v2825 = vmul.u32.u64.compose %v2824, %v2823
        %v2826 = vextract.low.u32 %v2825
        %v2827 = vextract.high.u32 %v2825
        %v2828 = vmul.u32.u64.compose %v2824, %v2819
        %v2829 = vextract.low.u32 %v2828
        %v2830 = vextract.high.u32 %v2828
        %v2831 = vmul.u32 %v2824, %v2815
        %v2832 = vadd.s32 %v2827, %v2829
        %vm2833 = vc.u32 %v2827, %v2829
        %v2834 = vadd.s32 %v2830, 1
        %v2835 = vsel %vm2833, %v2834, %v2830
        %v2836 = vadd.s32 %v2831, %v2835
        %v2837 = vadd.s32 %v2836, 536870912
        %v2838 = vshrl.u32 %v2837, 30
        %v2839 = vshll.u32 %v2838, 30
        %v2840 = vsub.s32 %v2836, %v2839
        %vm2841 = vcmp.lt.s32.totalorder %v2840, 0
        %v2842 = vsub.s32 0, %v2840
        %v2843 = vsel %vm2841, %v2842, %v2840
        %v2844 = vclz %v2843
        %v2845 = vsub.s32 %v2844, 2
        %vm2846 = vcmp.gt.s32.totalorder 0, %v2845
        %v2847 = vsel %vm2846, 0, %v2845
        %v2848 = vsub.s32 32, %v2847
        %v2849 = vshll.u32 %v2840, %v2847
        %v2850 = vshrl.u32 %v2832, %v2848
        %v2851 = vor.u32 %v2849, %v2850
        %v2852 = vsub.s32 4294967266, %v2847
        %v2853 = vadd.s32 %v2852, 127
        %v2854 = vshll.u32 %v2853, 23
        %v2855 = vor.u32 4788187, %v2854
        %v2856 = vand.u32 2147483647, %v2855
        %v2858 = vcvt.s32.f32 %v2851
        %v2859 = vmul.f32 %v2858, %v2856
        %v2860 = vxor.u32 %v2859, 2147483648
        %v2861 = vsel %vm2778, %v2860, %v2859
        %v2862 = vsub.s32 4, %v2838
        %v2863 = vsel %vm2778, %v2862, %v2838
        %v2864 = vsel %vm2777, %v507, %v2861
        %v2865 = vsel %vm2777, 0, %v2863
        %v2866 = vcosq.f32.pop %v2864
        %v2867 = vsinq.f32.pop %v2864
        %vm2868 = vweird.f32 %v507
        %v2869 = vadd.s32 %v2865, 3
        %v2870 = vand.u32 %v2869, 3
        %vm2871 = vcmp.lt.s32.totalorder %v2870, 2
        %vm2872 = vcmp.eq.s32.totalorder %v2870, 0
        %v2873 = vxor.u32 %v2867, 2147483648
        %v2874 = vsel %vm2872, %v2866, %v2873
        %vm2875 = vcmp.eq.s32.totalorder %v2870, 2
        %v2876 = vxor.u32 %v2866, 2147483648
        %v2877 = vsel %vm2875, %v2876, %v2867
        %v2878 = vsel %vm2871, %v2874, %v2877
        %v2879 = vsel %vm2868, nan, %v2878
        %v2880 = vand.u32 2147483647, %v588
        %vm2881 = vcmp.le.f32.partialorder %v2880, 0.7853982
        %vm2882 = vcmp.lt.s32.totalorder %v588, 0
        %v2883 = vand.u32 %v588, 2139095040
        %v2884 = vshrl.u32 %v2883, 23
        %v2885 = vsub.s32 %v2884, 127
        %v2886 = vand.u32 2147483647, %v588
        %v2887 = vand.u32 %v2886, 8388607
        %v2888 = vor.u32 %v2887, 8388608
        %v2889 = vsub.s32 0, %v2888
        %v2890 = vadd.s32 %v2885, 1
        %vm2891 = vcmp.gt.s32.totalorder %v2890, 0
        %v2892 = vsel %vm2891, %v2890, 0
        %v2893 = vshrl.u32 %v2892, 5
        %v2894 = vand.u32 %v2892, 31
        %v2895 = vsub.s32 32, %v2894
        %v2896 = vshrl.u32 683565275, %v2895
        %v2897 = vshll.u32 683565275, %v2894
        %v2898 = vshrl.u32 2475754826, %v2895
        %v2899 = vor.u32 %v2897, %v2898
        %v2900 = vshll.u32 2475754826, %v2894
        %v2901 = vshrl.u32 2131351028, %v2895
        %v2902 = vor.u32 %v2900, %v2901
        %v2903 = vshll.u32 2131351028, %v2894
        %v2904 = vshrl.u32 2102212464, %v2895
        %v2905 = vor.u32 %v2903, %v2904
        %v2906 = vshll.u32 2102212464, %v2894
        %v2907 = vshrl.u32 920167782, %v2895
        %v2908 = vor.u32 %v2906, %v2907
        %v2909 = vshll.u32 920167782, %v2894
        %v2910 = vshrl.u32 1326507024, %v2895
        %v2911 = vor.u32 %v2909, %v2910
        %vm2912 = vcmp.lt.s32.totalorder %v2893, 1
        %vm2913 = vcmp.lt.s32.totalorder %v2893, 2
        %vm2914 = vcmp.lt.s32.totalorder %v2893, 3
        %vm2915 = vcmp.lt.s32.totalorder %v2893, 4
        %v2916 = vsel %vm2912, %v2896, %v2899
        %v2917 = vsel %vm2915, %v2905, 2102212464
        %v2918 = vsel %vm2914, %v2902, %v2917
        %v2919 = vsel %vm2913, %v2916, %v2918
        %v2920 = vsel %vm2912, %v2899, %v2902
        %v2921 = vsel %vm2915, %v2908, 920167782
        %v2922 = vsel %vm2914, %v2905, %v2921
        %v2923 = vsel %vm2913, %v2920, %v2922
        %v2924 = vsel %vm2912, %v2902, %v2905
        %v2925 = vsel %vm2915, %v2911, 1326507024
        %v2926 = vsel %vm2914, %v2908, %v2925
        %v2927 = vsel %vm2913, %v2924, %v2926
        %v2928 = vshll.u32 %v2888, 8
        %v2929 = vmul.u32.u64.compose %v2928, %v2927
        %v2930 = vextract.low.u32 %v2929
        %v2931 = vextract.high.u32 %v2929
        %v2932 = vmul.u32.u64.compose %v2928, %v2923
        %v2933 = vextract.low.u32 %v2932
        %v2934 = vextract.high.u32 %v2932
        %v2935 = vmul.u32 %v2928, %v2919
        %v2936 = vadd.s32 %v2931, %v2933
        %vm2937 = vc.u32 %v2931, %v2933
        %v2938 = vadd.s32 %v2934, 1
        %v2939 = vsel %vm2937, %v2938, %v2934
        %v2940 = vadd.s32 %v2935, %v2939
        %v2941 = vadd.s32 %v2940, 536870912
        %v2942 = vshrl.u32 %v2941, 30
        %v2943 = vshll.u32 %v2942, 30
        %v2944 = vsub.s32 %v2940, %v2943
        %vm2945 = vcmp.lt.s32.totalorder %v2944, 0
        %v2946 = vsub.s32 0, %v2944
        %v2947 = vsel %vm2945, %v2946, %v2944
        %v2948 = vclz %v2947
        %v2949 = vsub.s32 %v2948, 2
        %vm2950 = vcmp.gt.s32.totalorder 0, %v2949
        %v2951 = vsel %vm2950, 0, %v2949
        %v2952 = vsub.s32 32, %v2951
        %v2953 = vshll.u32 %v2944, %v2951
        %v2954 = vshrl.u32 %v2936, %v2952
        %v2955 = vor.u32 %v2953, %v2954
        %v2956 = vsub.s32 4294967266, %v2951
        %v2957 = vadd.s32 %v2956, 127
        %v2958 = vshll.u32 %v2957, 23
        %v2959 = vor.u32 4788187, %v2958
        %v2960 = vand.u32 2147483647, %v2959
        %v2962 = vcvt.s32.f32 %v2955
        %v2963 = vmul.f32 %v2962, %v2960
        %v2964 = vxor.u32 %v2963, 2147483648
        %v2965 = vsel %vm2882, %v2964, %v2963
        %v2966 = vsub.s32 4, %v2942
        %v2967 = vsel %vm2882, %v2966, %v2942
        %v2968 = vsel %vm2881, %v588, %v2965
        %v2969 = vsel %vm2881, 0, %v2967
        %v2970 = vcosq.f32.pop %v2968
        %v2971 = vsinq.f32.pop %v2968
        %vm2972 = vweird.f32 %v588
        %v2973 = vadd.s32 %v2969, 3
        %v2974 = vand.u32 %v2973, 3
        %vm2975 = vcmp.lt.s32.totalorder %v2974, 2
        %vm2976 = vcmp.eq.s32.totalorder %v2974, 0
        %v2977 = vxor.u32 %v2971, 2147483648
        %v2978 = vsel %vm2976, %v2970, %v2977
        %vm2979 = vcmp.eq.s32.totalorder %v2974, 2
        %v2980 = vxor.u32 %v2970, 2147483648
        %v2981 = vsel %vm2979, %v2980, %v2971
        %v2982 = vsel %vm2975, %v2978, %v2981
        %v2983 = vsel %vm2972, nan, %v2982
        %v2984 = vand.u32 2147483647, %v590
        %vm2985 = vcmp.le.f32.partialorder %v2984, 0.7853982
        %vm2986 = vcmp.lt.s32.totalorder %v590, 0
        %v2987 = vand.u32 %v590, 2139095040
        %v2988 = vshrl.u32 %v2987, 23
        %v2989 = vsub.s32 %v2988, 127
        %v2990 = vand.u32 2147483647, %v590
        %v2991 = vand.u32 %v2990, 8388607
        %v2992 = vor.u32 %v2991, 8388608
        %v2993 = vsub.s32 0, %v2992
        %v2994 = vadd.s32 %v2989, 1
        %vm2995 = vcmp.gt.s32.totalorder %v2994, 0
        %v2996 = vsel %vm2995, %v2994, 0
        %v2997 = vshrl.u32 %v2996, 5
        %v2998 = vand.u32 %v2996, 31
        %v2999 = vsub.s32 32, %v2998
        %v3000 = vshrl.u32 683565275, %v2999
        %v3001 = vshll.u32 683565275, %v2998
        %v3002 = vshrl.u32 2475754826, %v2999
        %v3003 = vor.u32 %v3001, %v3002
        %v3004 = vshll.u32 2475754826, %v2998
        %v3005 = vshrl.u32 2131351028, %v2999
        %v3006 = vor.u32 %v3004, %v3005
        %v3007 = vshll.u32 2131351028, %v2998
        %v3008 = vshrl.u32 2102212464, %v2999
        %v3009 = vor.u32 %v3007, %v3008
        %v3010 = vshll.u32 2102212464, %v2998
        %v3011 = vshrl.u32 920167782, %v2999
        %v3012 = vor.u32 %v3010, %v3011
        %v3013 = vshll.u32 920167782, %v2998
        %v3014 = vshrl.u32 1326507024, %v2999
        %v3015 = vor.u32 %v3013, %v3014
        %vm3016 = vcmp.lt.s32.totalorder %v2997, 1
        %vm3017 = vcmp.lt.s32.totalorder %v2997, 2
        %vm3018 = vcmp.lt.s32.totalorder %v2997, 3
        %vm3019 = vcmp.lt.s32.totalorder %v2997, 4
        %v3020 = vsel %vm3016, %v3000, %v3003
        %v3021 = vsel %vm3019, %v3009, 2102212464
        %v3022 = vsel %vm3018, %v3006, %v3021
        %v3023 = vsel %vm3017, %v3020, %v3022
        %v3024 = vsel %vm3016, %v3003, %v3006
        %v3025 = vsel %vm3019, %v3012, 920167782
        %v3026 = vsel %vm3018, %v3009, %v3025
        %v3027 = vsel %vm3017, %v3024, %v3026
        %v3028 = vsel %vm3016, %v3006, %v3009
        %v3029 = vsel %vm3019, %v3015, 1326507024
        %v3030 = vsel %vm3018, %v3012, %v3029
        %v3031 = vsel %vm3017, %v3028, %v3030
        %v3032 = vshll.u32 %v2992, 8
        %v3033 = vmul.u32.u64.compose %v3032, %v3031
        %v3034 = vextract.low.u32 %v3033
        %v3035 = vextract.high.u32 %v3033
        %v3036 = vmul.u32.u64.compose %v3032, %v3027
        %v3037 = vextract.low.u32 %v3036
        %v3038 = vextract.high.u32 %v3036
        %v3039 = vmul.u32 %v3032, %v3023
        %v3040 = vadd.s32 %v3035, %v3037
        %vm3041 = vc.u32 %v3035, %v3037
        %v3042 = vadd.s32 %v3038, 1
        %v3043 = vsel %vm3041, %v3042, %v3038
        %v3044 = vadd.s32 %v3039, %v3043
        %v3045 = vadd.s32 %v3044, 536870912
        %v3046 = vshrl.u32 %v3045, 30
        %v3047 = vshll.u32 %v3046, 30
        %v3048 = vsub.s32 %v3044, %v3047
        %vm3049 = vcmp.lt.s32.totalorder %v3048, 0
        %v3050 = vsub.s32 0, %v3048
        %v3051 = vsel %vm3049, %v3050, %v3048
        %v3052 = vclz %v3051
        %v3053 = vsub.s32 %v3052, 2
        %vm3054 = vcmp.gt.s32.totalorder 0, %v3053
        %v3055 = vsel %vm3054, 0, %v3053
        %v3056 = vsub.s32 32, %v3055
        %v3057 = vshll.u32 %v3048, %v3055
        %v3058 = vshrl.u32 %v3040, %v3056
        %v3059 = vor.u32 %v3057, %v3058
        %v3060 = vsub.s32 4294967266, %v3055
        %v3061 = vadd.s32 %v3060, 127
        %v3062 = vshll.u32 %v3061, 23
        %v3063 = vor.u32 4788187, %v3062
        %v3064 = vand.u32 2147483647, %v3063
        %v3066 = vcvt.s32.f32 %v3059
        %v3067 = vmul.f32 %v3066, %v3064
        %v3068 = vxor.u32 %v3067, 2147483648
        %v3069 = vsel %vm2986, %v3068, %v3067
        %v3070 = vsub.s32 4, %v3046
        %v3071 = vsel %vm2986, %v3070, %v3046
        %v3072 = vsel %vm2985, %v590, %v3069
        %v3073 = vsel %vm2985, 0, %v3071
        %v3074 = vcosq.f32.pop %v3072
        %v3075 = vsinq.f32.pop %v3072
        %vm3076 = vweird.f32 %v590
        %v3077 = vadd.s32 %v3073, 3
        %v3078 = vand.u32 %v3077, 3
        %vm3079 = vcmp.lt.s32.totalorder %v3078, 2
        %vm3080 = vcmp.eq.s32.totalorder %v3078, 0
        %v3081 = vxor.u32 %v3075, 2147483648
        %v3082 = vsel %vm3080, %v3074, %v3081
        %vm3083 = vcmp.eq.s32.totalorder %v3078, 2
        %v3084 = vxor.u32 %v3074, 2147483648
        %v3085 = vsel %vm3083, %v3084, %v3075
        %v3086 = vsel %vm3079, %v3082, %v3085
        %v3087 = vsel %vm3076, nan, %v3086
        %v3088 = vld [vmem:[#allocation5] sm:$0xff]
        %v3089 = vld [vmem:[#allocation5 + $0x20] sm:$0xff]
        %v3090 = vld [vmem:[#allocation5 + $0x40] sm:$0xff]
        %v3091 = vld [vmem:[#allocation5 + $0x60] sm:$0xff]
        %v3092 = vld [vmem:[#allocation5 + $0x80] sm:$0xff]
        %v3093 = vld [vmem:[#allocation5 + $0xa0] sm:$0xff]
        %v3094 = vld [vmem:[#allocation5 + $0xc0] sm:$0xff]
        %v3095 = vld [vmem:[#allocation5 + $0xe0] sm:$0xff]
        %vm3096 = vcmask 171008
        %v3098 = vsel %vm3096, %v3088, 0
        %v3101 = vsel %vm3096, %v3089, 0
        %v3104 = vsel %vm3096, %v3090, 0
        %v3107 = vsel %vm3096, %v3091, 0
        %v3110 = vsel %vm3096, %v3092, 0
        %v3113 = vsel %vm3096, %v3093, 0
        %v3116 = vsel %vm3096, %v3094, 0
        %v3119 = vsel %vm3096, %v3095, 0
        %vm3121 = vcmask 1044480
        %v3123 = vsel %vm3121, %v2359, 0
        %v3126 = vsel %vm3121, %v2463, 0
        %v3129 = vsel %vm3121, %v2567, 0
        %v3132 = vsel %vm3121, %v2671, 0
        %v3135 = vsel %vm3121, %v2775, 0
        %v3138 = vsel %vm3121, %v2879, 0
        %v3141 = vsel %vm3121, %v2983, 0
        %v3144 = vsel %vm3121, %v3087, 0
        %3146 = vmatprep.subr.mxu0 %v799
        %3147 = vmatpush1.msra.mxu0 %v695
        %3148 = vmatprep.subr.mxu0 %v1631
        %3149 = vmatpush1.msra.mxu0 %v1527
        %3150 = vmatprep.subr.mxu0 %v3126
        %3151 = vmatpush1.msra.mxu0 %v3123
        %3152 = vmatprep.subr.mxu0 0.0
        %3153 = vmatpush1.msra.mxu0 0.0
        %3154 = vmatprep.subr.mxu0 0.0
        %3155 = vmatpush1.msra.mxu0 0.0
        %3156 = vmatprep.subr.mxu0 0.0
        %3157 = vmatpush1.msra.mxu0 0.0
        %3158 = vmatprep.subr.mxu0 0.0
        %3159 = vmatpush1.msra.mxu0 0.0
        %3160 = vmatprep.subr.mxu0 0.0
        %3161 = vmatpush1.msra.mxu0 0.0
        %3162 = vmatprep.subr.mxu0 0.0
        %3163 = vmatpush1.msra.mxu0 0.0
        %3164 = vmatprep.subr.mxu0 0.0
        %3165 = vmatpush1.msra.mxu0 0.0
        %3166 = vmatprep.subr.mxu0 0.0
        %3167 = vmatpush1.msra.mxu0 0.0
        %3168 = vmatprep.subr.mxu0 0.0
        %3169 = vmatpush1.msra.mxu0 0.0
        %3170 = vmatprep.subr.mxu0 0.0
        %3171 = vmatpush1.msra.mxu0 0.0
        %3172 = vmatprep.subr.mxu0 0.0
        %3173 = vmatpush1.msra.mxu0 0.0
        %3174 = vmatprep.subr.mxu0 0.0
        %3175 = vmatpush1.msra.mxu0 0.0
        %3176 = vmatprep.subr.mxu0 0.0
        %3177 = vmatpush1.msra.mxu0 0.0
        %3178 = vmatprep.subr.mxu0 0.0
        %3179 = vmatpush1.msra.mxu0 0.0
        %3180 = vmatprep.subr.mxu0 0.0
        %3181 = vmatpush1.msra.mxu0 0.0
        %3182 = vmatprep.subr.mxu0 0.0
        %3183 = vmatpush1.msra.mxu0 0.0
        %3184 = vmatprep.subr.mxu0 0.0
        %3185 = vmatpush1.msra.mxu0 0.0
        %3186 = vmatprep.subr.mxu0 0.0
        %3187 = vmatpush1.msra.mxu0 0.0
        %3188 = vmatprep.subr.mxu0 0.0
        %3189 = vmatpush1.msra.mxu0 0.0
        %3190 = vmatprep.subr.mxu0 0.0
        %3191 = vmatpush1.msra.mxu0 0.0
        %3192 = vmatprep.subr.mxu0 0.0
        %3193 = vmatpush1.msra.mxu0 0.0
        %3194 = vmatprep.subr.mxu0 0.0
        %3195 = vmatpush1.msra.mxu0 0.0
        %3196 = vmatprep.subr.mxu0 0.0
        %3197 = vmatpush1.msra.mxu0 0.0
        %3198 = vmatprep.subr.mxu0 0.0
        %3199 = vmatpush1.msra.mxu0 0.0
        %3200 = vmatprep.subr.mxu0 0.0
        %3201 = vmatpush1.msra.mxu0 0.0
        %3202 = vmatprep.subr.mxu0 0.0
        %3203 = vmatpush1.msra.mxu0 0.0
        %3204 = vmatprep.subr.mxu0 0.0
        %3205 = vmatpush1.msra.mxu0 0.0
        %3206 = vmatprep.subr.mxu0 0.0
        %3207 = vmatpush1.msra.mxu0 0.0
        %3208 = vmatprep.subr.mxu0 0.0
        %3209 = vmatpush1.msra.mxu0 0.0
        %3210 = vmatprep.mubr.f32.mxu0 0.0
        %3211 = vmatmul.mubr.f32.gmra.mrb[0].mxu0 %v3098
        %v3212 = vpop.f32.mrb[0].mxu0
        %v3213 = vadd.f32 0.0, %v3212
        %v3214 = vpop.f32.mrb[0].mxu0
        %v3215 = vadd.f32 0.0, %v3214
        %3216 = vmatprep.mubr.f32.mxu0 0.0
        %3217 = vmatmul.mubr.f32.gmra.mrb[0].mxu0 %v3101
        %v3218 = vpop.f32.mrb[0].mxu0
        %v3219 = vadd.f32 0.0, %v3218
        %v3220 = vpop.f32.mrb[0].mxu0
        %v3221 = vadd.f32 0.0, %v3220
        %3222 = vmatprep.mubr.f32.mxu0 0.0
        %3223 = vmatmul.mubr.f32.gmra.mrb[0].mxu0 %v3104
        %v3224 = vpop.f32.mrb[0].mxu0
        %v3225 = vadd.f32 0.0, %v3224
        %v3226 = vpop.f32.mrb[0].mxu0
        %v3227 = vadd.f32 0.0, %v3226
        %3228 = vmatprep.mubr.f32.mxu0 0.0
        %3229 = vmatmul.mubr.f32.gmra.mrb[0].mxu0 %v3107
        %v3230 = vpop.f32.mrb[0].mxu0
        %v3231 = vadd.f32 0.0, %v3230
        %v3232 = vpop.f32.mrb[0].mxu0
        %v3233 = vadd.f32 0.0, %v3232
        %3234 = vmatprep.mubr.f32.mxu0 0.0
        %3235 = vmatmul.mubr.f32.gmra.mrb[0].mxu0 %v3110
        %v3236 = vpop.f32.mrb[0].mxu0
        %v3237 = vadd.f32 0.0, %v3236
        %v3238 = vpop.f32.mrb[0].mxu0
        %v3239 = vadd.f32 0.0, %v3238
        %3240 = vmatprep.mubr.f32.mxu0 0.0
        %3241 = vmatmul.mubr.f32.gmra.mrb[0].mxu0 %v3113
        %v3242 = vpop.f32.mrb[0].mxu0
        %v3243 = vadd.f32 0.0, %v3242
        %v3244 = vpop.f32.mrb[0].mxu0
        %v3245 = vadd.f32 0.0, %v3244
        %3246 = vmatprep.mubr.f32.mxu0 0.0
        %3247 = vmatmul.mubr.f32.gmra.mrb[0].mxu0 %v3116
        %v3248 = vpop.f32.mrb[0].mxu0
        %v3249 = vadd.f32 0.0, %v3248
        %v3250 = vpop.f32.mrb[0].mxu0
        %v3251 = vadd.f32 0.0, %v3250
        %3252 = vmatprep.mubr.f32.mxu0 0.0
        %3253 = vmatmul.mubr.f32.gmra.mrb[0].mxu0 %v3119
        %v3254 = vpop.f32.mrb[0].mxu0
        %v3255 = vadd.f32 0.0, %v3254
        %v3256 = vpop.f32.mrb[0].mxu0
        %v3257 = vadd.f32 0.0, %v3256
        %3258 = vdwg.mxu0
        %3259 = vmatprep.subr.mxu0 %v1007
        %3260 = vmatpush1.msra.mxu0 %v903
        %3261 = vmatprep.subr.mxu0 %v1839
        %3262 = vmatpush1.msra.mxu0 %v1735
        %3263 = vmatprep.subr.mxu0 %v3132
        %3264 = vmatpush1.msra.mxu0 %v3129
        %3265 = vmatprep.subr.mxu0 0.0
        %3266 = vmatpush1.msra.mxu0 0.0
        %3267 = vmatprep.subr.mxu0 0.0
        %3268 = vmatpush1.msra.mxu0 0.0
        %3269 = vmatprep.subr.mxu0 0.0
        %3270 = vmatpush1.msra.mxu0 0.0
        %3271 = vmatprep.subr.mxu0 0.0
        %3272 = vmatpush1.msra.mxu0 0.0
        %3273 = vmatprep.subr.mxu0 0.0
        %3274 = vmatpush1.msra.mxu0 0.0
        %3275 = vmatprep.subr.mxu0 0.0
        %3276 = vmatpush1.msra.mxu0 0.0
        %3277 = vmatprep.subr.mxu0 0.0
        %3278 = vmatpush1.msra.mxu0 0.0
        %3279 = vmatprep.subr.mxu0 0.0
        %3280 = vmatpush1.msra.mxu0 0.0
        %3281 = vmatprep.subr.mxu0 0.0
        %3282 = vmatpush1.msra.mxu0 0.0
        %3283 = vmatprep.subr.mxu0 0.0
        %3284 = vmatpush1.msra.mxu0 0.0
        %3285 = vmatprep.subr.mxu0 0.0
        %3286 = vmatpush1.msra.mxu0 0.0
        %3287 = vmatprep.subr.mxu0 0.0
        %3288 = vmatpush1.msra.mxu0 0.0
        %3289 = vmatprep.subr.mxu0 0.0
        %3290 = vmatpush1.msra.mxu0 0.0
        %3291 = vmatprep.subr.mxu0 0.0
        %3292 = vmatpush1.msra.mxu0 0.0
        %3293 = vmatprep.subr.mxu0 0.0
        %3294 = vmatpush1.msra.mxu0 0.0
        %3295 = vmatprep.subr.mxu0 0.0
        %3296 = vmatpush1.msra.mxu0 0.0
        %3297 = vmatprep.subr.mxu0 0.0
        %3298 = vmatpush1.msra.mxu0 0.0
        %3299 = vmatprep.subr.mxu0 0.0
        %3300 = vmatpush1.msra.mxu0 0.0
        %3301 = vmatprep.subr.mxu0 0.0
        %3302 = vmatpush1.msra.mxu0 0.0
        %3303 = vmatprep.subr.mxu0 0.0
        %3304 = vmatpush1.msra.mxu0 0.0
        %3305 = vmatprep.subr.mxu0 0.0
        %3306 = vmatpush1.msra.mxu0 0.0
        %3307 = vmatprep.subr.mxu0 0.0
        %3308 = vmatpush1.msra.mxu0 0.0
        %3309 = vmatprep.subr.mxu0 0.0
        %3310 = vmatpush1.msra.mxu0 0.0
        %3311 = vmatprep.subr.mxu0 0.0
        %3312 = vmatpush1.msra.mxu0 0.0
        %3313 = vmatprep.subr.mxu0 0.0
        %3314 = vmatpush1.msra.mxu0 0.0
        %3315 = vmatprep.subr.mxu0 0.0
        %3316 = vmatpush1.msra.mxu0 0.0
        %3317 = vmatprep.subr.mxu0 0.0
        %3318 = vmatpush1.msra.mxu0 0.0
        %3319 = vmatprep.subr.mxu0 0.0
        %3320 = vmatpush1.msra.mxu0 0.0
        %3321 = vmatprep.subr.mxu0 0.0
        %3322 = vmatpush1.msra.mxu0 0.0
        %3323 = vmatprep.mubr.f32.mxu0 0.0
        %3324 = vmatmul.mubr.f32.gmra.mrb[0].mxu0 %v3098
        %v3325 = vpop.f32.mrb[0].mxu0
        %v3326 = vadd.f32 0.0, %v3325
        %v3327 = vpop.f32.mrb[0].mxu0
        %v3328 = vadd.f32 0.0, %v3327
        %3329 = vmatprep.mubr.f32.mxu0 0.0
        %3330 = vmatmul.mubr.f32.gmra.mrb[0].mxu0 %v3101
        %v3331 = vpop.f32.mrb[0].mxu0
        %v3332 = vadd.f32 0.0, %v3331
        %v3333 = vpop.f32.mrb[0].mxu0
        %v3334 = vadd.f32 0.0, %v3333
        %3335 = vmatprep.mubr.f32.mxu0 0.0
        %3336 = vmatmul.mubr.f32.gmra.mrb[0].mxu0 %v3104
        %v3337 = vpop.f32.mrb[0].mxu0
        %v3338 = vadd.f32 0.0, %v3337
        %v3339 = vpop.f32.mrb[0].mxu0
        %v3340 = vadd.f32 0.0, %v3339
        %3341 = vmatprep.mubr.f32.mxu0 0.0
        %3342 = vmatmul.mubr.f32.gmra.mrb[0].mxu0 %v3107
        %v3343 = vpop.f32.mrb[0].mxu0
        %v3344 = vadd.f32 0.0, %v3343
        %v3345 = vpop.f32.mrb[0].mxu0
        %v3346 = vadd.f32 0.0, %v3345
        %3347 = vmatprep.mubr.f32.mxu0 0.0
        %3348 = vmatmul.mubr.f32.gmra.mrb[0].mxu0 %v3110
        %v3349 = vpop.f32.mrb[0].mxu0
        %v3350 = vadd.f32 0.0, %v3349
        %v3351 = vpop.f32.mrb[0].mxu0
        %v3352 = vadd.f32 0.0, %v3351
        %3353 = vmatprep.mubr.f32.mxu0 0.0
        %3354 = vmatmul.mubr.f32.gmra.mrb[0].mxu0 %v3113
        %v3355 = vpop.f32.mrb[0].mxu0
        %v3356 = vadd.f32 0.0, %v3355
        %v3357 = vpop.f32.mrb[0].mxu0
        %v3358 = vadd.f32 0.0, %v3357
        %3359 = vmatprep.mubr.f32.mxu0 0.0
        %3360 = vmatmul.mubr.f32.gmra.mrb[0].mxu0 %v3116
        %v3361 = vpop.f32.mrb[0].mxu0
        %v3362 = vadd.f32 0.0, %v3361
        %v3363 = vpop.f32.mrb[0].mxu0
        %v3364 = vadd.f32 0.0, %v3363
        %3365 = vmatprep.mubr.f32.mxu0 0.0
        %3366 = vmatmul.mubr.f32.gmra.mrb[0].mxu0 %v3119
        %v3367 = vpop.f32.mrb[0].mxu0
        %v3368 = vadd.f32 0.0, %v3367
        %v3369 = vpop.f32.mrb[0].mxu0
        %v3370 = vadd.f32 0.0, %v3369
        %3371 = vdwg.mxu0
        %3372 = vmatprep.subr.mxu0 %v1215
        %3373 = vmatpush1.msra.mxu0 %v1111
        %3374 = vmatprep.subr.mxu0 %v2047
        %3375 = vmatpush1.msra.mxu0 %v1943
        %3376 = vmatprep.subr.mxu0 %v3138
        %3377 = vmatpush1.msra.mxu0 %v3135
        %3378 = vmatprep.subr.mxu0 0.0
        %3379 = vmatpush1.msra.mxu0 0.0
        %3380 = vmatprep.subr.mxu0 0.0
        %3381 = vmatpush1.msra.mxu0 0.0
        %3382 = vmatprep.subr.mxu0 0.0
        %3383 = vmatpush1.msra.mxu0 0.0
        %3384 = vmatprep.subr.mxu0 0.0
        %3385 = vmatpush1.msra.mxu0 0.0
        %3386 = vmatprep.subr.mxu0 0.0
        %3387 = vmatpush1.msra.mxu0 0.0
        %3388 = vmatprep.subr.mxu0 0.0
        %3389 = vmatpush1.msra.mxu0 0.0
        %3390 = vmatprep.subr.mxu0 0.0
        %3391 = vmatpush1.msra.mxu0 0.0
        %3392 = vmatprep.subr.mxu0 0.0
        %3393 = vmatpush1.msra.mxu0 0.0
        %3394 = vmatprep.subr.mxu0 0.0
        %3395 = vmatpush1.msra.mxu0 0.0
        %3396 = vmatprep.subr.mxu0 0.0
        %3397 = vmatpush1.msra.mxu0 0.0
        %3398 = vmatprep.subr.mxu0 0.0
        %3399 = vmatpush1.msra.mxu0 0.0
        %3400 = vmatprep.subr.mxu0 0.0
        %3401 = vmatpush1.msra.mxu0 0.0
        %3402 = vmatprep.subr.mxu0 0.0
        %3403 = vmatpush1.msra.mxu0 0.0
        %3404 = vmatprep.subr.mxu0 0.0
        %3405 = vmatpush1.msra.mxu0 0.0
        %3406 = vmatprep.subr.mxu0 0.0
        %3407 = vmatpush1.msra.mxu0 0.0
        %3408 = vmatprep.subr.mxu0 0.0
        %3409 = vmatpush1.msra.mxu0 0.0
        %3410 = vmatprep.subr.mxu0 0.0
        %3411 = vmatpush1.msra.mxu0 0.0
        %3412 = vmatprep.subr.mxu0 0.0
        %3413 = vmatpush1.msra.mxu0 0.0
        %3414 = vmatprep.subr.mxu0 0.0
        %3415 = vmatpush1.msra.mxu0 0.0
        %3416 = vmatprep.subr.mxu0 0.0
        %3417 = vmatpush1.msra.mxu0 0.0
        %3418 = vmatprep.subr.mxu0 0.0
        %3419 = vmatpush1.msra.mxu0 0.0
        %3420 = vmatprep.subr.mxu0 0.0
        %3421 = vmatpush1.msra.mxu0 0.0
        %3422 = vmatprep.subr.mxu0 0.0
        %3423 = vmatpush1.msra.mxu0 0.0
        %3424 = vmatprep.subr.mxu0 0.0
        %3425 = vmatpush1.msra.mxu0 0.0
        %3426 = vmatprep.subr.mxu0 0.0
        %3427 = vmatpush1.msra.mxu0 0.0
        %3428 = vmatprep.subr.mxu0 0.0
        %3429 = vmatpush1.msra.mxu0 0.0
        %3430 = vmatprep.subr.mxu0 0.0
        %3431 = vmatpush1.msra.mxu0 0.0
        %3432 = vmatprep.subr.mxu0 0.0
        %3433 = vmatpush1.msra.mxu0 0.0
        %3434 = vmatprep.subr.mxu0 0.0
        %3435 = vmatpush1.msra.mxu0 0.0
        %3436 = vmatprep.mubr.f32.mxu0 0.0
        %3437 = vmatmul.mubr.f32.gmra.mrb[0].mxu0 %v3098
        %v3438 = vpop.f32.mrb[0].mxu0
        %v3439 = vadd.f32 0.0, %v3438
        %v3440 = vpop.f32.mrb[0].mxu0
        %v3441 = vadd.f32 0.0, %v3440
        %3442 = vmatprep.mubr.f32.mxu0 0.0
        %3443 = vmatmul.mubr.f32.gmra.mrb[0].mxu0 %v3101
        %v3444 = vpop.f32.mrb[0].mxu0
        %v3445 = vadd.f32 0.0, %v3444
        %v3446 = vpop.f32.mrb[0].mxu0
        %v3447 = vadd.f32 0.0, %v3446
        %3448 = vmatprep.mubr.f32.mxu0 0.0
        %3449 = vmatmul.mubr.f32.gmra.mrb[0].mxu0 %v3104
        %v3450 = vpop.f32.mrb[0].mxu0
        %v3451 = vadd.f32 0.0, %v3450
        %v3452 = vpop.f32.mrb[0].mxu0
        %v3453 = vadd.f32 0.0, %v3452
        %3454 = vmatprep.mubr.f32.mxu0 0.0
        %3455 = vmatmul.mubr.f32.gmra.mrb[0].mxu0 %v3107
        %v3456 = vpop.f32.mrb[0].mxu0
        %v3457 = vadd.f32 0.0, %v3456
        %v3458 = vpop.f32.mrb[0].mxu0
        %v3459 = vadd.f32 0.0, %v3458
        %3460 = vmatprep.mubr.f32.mxu0 0.0
        %3461 = vmatmul.mubr.f32.gmra.mrb[0].mxu0 %v3110
        %v3462 = vpop.f32.mrb[0].mxu0
        %v3463 = vadd.f32 0.0, %v3462
        %v3464 = vpop.f32.mrb[0].mxu0
        %v3465 = vadd.f32 0.0, %v3464
        %3466 = vmatprep.mubr.f32.mxu0 0.0
        %3467 = vmatmul.mubr.f32.gmra.mrb[0].mxu0 %v3113
        %v3468 = vpop.f32.mrb[0].mxu0
        %v3469 = vadd.f32 0.0, %v3468
        %v3470 = vpop.f32.mrb[0].mxu0
        %v3471 = vadd.f32 0.0, %v3470
        %3472 = vmatprep.mubr.f32.mxu0 0.0
        %3473 = vmatmul.mubr.f32.gmra.mrb[0].mxu0 %v3116
        %v3474 = vpop.f32.mrb[0].mxu0
        %v3475 = vadd.f32 0.0, %v3474
        %v3476 = vpop.f32.mrb[0].mxu0
        %v3477 = vadd.f32 0.0, %v3476
        %3478 = vmatprep.mubr.f32.mxu0 0.0
        %3479 = vmatmul.mubr.f32.gmra.mrb[0].mxu0 %v3119
        %v3480 = vpop.f32.mrb[0].mxu0
        %v3481 = vadd.f32 0.0, %v3480
        %v3482 = vpop.f32.mrb[0].mxu0
        %v3483 = vadd.f32 0.0, %v3482
        %3484 = vdwg.mxu0
        %3485 = vmatprep.subr.mxu0 %v1423
        %3486 = vmatpush1.msra.mxu0 %v1319
        %3487 = vmatprep.subr.mxu0 %v2255
        %3488 = vmatpush1.msra.mxu0 %v2151
        %3489 = vmatprep.subr.mxu0 %v3144
        %3490 = vmatpush1.msra.mxu0 %v3141
        %3491 = vmatprep.subr.mxu0 0.0
        %3492 = vmatpush1.msra.mxu0 0.0
        %3493 = vmatprep.subr.mxu0 0.0
        %3494 = vmatpush1.msra.mxu0 0.0
        %3495 = vmatprep.subr.mxu0 0.0
        %3496 = vmatpush1.msra.mxu0 0.0
        %3497 = vmatprep.subr.mxu0 0.0
        %3498 = vmatpush1.msra.mxu0 0.0
        %3499 = vmatprep.subr.mxu0 0.0
        %3500 = vmatpush1.msra.mxu0 0.0
        %3501 = vmatprep.subr.mxu0 0.0
        %3502 = vmatpush1.msra.mxu0 0.0
        %3503 = vmatprep.subr.mxu0 0.0
        %3504 = vmatpush1.msra.mxu0 0.0
        %3505 = vmatprep.subr.mxu0 0.0
        %3506 = vmatpush1.msra.mxu0 0.0
        %3507 = vmatprep.subr.mxu0 0.0
        %3508 = vmatpush1.msra.mxu0 0.0
        %3509 = vmatprep.subr.mxu0 0.0
        %3510 = vmatpush1.msra.mxu0 0.0
        %3511 = vmatprep.subr.mxu0 0.0
        %3512 = vmatpush1.msra.mxu0 0.0
        %3513 = vmatprep.subr.mxu0 0.0
        %3514 = vmatpush1.msra.mxu0 0.0
        %3515 = vmatprep.subr.mxu0 0.0
        %3516 = vmatpush1.msra.mxu0 0.0
        %3517 = vmatprep.subr.mxu0 0.0
        %3518 = vmatpush1.msra.mxu0 0.0
        %3519 = vmatprep.subr.mxu0 0.0
        %3520 = vmatpush1.msra.mxu0 0.0
        %3521 = vmatprep.subr.mxu0 0.0
        %3522 = vmatpush1.msra.mxu0 0.0
        %3523 = vmatprep.subr.mxu0 0.0
        %3524 = vmatpush1.msra.mxu0 0.0
        %3525 = vmatprep.subr.mxu0 0.0
        %3526 = vmatpush1.msra.mxu0 0.0
        %3527 = vmatprep.subr.mxu0 0.0
        %3528 = vmatpush1.msra.mxu0 0.0
        %3529 = vmatprep.subr.mxu0 0.0
        %3530 = vmatpush1.msra.mxu0 0.0
        %3531 = vmatprep.subr.mxu0 0.0
        %3532 = vmatpush1.msra.mxu0 0.0
        %3533 = vmatprep.subr.mxu0 0.0
        %3534 = vmatpush1.msra.mxu0 0.0
        %3535 = vmatprep.subr.mxu0 0.0
        %3536 = vmatpush1.msra.mxu0 0.0
        %3537 = vmatprep.subr.mxu0 0.0
        %3538 = vmatpush1.msra.mxu0 0.0
        %3539 = vmatprep.subr.mxu0 0.0
        %3540 = vmatpush1.msra.mxu0 0.0
        %3541 = vmatprep.subr.mxu0 0.0
        %3542 = vmatpush1.msra.mxu0 0.0
        %3543 = vmatprep.subr.mxu0 0.0
        %3544 = vmatpush1.msra.mxu0 0.0
        %3545 = vmatprep.subr.mxu0 0.0
        %3546 = vmatpush1.msra.mxu0 0.0
        %3547 = vmatprep.subr.mxu0 0.0
        %3548 = vmatpush1.msra.mxu0 0.0
        %3549 = vmatprep.mubr.f32.mxu0 0.0
        %3550 = vmatmul.mubr.f32.gmra.mrb[0].mxu0 %v3098
        %v3551 = vpop.f32.mrb[0].mxu0
        %v3552 = vadd.f32 0.0, %v3551
        %v3553 = vpop.f32.mrb[0].mxu0
        %v3554 = vadd.f32 0.0, %v3553
        %3555 = vmatprep.mubr.f32.mxu0 0.0
        %3556 = vmatmul.mubr.f32.gmra.mrb[0].mxu0 %v3101
        %v3557 = vpop.f32.mrb[0].mxu0
        %v3558 = vadd.f32 0.0, %v3557
        %v3559 = vpop.f32.mrb[0].mxu0
        %v3560 = vadd.f32 0.0, %v3559
        %3561 = vmatprep.mubr.f32.mxu0 0.0
        %3562 = vmatmul.mubr.f32.gmra.mrb[0].mxu0 %v3104
        %v3563 = vpop.f32.mrb[0].mxu0
        %v3564 = vadd.f32 0.0, %v3563
        %v3565 = vpop.f32.mrb[0].mxu0
        %v3566 = vadd.f32 0.0, %v3565
        %3567 = vmatprep.mubr.f32.mxu0 0.0
        %3568 = vmatmul.mubr.f32.gmra.mrb[0].mxu0 %v3107
        %v3569 = vpop.f32.mrb[0].mxu0
        %v3570 = vadd.f32 0.0, %v3569
        %v3571 = vpop.f32.mrb[0].mxu0
        %v3572 = vadd.f32 0.0, %v3571
        %3573 = vmatprep.mubr.f32.mxu0 0.0
        %3574 = vmatmul.mubr.f32.gmra.mrb[0].mxu0 %v3110
        %v3575 = vpop.f32.mrb[0].mxu0
        %v3576 = vadd.f32 0.0, %v3575
        %v3577 = vpop.f32.mrb[0].mxu0
        %v3578 = vadd.f32 0.0, %v3577
        %3579 = vmatprep.mubr.f32.mxu0 0.0
        %3580 = vmatmul.mubr.f32.gmra.mrb[0].mxu0 %v3113
        %v3581 = vpop.f32.mrb[0].mxu0
        %v3582 = vadd.f32 0.0, %v3581
        %v3583 = vpop.f32.mrb[0].mxu0
        %v3584 = vadd.f32 0.0, %v3583
        %3585 = vmatprep.mubr.f32.mxu0 0.0
        %3586 = vmatmul.mubr.f32.gmra.mrb[0].mxu0 %v3116
        %v3587 = vpop.f32.mrb[0].mxu0
        %v3588 = vadd.f32 0.0, %v3587
        %v3589 = vpop.f32.mrb[0].mxu0
        %v3590 = vadd.f32 0.0, %v3589
        %3591 = vmatprep.mubr.f32.mxu0 0.0
        %3592 = vmatmul.mubr.f32.gmra.mrb[0].mxu0 %v3119
        %v3593 = vpop.f32.mrb[0].mxu0
        %v3594 = vadd.f32 0.0, %v3593
        %v3595 = vpop.f32.mrb[0].mxu0
        %v3596 = vadd.f32 0.0, %v3595
        %3597 = vdwg.mxu0
        %v3598 = vmax.f32 %v3213, 0.0
        %v3599 = vmax.f32 %v3215, 0.0
        %v3600 = vmax.f32 %v3326, 0.0
        %v3601 = vmax.f32 %v3328, 0.0
        %v3602 = vmax.f32 %v3439, 0.0
        %v3603 = vmax.f32 %v3441, 0.0
        %v3604 = vmax.f32 %v3552, 0.0
        %v3605 = vmax.f32 %v3554, 0.0
        %v3606 = vmax.f32 %v3219, 0.0
        %v3607 = vmax.f32 %v3221, 0.0
        %v3608 = vmax.f32 %v3332, 0.0
        %v3609 = vmax.f32 %v3334, 0.0
        %v3610 = vmax.f32 %v3445, 0.0
        %v3611 = vmax.f32 %v3447, 0.0
        %v3612 = vmax.f32 %v3558, 0.0
        %v3613 = vmax.f32 %v3560, 0.0
        %v3614 = vmax.f32 %v3225, 0.0
        %v3615 = vmax.f32 %v3227, 0.0
        %v3616 = vmax.f32 %v3338, 0.0
        %v3617 = vmax.f32 %v3340, 0.0
        %v3618 = vmax.f32 %v3451, 0.0
        %v3619 = vmax.f32 %v3453, 0.0
        %v3620 = vmax.f32 %v3564, 0.0
        %v3621 = vmax.f32 %v3566, 0.0
        %v3622 = vmax.f32 %v3231, 0.0
        %v3623 = vmax.f32 %v3233, 0.0
        %v3624 = vmax.f32 %v3344, 0.0
        %v3625 = vmax.f32 %v3346, 0.0
        %v3626 = vmax.f32 %v3457, 0.0
        %v3627 = vmax.f32 %v3459, 0.0
        %v3628 = vmax.f32 %v3570, 0.0
        %v3629 = vmax.f32 %v3572, 0.0
        %v3630 = vmax.f32 %v3237, 0.0
        %v3631 = vmax.f32 %v3239, 0.0
        %v3632 = vmax.f32 %v3350, 0.0
        %v3633 = vmax.f32 %v3352, 0.0
        %v3634 = vmax.f32 %v3463, 0.0
        %v3635 = vmax.f32 %v3465, 0.0
        %v3636 = vmax.f32 %v3576, 0.0
        %v3637 = vmax.f32 %v3578, 0.0
        %v3638 = vmax.f32 %v3243, 0.0
        %v3639 = vmax.f32 %v3245, 0.0
        %v3640 = vmax.f32 %v3356, 0.0
        %v3641 = vmax.f32 %v3358, 0.0
        %v3642 = vmax.f32 %v3469, 0.0
        %v3643 = vmax.f32 %v3471, 0.0
        %v3644 = vmax.f32 %v3582, 0.0
        %v3645 = vmax.f32 %v3584, 0.0
        %v3646 = vmax.f32 %v3249, 0.0
        %v3647 = vmax.f32 %v3251, 0.0
        %v3648 = vmax.f32 %v3362, 0.0
        %v3649 = vmax.f32 %v3364, 0.0
        %v3650 = vmax.f32 %v3475, 0.0
        %v3651 = vmax.f32 %v3477, 0.0
        %v3652 = vmax.f32 %v3588, 0.0
        %v3653 = vmax.f32 %v3590, 0.0
        %v3654 = vmax.f32 %v3255, 0.0
        %v3655 = vmax.f32 %v3257, 0.0
        %v3656 = vmax.f32 %v3368, 0.0
        %v3657 = vmax.f32 %v3370, 0.0
        %v3658 = vmax.f32 %v3481, 0.0
        %v3659 = vmax.f32 %v3483, 0.0
        %v3660 = vmax.f32 %v3594, 0.0
        %v3661 = vmax.f32 %v3596, 0.0
        %v3662 = vld [vmem:[#allocation5 + $0x8] sm:$0xff]
        %v3663 = vld [vmem:[#allocation5 + $0x28] sm:$0xff]
        %v3664 = vld [vmem:[#allocation5 + $0x48] sm:$0xff]
        %v3665 = vld [vmem:[#allocation5 + $0x68] sm:$0xff]
        %v3666 = vld [vmem:[#allocation5 + $0x88] sm:$0xff]
        %v3667 = vld [vmem:[#allocation5 + $0xa8] sm:$0xff]
        %v3668 = vld [vmem:[#allocation5 + $0xc8] sm:$0xff]
        %v3669 = vld [vmem:[#allocation5 + $0xe8] sm:$0xff]
        %v3670 = vld [vmem:[#allocation5 + $0x18] sm:$0xff]
        %v3671 = vld [vmem:[#allocation5 + $0x38] sm:$0xff]
        %v3672 = vld [vmem:[#allocation5 + $0x58] sm:$0xff]
        %v3673 = vld [vmem:[#allocation5 + $0x78] sm:$0xff]
        %v3674 = vld [vmem:[#allocation5 + $0x98] sm:$0xff]
        %v3675 = vld [vmem:[#allocation5 + $0xb8] sm:$0xff]
        %v3676 = vld [vmem:[#allocation5 + $0xd8] sm:$0xff]
        %v3677 = vld [vmem:[#allocation5 + $0xf8] sm:$0xff]
        %3679 = vset.pattern.permute.xlu0 0
        %3680 = vperm.xlu0 %3679, %v3670
        %v3681 = vpop.permute.xlu0 %3680
        %3684 = vset.pattern.permute.xlu0 0
        %3685 = vperm.xlu0 %3684, %v3671
        %v3686 = vpop.permute.xlu0 %3685
        %3689 = vset.pattern.permute.xlu0 0
        %3690 = vperm.xlu0 %3689, %v3672
        %v3691 = vpop.permute.xlu0 %3690
        %3694 = vset.pattern.permute.xlu0 0
        %3695 = vperm.xlu0 %3694, %v3673
        %v3696 = vpop.permute.xlu0 %3695
        %3699 = vset.pattern.permute.xlu0 0
        %3700 = vperm.xlu0 %3699, %v3674
        %v3701 = vpop.permute.xlu0 %3700
        %3704 = vset.pattern.permute.xlu0 0
        %3705 = vperm.xlu0 %3704, %v3675
        %v3706 = vpop.permute.xlu0 %3705
        %3709 = vset.pattern.permute.xlu0 0
        %3710 = vperm.xlu0 %3709, %v3676
        %v3711 = vpop.permute.xlu0 %3710
        %3714 = vset.pattern.permute.xlu0 0
        %3715 = vperm.xlu0 %3714, %v3677
        %v3716 = vpop.permute.xlu0 %3715
        %vm3718 = vcmask 523264
        %v3720 = vsel %vm3718, %v3662, 0
        %v3723 = vsel %vm3718, %v3663, 0
        %v3726 = vsel %vm3718, %v3664, 0
        %v3729 = vsel %vm3718, %v3665, 0
        %v3732 = vsel %vm3718, %v3666, 0
        %v3735 = vsel %vm3718, %v3667, 0
        %v3738 = vsel %vm3718, %v3668, 0
        %v3741 = vsel %vm3718, %v3669, 0
        %3743 = vmatprep.subr.mxu0 %v3599
        %3744 = vmatpush1.msra.mxu0 %v3598
        %3745 = vmatprep.subr.mxu0 %v3607
        %3746 = vmatpush1.msra.mxu0 %v3606
        %3747 = vmatprep.subr.mxu0 %v3615
        %3748 = vmatpush1.msra.mxu0 %v3614
        %3749 = vmatprep.subr.mxu0 %v3623
        %3750 = vmatpush1.msra.mxu0 %v3622
        %3751 = vmatprep.subr.mxu0 %v3631
        %3752 = vmatpush1.msra.mxu0 %v3630
        %3753 = vmatprep.subr.mxu0 %v3639
        %3754 = vmatpush1.msra.mxu0 %v3638
        %3755 = vmatprep.subr.mxu0 %v3647
        %3756 = vmatpush1.msra.mxu0 %v3646
        %3757 = vmatprep.subr.mxu0 %v3655
        %3758 = vmatpush1.msra.mxu0 %v3654
        %3759 = vmatprep.subr.mxu0 0.0
        %3760 = vmatpush1.msra.mxu0 0.0
        %3761 = vmatprep.subr.mxu0 0.0
        %3762 = vmatpush1.msra.mxu0 0.0
        %3763 = vmatprep.subr.mxu0 0.0
        %3764 = vmatpush1.msra.mxu0 0.0
        %3765 = vmatprep.subr.mxu0 0.0
        %3766 = vmatpush1.msra.mxu0 0.0
        %3767 = vmatprep.subr.mxu0 0.0
        %3768 = vmatpush1.msra.mxu0 0.0
        %3769 = vmatprep.subr.mxu0 0.0
        %3770 = vmatpush1.msra.mxu0 0.0
        %3771 = vmatprep.subr.mxu0 0.0
        %3772 = vmatpush1.msra.mxu0 0.0
        %3773 = vmatprep.subr.mxu0 0.0
        %3774 = vmatpush1.msra.mxu0 0.0
        %3775 = vmatprep.subr.mxu0 0.0
        %3776 = vmatpush1.msra.mxu0 0.0
        %3777 = vmatprep.subr.mxu0 0.0
        %3778 = vmatpush1.msra.mxu0 0.0
        %3779 = vmatprep.subr.mxu0 0.0
        %3780 = vmatpush1.msra.mxu0 0.0
        %3781 = vmatprep.subr.mxu0 0.0
        %3782 = vmatpush1.msra.mxu0 0.0
        %3783 = vmatprep.subr.mxu0 0.0
        %3784 = vmatpush1.msra.mxu0 0.0
        %3785 = vmatprep.subr.mxu0 0.0
        %3786 = vmatpush1.msra.mxu0 0.0
        %3787 = vmatprep.subr.mxu0 0.0
        %3788 = vmatpush1.msra.mxu0 0.0
        %3789 = vmatprep.subr.mxu0 0.0
        %3790 = vmatpush1.msra.mxu0 0.0
        %3791 = vmatprep.subr.mxu0 0.0
        %3792 = vmatpush1.msra.mxu0 0.0
        %3793 = vmatprep.subr.mxu0 0.0
        %3794 = vmatpush1.msra.mxu0 0.0
        %3795 = vmatprep.subr.mxu0 0.0
        %3796 = vmatpush1.msra.mxu0 0.0
        %3797 = vmatprep.subr.mxu0 0.0
        %3798 = vmatpush1.msra.mxu0 0.0
        %3799 = vmatprep.subr.mxu0 0.0
        %3800 = vmatpush1.msra.mxu0 0.0
        %3801 = vmatprep.subr.mxu0 0.0
        %3802 = vmatpush1.msra.mxu0 0.0
        %3803 = vmatprep.subr.mxu0 0.0
        %3804 = vmatpush1.msra.mxu0 0.0
        %3805 = vmatprep.subr.mxu0 0.0
        %3806 = vmatpush1.msra.mxu0 0.0
        %3807 = vmatprep.mubr.f32.mxu0 0.0
        %3808 = vmatmul.mubr.f32.gmra.mrb[0].mxu0 %v3720
        %v3809 = vpop.f32.mrb[0].mxu0
        %v3810 = vadd.f32 %v3681, %v3809
        %v3811 = vpop.f32.mrb[0].mxu0
        %v3812 = vadd.f32 %v3681, %v3811
        %3813 = vmatprep.mubr.f32.mxu0 0.0
        %3814 = vmatmul.mubr.f32.gmra.mrb[0].mxu0 %v3723
        %v3815 = vpop.f32.mrb[0].mxu0
        %v3816 = vadd.f32 %v3686, %v3815
        %v3817 = vpop.f32.mrb[0].mxu0
        %v3818 = vadd.f32 %v3686, %v3817
        %3819 = vmatprep.mubr.f32.mxu0 0.0
        %3820 = vmatmul.mubr.f32.gmra.mrb[0].mxu0 %v3726
        %v3821 = vpop.f32.mrb[0].mxu0
        %v3822 = vadd.f32 %v3691, %v3821
        %v3823 = vpop.f32.mrb[0].mxu0
        %v3824 = vadd.f32 %v3691, %v3823
        %3825 = vmatprep.mubr.f32.mxu0 0.0
        %3826 = vmatmul.mubr.f32.gmra.mrb[0].mxu0 %v3729
        %v3827 = vpop.f32.mrb[0].mxu0
        %v3828 = vadd.f32 %v3696, %v3827
        %v3829 = vpop.f32.mrb[0].mxu0
        %v3830 = vadd.f32 %v3696, %v3829
        %3831 = vmatprep.mubr.f32.mxu0 0.0
        %3832 = vmatmul.mubr.f32.gmra.mrb[0].mxu0 %v3732
        %v3833 = vpop.f32.mrb[0].mxu0
        %v3834 = vadd.f32 %v3701, %v3833
        %v3835 = vpop.f32.mrb[0].mxu0
        %v3836 = vadd.f32 %v3701, %v3835
        %3837 = vmatprep.mubr.f32.mxu0 0.0
        %3838 = vmatmul.mubr.f32.gmra.mrb[0].mxu0 %v3735
        %v3839 = vpop.f32.mrb[0].mxu0
        %v3840 = vadd.f32 %v3706, %v3839
        %v3841 = vpop.f32.mrb[0].mxu0
        %v3842 = vadd.f32 %v3706, %v3841
        %3843 = vmatprep.mubr.f32.mxu0 0.0
        %3844 = vmatmul.mubr.f32.gmra.mrb[0].mxu0 %v3738
        %v3845 = vpop.f32.mrb[0].mxu0
        %v3846 = vadd.f32 %v3711, %v3845
        %v3847 = vpop.f32.mrb[0].mxu0
        %v3848 = vadd.f32 %v3711, %v3847
        %3849 = vmatprep.mubr.f32.mxu0 0.0
        %3850 = vmatmul.mubr.f32.gmra.mrb[0].mxu0 %v3741
        %v3851 = vpop.f32.mrb[0].mxu0
        %v3852 = vadd.f32 %v3716, %v3851
        %v3853 = vpop.f32.mrb[0].mxu0
        %v3854 = vadd.f32 %v3716, %v3853
        %3855 = vdwg.mxu0
        %3856 = vmatprep.subr.mxu0 %v3601
        %3857 = vmatpush1.msra.mxu0 %v3600
        %3858 = vmatprep.subr.mxu0 %v3609
        %3859 = vmatpush1.msra.mxu0 %v3608
        %3860 = vmatprep.subr.mxu0 %v3617
        %3861 = vmatpush1.msra.mxu0 %v3616
        %3862 = vmatprep.subr.mxu0 %v3625
        %3863 = vmatpush1.msra.mxu0 %v3624
        %3864 = vmatprep.subr.mxu0 %v3633
        %3865 = vmatpush1.msra.mxu0 %v3632
        %3866 = vmatprep.subr.mxu0 %v3641
        %3867 = vmatpush1.msra.mxu0 %v3640
        %3868 = vmatprep.subr.mxu0 %v3649
        %3869 = vmatpush1.msra.mxu0 %v3648
        %3870 = vmatprep.subr.mxu0 %v3657
        %3871 = vmatpush1.msra.mxu0 %v3656
        %3872 = vmatprep.subr.mxu0 0.0
        %3873 = vmatpush1.msra.mxu0 0.0
        %3874 = vmatprep.subr.mxu0 0.0
        %3875 = vmatpush1.msra.mxu0 0.0
        %3876 = vmatprep.subr.mxu0 0.0
        %3877 = vmatpush1.msra.mxu0 0.0
        %3878 = vmatprep.subr.mxu0 0.0
        %3879 = vmatpush1.msra.mxu0 0.0
        %3880 = vmatprep.subr.mxu0 0.0
        %3881 = vmatpush1.msra.mxu0 0.0
        %3882 = vmatprep.subr.mxu0 0.0
        %3883 = vmatpush1.msra.mxu0 0.0
        %3884 = vmatprep.subr.mxu0 0.0
        %3885 = vmatpush1.msra.mxu0 0.0
        %3886 = vmatprep.subr.mxu0 0.0
        %3887 = vmatpush1.msra.mxu0 0.0
        %3888 = vmatprep.subr.mxu0 0.0
        %3889 = vmatpush1.msra.mxu0 0.0
        %3890 = vmatprep.subr.mxu0 0.0
        %3891 = vmatpush1.msra.mxu0 0.0
        %3892 = vmatprep.subr.mxu0 0.0
        %3893 = vmatpush1.msra.mxu0 0.0
        %3894 = vmatprep.subr.mxu0 0.0
        %3895 = vmatpush1.msra.mxu0 0.0
        %3896 = vmatprep.subr.mxu0 0.0
        %3897 = vmatpush1.msra.mxu0 0.0
        %3898 = vmatprep.subr.mxu0 0.0
        %3899 = vmatpush1.msra.mxu0 0.0
        %3900 = vmatprep.subr.mxu0 0.0
        %3901 = vmatpush1.msra.mxu0 0.0
        %3902 = vmatprep.subr.mxu0 0.0
        %3903 = vmatpush1.msra.mxu0 0.0
        %3904 = vmatprep.subr.mxu0 0.0
        %3905 = vmatpush1.msra.mxu0 0.0
        %3906 = vmatprep.subr.mxu0 0.0
        %3907 = vmatpush1.msra.mxu0 0.0
        %3908 = vmatprep.subr.mxu0 0.0
        %3909 = vmatpush1.msra.mxu0 0.0
        %3910 = vmatprep.subr.mxu0 0.0
        %3911 = vmatpush1.msra.mxu0 0.0
        %3912 = vmatprep.subr.mxu0 0.0
        %3913 = vmatpush1.msra.mxu0 0.0
        %3914 = vmatprep.subr.mxu0 0.0
        %3915 = vmatpush1.msra.mxu0 0.0
        %3916 = vmatprep.subr.mxu0 0.0
        %3917 = vmatpush1.msra.mxu0 0.0
        %3918 = vmatprep.subr.mxu0 0.0
        %3919 = vmatpush1.msra.mxu0 0.0
        %3920 = vmatprep.mubr.f32.mxu0 0.0
        %3921 = vmatmul.mubr.f32.gmra.mrb[0].mxu0 %v3720
        %v3922 = vpop.f32.mrb[0].mxu0
        %v3923 = vadd.f32 %v3681, %v3922
        %v3924 = vpop.f32.mrb[0].mxu0
        %v3925 = vadd.f32 %v3681, %v3924
        %3926 = vmatprep.mubr.f32.mxu0 0.0
        %3927 = vmatmul.mubr.f32.gmra.mrb[0].mxu0 %v3723
        %v3928 = vpop.f32.mrb[0].mxu0
        %v3929 = vadd.f32 %v3686, %v3928
        %v3930 = vpop.f32.mrb[0].mxu0
        %v3931 = vadd.f32 %v3686, %v3930
        %3932 = vmatprep.mubr.f32.mxu0 0.0
        %3933 = vmatmul.mubr.f32.gmra.mrb[0].mxu0 %v3726
        %v3934 = vpop.f32.mrb[0].mxu0
        %v3935 = vadd.f32 %v3691, %v3934
        %v3936 = vpop.f32.mrb[0].mxu0
        %v3937 = vadd.f32 %v3691, %v3936
        %3938 = vmatprep.mubr.f32.mxu0 0.0
        %3939 = vmatmul.mubr.f32.gmra.mrb[0].mxu0 %v3729
        %v3940 = vpop.f32.mrb[0].mxu0
        %v3941 = vadd.f32 %v3696, %v3940
        %v3942 = vpop.f32.mrb[0].mxu0
        %v3943 = vadd.f32 %v3696, %v3942
        %3944 = vmatprep.mubr.f32.mxu0 0.0
        %3945 = vmatmul.mubr.f32.gmra.mrb[0].mxu0 %v3732
        %v3946 = vpop.f32.mrb[0].mxu0
        %v3947 = vadd.f32 %v3701, %v3946
        %v3948 = vpop.f32.mrb[0].mxu0
        %v3949 = vadd.f32 %v3701, %v3948
        %3950 = vmatprep.mubr.f32.mxu0 0.0
        %3951 = vmatmul.mubr.f32.gmra.mrb[0].mxu0 %v3735
        %v3952 = vpop.f32.mrb[0].mxu0
        %v3953 = vadd.f32 %v3706, %v3952
        %v3954 = vpop.f32.mrb[0].mxu0
        %v3955 = vadd.f32 %v3706, %v3954
        %3956 = vmatprep.mubr.f32.mxu0 0.0
        %3957 = vmatmul.mubr.f32.gmra.mrb[0].mxu0 %v3738
        %v3958 = vpop.f32.mrb[0].mxu0
        %v3959 = vadd.f32 %v3711, %v3958
        %v3960 = vpop.f32.mrb[0].mxu0
        %v3961 = vadd.f32 %v3711, %v3960
        %3962 = vmatprep.mubr.f32.mxu0 0.0
        %3963 = vmatmul.mubr.f32.gmra.mrb[0].mxu0 %v3741
        %v3964 = vpop.f32.mrb[0].mxu0
        %v3965 = vadd.f32 %v3716, %v3964
        %v3966 = vpop.f32.mrb[0].mxu0
        %v3967 = vadd.f32 %v3716, %v3966
        %3968 = vdwg.mxu0
        %3969 = vmatprep.subr.mxu0 %v3603
        %3970 = vmatpush1.msra.mxu0 %v3602
        %3971 = vmatprep.subr.mxu0 %v3611
        %3972 = vmatpush1.msra.mxu0 %v3610
        %3973 = vmatprep.subr.mxu0 %v3619
        %3974 = vmatpush1.msra.mxu0 %v3618
        %3975 = vmatprep.subr.mxu0 %v3627
        %3976 = vmatpush1.msra.mxu0 %v3626
        %3977 = vmatprep.subr.mxu0 %v3635
        %3978 = vmatpush1.msra.mxu0 %v3634
        %3979 = vmatprep.subr.mxu0 %v3643
        %3980 = vmatpush1.msra.mxu0 %v3642
        %3981 = vmatprep.subr.mxu0 %v3651
        %3982 = vmatpush1.msra.mxu0 %v3650
        %3983 = vmatprep.subr.mxu0 %v3659
        %3984 = vmatpush1.msra.mxu0 %v3658
        %3985 = vmatprep.subr.mxu0 0.0
        %3986 = vmatpush1.msra.mxu0 0.0
        %3987 = vmatprep.subr.mxu0 0.0
        %3988 = vmatpush1.msra.mxu0 0.0
        %3989 = vmatprep.subr.mxu0 0.0
        %3990 = vmatpush1.msra.mxu0 0.0
        %3991 = vmatprep.subr.mxu0 0.0
        %3992 = vmatpush1.msra.mxu0 0.0
        %3993 = vmatprep.subr.mxu0 0.0
        %3994 = vmatpush1.msra.mxu0 0.0
        %3995 = vmatprep.subr.mxu0 0.0
        %3996 = vmatpush1.msra.mxu0 0.0
        %3997 = vmatprep.subr.mxu0 0.0
        %3998 = vmatpush1.msra.mxu0 0.0
        %3999 = vmatprep.subr.mxu0 0.0
        %4000 = vmatpush1.msra.mxu0 0.0
        %4001 = vmatprep.subr.mxu0 0.0
        %4002 = vmatpush1.msra.mxu0 0.0
        %4003 = vmatprep.subr.mxu0 0.0
        %4004 = vmatpush1.msra.mxu0 0.0
        %4005 = vmatprep.subr.mxu0 0.0
        %4006 = vmatpush1.msra.mxu0 0.0
        %4007 = vmatprep.subr.mxu0 0.0
        %4008 = vmatpush1.msra.mxu0 0.0
        %4009 = vmatprep.subr.mxu0 0.0
        %4010 = vmatpush1.msra.mxu0 0.0
        %4011 = vmatprep.subr.mxu0 0.0
        %4012 = vmatpush1.msra.mxu0 0.0
        %4013 = vmatprep.subr.mxu0 0.0
        %4014 = vmatpush1.msra.mxu0 0.0
        %4015 = vmatprep.subr.mxu0 0.0
        %4016 = vmatpush1.msra.mxu0 0.0
        %4017 = vmatprep.subr.mxu0 0.0
        %4018 = vmatpush1.msra.mxu0 0.0
        %4019 = vmatprep.subr.mxu0 0.0
        %4020 = vmatpush1.msra.mxu0 0.0
        %4021 = vmatprep.subr.mxu0 0.0
        %4022 = vmatpush1.msra.mxu0 0.0
        %4023 = vmatprep.subr.mxu0 0.0
        %4024 = vmatpush1.msra.mxu0 0.0
        %4025 = vmatprep.subr.mxu0 0.0
        %4026 = vmatpush1.msra.mxu0 0.0
        %4027 = vmatprep.subr.mxu0 0.0
        %4028 = vmatpush1.msra.mxu0 0.0
        %4029 = vmatprep.subr.mxu0 0.0
        %4030 = vmatpush1.msra.mxu0 0.0
        %4031 = vmatprep.subr.mxu0 0.0
        %4032 = vmatpush1.msra.mxu0 0.0
        %4033 = vmatprep.mubr.f32.mxu0 0.0
        %4034 = vmatmul.mubr.f32.gmra.mrb[0].mxu0 %v3720
        %v4035 = vpop.f32.mrb[0].mxu0
        %v4036 = vadd.f32 %v3681, %v4035
        %v4037 = vpop.f32.mrb[0].mxu0
        %v4038 = vadd.f32 %v3681, %v4037
        %4039 = vmatprep.mubr.f32.mxu0 0.0
        %4040 = vmatmul.mubr.f32.gmra.mrb[0].mxu0 %v3723
        %v4041 = vpop.f32.mrb[0].mxu0
        %v4042 = vadd.f32 %v3686, %v4041
        %v4043 = vpop.f32.mrb[0].mxu0
        %v4044 = vadd.f32 %v3686, %v4043
        %4045 = vmatprep.mubr.f32.mxu0 0.0
        %4046 = vmatmul.mubr.f32.gmra.mrb[0].mxu0 %v3726
        %v4047 = vpop.f32.mrb[0].mxu0
        %v4048 = vadd.f32 %v3691, %v4047
        %v4049 = vpop.f32.mrb[0].mxu0
        %v4050 = vadd.f32 %v3691, %v4049
        %4051 = vmatprep.mubr.f32.mxu0 0.0
        %4052 = vmatmul.mubr.f32.gmra.mrb[0].mxu0 %v3729
        %v4053 = vpop.f32.mrb[0].mxu0
        %v4054 = vadd.f32 %v3696, %v4053
        %v4055 = vpop.f32.mrb[0].mxu0
        %v4056 = vadd.f32 %v3696, %v4055
        %4057 = vmatprep.mubr.f32.mxu0 0.0
        %4058 = vmatmul.mubr.f32.gmra.mrb[0].mxu0 %v3732
        %v4059 = vpop.f32.mrb[0].mxu0
        %v4060 = vadd.f32 %v3701, %v4059
        %v4061 = vpop.f32.mrb[0].mxu0
        %v4062 = vadd.f32 %v3701, %v4061
        %4063 = vmatprep.mubr.f32.mxu0 0.0
        %4064 = vmatmul.mubr.f32.gmra.mrb[0].mxu0 %v3735
        %v4065 = vpop.f32.mrb[0].mxu0
        %v4066 = vadd.f32 %v3706, %v4065
        %v4067 = vpop.f32.mrb[0].mxu0
        %v4068 = vadd.f32 %v3706, %v4067
        %4069 = vmatprep.mubr.f32.mxu0 0.0
        %4070 = vmatmul.mubr.f32.gmra.mrb[0].mxu0 %v3738
        %v4071 = vpop.f32.mrb[0].mxu0
        %v4072 = vadd.f32 %v3711, %v4071
        %v4073 = vpop.f32.mrb[0].mxu0
        %v4074 = vadd.f32 %v3711, %v4073
        %4075 = vmatprep.mubr.f32.mxu0 0.0
        %4076 = vmatmul.mubr.f32.gmra.mrb[0].mxu0 %v3741
        %v4077 = vpop.f32.mrb[0].mxu0
        %v4078 = vadd.f32 %v3716, %v4077
        %v4079 = vpop.f32.mrb[0].mxu0
        %v4080 = vadd.f32 %v3716, %v4079
        %4081 = vdwg.mxu0
        %4082 = vmatprep.subr.mxu0 %v3605
        %4083 = vmatpush1.msra.mxu0 %v3604
        %4084 = vmatprep.subr.mxu0 %v3613
        %4085 = vmatpush1.msra.mxu0 %v3612
        %4086 = vmatprep.subr.mxu0 %v3621
        %4087 = vmatpush1.msra.mxu0 %v3620
        %4088 = vmatprep.subr.mxu0 %v3629
        %4089 = vmatpush1.msra.mxu0 %v3628
        %4090 = vmatprep.subr.mxu0 %v3637
        %4091 = vmatpush1.msra.mxu0 %v3636
        %4092 = vmatprep.subr.mxu0 %v3645
        %4093 = vmatpush1.msra.mxu0 %v3644
        %4094 = vmatprep.subr.mxu0 %v3653
        %4095 = vmatpush1.msra.mxu0 %v3652
        %4096 = vmatprep.subr.mxu0 %v3661
        %4097 = vmatpush1.msra.mxu0 %v3660
        %4098 = vmatprep.subr.mxu0 0.0
        %4099 = vmatpush1.msra.mxu0 0.0
        %4100 = vmatprep.subr.mxu0 0.0
        %4101 = vmatpush1.msra.mxu0 0.0
        %4102 = vmatprep.subr.mxu0 0.0
        %4103 = vmatpush1.msra.mxu0 0.0
        %4104 = vmatprep.subr.mxu0 0.0
        %4105 = vmatpush1.msra.mxu0 0.0
        %4106 = vmatprep.subr.mxu0 0.0
        %4107 = vmatpush1.msra.mxu0 0.0
        %4108 = vmatprep.subr.mxu0 0.0
        %4109 = vmatpush1.msra.mxu0 0.0
        %4110 = vmatprep.subr.mxu0 0.0
        %4111 = vmatpush1.msra.mxu0 0.0
        %4112 = vmatprep.subr.mxu0 0.0
        %4113 = vmatpush1.msra.mxu0 0.0
        %4114 = vmatprep.subr.mxu0 0.0
        %4115 = vmatpush1.msra.mxu0 0.0
        %4116 = vmatprep.subr.mxu0 0.0
        %4117 = vmatpush1.msra.mxu0 0.0
        %4118 = vmatprep.subr.mxu0 0.0
        %4119 = vmatpush1.msra.mxu0 0.0
        %4120 = vmatprep.subr.mxu0 0.0
        %4121 = vmatpush1.msra.mxu0 0.0
        %4122 = vmatprep.subr.mxu0 0.0
        %4123 = vmatpush1.msra.mxu0 0.0
        %4124 = vmatprep.subr.mxu0 0.0
        %4125 = vmatpush1.msra.mxu0 0.0
        %4126 = vmatprep.subr.mxu0 0.0
        %4127 = vmatpush1.msra.mxu0 0.0
        %4128 = vmatprep.subr.mxu0 0.0
        %4129 = vmatpush1.msra.mxu0 0.0
        %4130 = vmatprep.subr.mxu0 0.0
        %4131 = vmatpush1.msra.mxu0 0.0
        %4132 = vmatprep.subr.mxu0 0.0
        %4133 = vmatpush1.msra.mxu0 0.0
        %4134 = vmatprep.subr.mxu0 0.0
        %4135 = vmatpush1.msra.mxu0 0.0
        %4136 = vmatprep.subr.mxu0 0.0
        %4137 = vmatpush1.msra.mxu0 0.0
        %4138 = vmatprep.subr.mxu0 0.0
        %4139 = vmatpush1.msra.mxu0 0.0
        %4140 = vmatprep.subr.mxu0 0.0
        %4141 = vmatpush1.msra.mxu0 0.0
        %4142 = vmatprep.subr.mxu0 0.0
        %4143 = vmatpush1.msra.mxu0 0.0
        %4144 = vmatprep.subr.mxu0 0.0
        %4145 = vmatpush1.msra.mxu0 0.0
        %4146 = vmatprep.mubr.f32.mxu0 0.0
        %4147 = vmatmul.mubr.f32.gmra.mrb[0].mxu0 %v3720
        %v4148 = vpop.f32.mrb[0].mxu0
        %v4149 = vadd.f32 %v3681, %v4148
        %v4150 = vpop.f32.mrb[0].mxu0
        %v4151 = vadd.f32 %v3681, %v4150
        %4152 = vmatprep.mubr.f32.mxu0 0.0
        %4153 = vmatmul.mubr.f32.gmra.mrb[0].mxu0 %v3723
        %v4154 = vpop.f32.mrb[0].mxu0
        %v4155 = vadd.f32 %v3686, %v4154
        %v4156 = vpop.f32.mrb[0].mxu0
        %v4157 = vadd.f32 %v3686, %v4156
        %4158 = vmatprep.mubr.f32.mxu0 0.0
        %4159 = vmatmul.mubr.f32.gmra.mrb[0].mxu0 %v3726
        %v4160 = vpop.f32.mrb[0].mxu0
        %v4161 = vadd.f32 %v3691, %v4160
        %v4162 = vpop.f32.mrb[0].mxu0
        %v4163 = vadd.f32 %v3691, %v4162
        %4164 = vmatprep.mubr.f32.mxu0 0.0
        %4165 = vmatmul.mubr.f32.gmra.mrb[0].mxu0 %v3729
        %v4166 = vpop.f32.mrb[0].mxu0
        %v4167 = vadd.f32 %v3696, %v4166
        %v4168 = vpop.f32.mrb[0].mxu0
        %v4169 = vadd.f32 %v3696, %v4168
        %4170 = vmatprep.mubr.f32.mxu0 0.0
        %4171 = vmatmul.mubr.f32.gmra.mrb[0].mxu0 %v3732
        %v4172 = vpop.f32.mrb[0].mxu0
        %v4173 = vadd.f32 %v3701, %v4172
        %v4174 = vpop.f32.mrb[0].mxu0
        %v4175 = vadd.f32 %v3701, %v4174
        %4176 = vmatprep.mubr.f32.mxu0 0.0
        %4177 = vmatmul.mubr.f32.gmra.mrb[0].mxu0 %v3735
        %v4178 = vpop.f32.mrb[0].mxu0
        %v4179 = vadd.f32 %v3706, %v4178
        %v4180 = vpop.f32.mrb[0].mxu0
        %v4181 = vadd.f32 %v3706, %v4180
        %4182 = vmatprep.mubr.f32.mxu0 0.0
        %4183 = vmatmul.mubr.f32.gmra.mrb[0].mxu0 %v3738
        %v4184 = vpop.f32.mrb[0].mxu0
        %v4185 = vadd.f32 %v3711, %v4184
        %v4186 = vpop.f32.mrb[0].mxu0
        %v4187 = vadd.f32 %v3711, %v4186
        %4188 = vmatprep.mubr.f32.mxu0 0.0
        %4189 = vmatmul.mubr.f32.gmra.mrb[0].mxu0 %v3741
        %v4190 = vpop.f32.mrb[0].mxu0
        %v4191 = vadd.f32 %v3716, %v4190
        %v4192 = vpop.f32.mrb[0].mxu0
        %v4193 = vadd.f32 %v3716, %v4192
        %4194 = vdwg.mxu0
        %v4195 = vmax.f32 %v3810, 0.0
        %v4196 = vmax.f32 %v3812, 0.0
        %v4197 = vmax.f32 %v3923, 0.0
        %v4198 = vmax.f32 %v3925, 0.0
        %v4199 = vmax.f32 %v4036, 0.0
        %v4200 = vmax.f32 %v4038, 0.0
        %v4201 = vmax.f32 %v4149, 0.0
        %v4202 = vmax.f32 %v4151, 0.0
        %v4203 = vmax.f32 %v3816, 0.0
        %v4204 = vmax.f32 %v3818, 0.0
        %v4205 = vmax.f32 %v3929, 0.0
        %v4206 = vmax.f32 %v3931, 0.0
        %v4207 = vmax.f32 %v4042, 0.0
        %v4208 = vmax.f32 %v4044, 0.0
        %v4209 = vmax.f32 %v4155, 0.0
        %v4210 = vmax.f32 %v4157, 0.0
        %v4211 = vmax.f32 %v3822, 0.0
        %v4212 = vmax.f32 %v3824, 0.0
        %v4213 = vmax.f32 %v3935, 0.0
        %v4214 = vmax.f32 %v3937, 0.0
        %v4215 = vmax.f32 %v4048, 0.0
        %v4216 = vmax.f32 %v4050, 0.0
        %v4217 = vmax.f32 %v4161, 0.0
        %v4218 = vmax.f32 %v4163, 0.0
        %v4219 = vmax.f32 %v3828, 0.0
        %v4220 = vmax.f32 %v3830, 0.0
        %v4221 = vmax.f32 %v3941, 0.0
        %v4222 = vmax.f32 %v3943, 0.0
        %v4223 = vmax.f32 %v4054, 0.0
        %v4224 = vmax.f32 %v4056, 0.0
        %v4225 = vmax.f32 %v4167, 0.0
        %v4226 = vmax.f32 %v4169, 0.0
        %v4227 = vmax.f32 %v3834, 0.0
        %v4228 = vmax.f32 %v3836, 0.0
        %v4229 = vmax.f32 %v3947, 0.0
        %v4230 = vmax.f32 %v3949, 0.0
        %v4231 = vmax.f32 %v4060, 0.0
        %v4232 = vmax.f32 %v4062, 0.0
        %v4233 = vmax.f32 %v4173, 0.0
        %v4234 = vmax.f32 %v4175, 0.0
        %v4235 = vmax.f32 %v3840, 0.0
        %v4236 = vmax.f32 %v3842, 0.0
        %v4237 = vmax.f32 %v3953, 0.0
        %v4238 = vmax.f32 %v3955, 0.0
        %v4239 = vmax.f32 %v4066, 0.0
        %v4240 = vmax.f32 %v4068, 0.0
        %v4241 = vmax.f32 %v4179, 0.0
        %v4242 = vmax.f32 %v4181, 0.0
        %v4243 = vmax.f32 %v3846, 0.0
        %v4244 = vmax.f32 %v3848, 0.0
        %v4245 = vmax.f32 %v3959, 0.0
        %v4246 = vmax.f32 %v3961, 0.0
        %v4247 = vmax.f32 %v4072, 0.0
        %v4248 = vmax.f32 %v4074, 0.0
        %v4249 = vmax.f32 %v4185, 0.0
        %v4250 = vmax.f32 %v4187, 0.0
        %v4251 = vmax.f32 %v3852, 0.0
        %v4252 = vmax.f32 %v3854, 0.0
        %v4253 = vmax.f32 %v3965, 0.0
        %v4254 = vmax.f32 %v3967, 0.0
        %v4255 = vmax.f32 %v4078, 0.0
        %v4256 = vmax.f32 %v4080, 0.0
        %v4257 = vmax.f32 %v4191, 0.0
        %v4258 = vmax.f32 %v4193, 0.0
        %v4259 = vld [vmem:[#allocation5 + $0x10] sm:$0xff]
        %v4260 = vld [vmem:[#allocation5 + $0x30] sm:$0xff]
        %v4261 = vld [vmem:[#allocation5 + $0x50] sm:$0xff]
        %v4262 = vld [vmem:[#allocation5 + $0x70] sm:$0xff]
        %v4263 = vld [vmem:[#allocation5 + $0x90] sm:$0xff]
        %v4264 = vld [vmem:[#allocation5 + $0xb0] sm:$0xff]
        %v4265 = vld [vmem:[#allocation5 + $0xd0] sm:$0xff]
        %v4266 = vld [vmem:[#allocation5 + $0xf0] sm:$0xff]
        %4267 = vset.pattern.permute.xlu0 1
        %4268 = vperm.xlu0 %4267, %v3670
        %v4269 = vpop.permute.xlu0 %4268
        %4271 = vset.pattern.permute.xlu0 1
        %4272 = vperm.xlu0 %4271, %v3671
        %v4273 = vpop.permute.xlu0 %4272
        %4275 = vset.pattern.permute.xlu0 1
        %4276 = vperm.xlu0 %4275, %v3672
        %v4277 = vpop.permute.xlu0 %4276
        %4279 = vset.pattern.permute.xlu0 1
        %4280 = vperm.xlu0 %4279, %v3673
        %v4281 = vpop.permute.xlu0 %4280
        %4283 = vset.pattern.permute.xlu0 1
        %4284 = vperm.xlu0 %4283, %v3674
        %v4285 = vpop.permute.xlu0 %4284
        %4287 = vset.pattern.permute.xlu0 1
        %4288 = vperm.xlu0 %4287, %v3675
        %v4289 = vpop.permute.xlu0 %4288
        %4291 = vset.pattern.permute.xlu0 1
        %4292 = vperm.xlu0 %4291, %v3676
        %v4293 = vpop.permute.xlu0 %4292
        %4295 = vset.pattern.permute.xlu0 1
        %4296 = vperm.xlu0 %4295, %v3677
        %v4297 = vpop.permute.xlu0 %4296
        %v4300 = vsel %vm3718, %v4259, 0
        %v4303 = vsel %vm3718, %v4260, 0
        %v4306 = vsel %vm3718, %v4261, 0
        %v4309 = vsel %vm3718, %v4262, 0
        %v4312 = vsel %vm3718, %v4263, 0
        %v4315 = vsel %vm3718, %v4264, 0
        %v4318 = vsel %vm3718, %v4265, 0
        %v4321 = vsel %vm3718, %v4266, 0
        %4323 = vmatprep.subr.mxu0 %v4196
        %4324 = vmatpush1.msra.mxu0 %v4195
        %4325 = vmatprep.subr.mxu0 %v4204
        %4326 = vmatpush1.msra.mxu0 %v4203
        %4327 = vmatprep.subr.mxu0 %v4212
        %4328 = vmatpush1.msra.mxu0 %v4211
        %4329 = vmatprep.subr.mxu0 %v4220
        %4330 = vmatpush1.msra.mxu0 %v4219
        %4331 = vmatprep.subr.mxu0 %v4228
        %4332 = vmatpush1.msra.mxu0 %v4227
        %4333 = vmatprep.subr.mxu0 %v4236
        %4334 = vmatpush1.msra.mxu0 %v4235
        %4335 = vmatprep.subr.mxu0 %v4244
        %4336 = vmatpush1.msra.mxu0 %v4243
        %4337 = vmatprep.subr.mxu0 %v4252
        %4338 = vmatpush1.msra.mxu0 %v4251
        %4339 = vmatprep.subr.mxu0 0.0
        %4340 = vmatpush1.msra.mxu0 0.0
        %4341 = vmatprep.subr.mxu0 0.0
        %4342 = vmatpush1.msra.mxu0 0.0
        %4343 = vmatprep.subr.mxu0 0.0
        %4344 = vmatpush1.msra.mxu0 0.0
        %4345 = vmatprep.subr.mxu0 0.0
        %4346 = vmatpush1.msra.mxu0 0.0
        %4347 = vmatprep.subr.mxu0 0.0
        %4348 = vmatpush1.msra.mxu0 0.0
        %4349 = vmatprep.subr.mxu0 0.0
        %4350 = vmatpush1.msra.mxu0 0.0
        %4351 = vmatprep.subr.mxu0 0.0
        %4352 = vmatpush1.msra.mxu0 0.0
        %4353 = vmatprep.subr.mxu0 0.0
        %4354 = vmatpush1.msra.mxu0 0.0
        %4355 = vmatprep.subr.mxu0 0.0
        %4356 = vmatpush1.msra.mxu0 0.0
        %4357 = vmatprep.subr.mxu0 0.0
        %4358 = vmatpush1.msra.mxu0 0.0
        %4359 = vmatprep.subr.mxu0 0.0
        %4360 = vmatpush1.msra.mxu0 0.0
        %4361 = vmatprep.subr.mxu0 0.0
        %4362 = vmatpush1.msra.mxu0 0.0
        %4363 = vmatprep.subr.mxu0 0.0
        %4364 = vmatpush1.msra.mxu0 0.0
        %4365 = vmatprep.subr.mxu0 0.0
        %4366 = vmatpush1.msra.mxu0 0.0
        %4367 = vmatprep.subr.mxu0 0.0
        %4368 = vmatpush1.msra.mxu0 0.0
        %4369 = vmatprep.subr.mxu0 0.0
        %4370 = vmatpush1.msra.mxu0 0.0
        %4371 = vmatprep.subr.mxu0 0.0
        %4372 = vmatpush1.msra.mxu0 0.0
        %4373 = vmatprep.subr.mxu0 0.0
        %4374 = vmatpush1.msra.mxu0 0.0
        %4375 = vmatprep.subr.mxu0 0.0
        %4376 = vmatpush1.msra.mxu0 0.0
        %4377 = vmatprep.subr.mxu0 0.0
        %4378 = vmatpush1.msra.mxu0 0.0
        %4379 = vmatprep.subr.mxu0 0.0
        %4380 = vmatpush1.msra.mxu0 0.0
        %4381 = vmatprep.subr.mxu0 0.0
        %4382 = vmatpush1.msra.mxu0 0.0
        %4383 = vmatprep.subr.mxu0 0.0
        %4384 = vmatpush1.msra.mxu0 0.0
        %4385 = vmatprep.subr.mxu0 0.0
        %4386 = vmatpush1.msra.mxu0 0.0
        %4387 = vmatprep.mubr.f32.mxu0 0.0
        %4388 = vmatmul.mubr.f32.gmra.mrb[0].mxu0 %v4300
        %v4389 = vpop.f32.mrb[0].mxu0
        %v4390 = vadd.f32 %v4269, %v4389
        %v4391 = vpop.f32.mrb[0].mxu0
        %v4392 = vadd.f32 %v4269, %v4391
        %4393 = vmatprep.mubr.f32.mxu0 0.0
        %4394 = vmatmul.mubr.f32.gmra.mrb[0].mxu0 %v4303
        %v4395 = vpop.f32.mrb[0].mxu0
        %v4396 = vadd.f32 %v4273, %v4395
        %v4397 = vpop.f32.mrb[0].mxu0
        %v4398 = vadd.f32 %v4273, %v4397
        %4399 = vmatprep.mubr.f32.mxu0 0.0
        %4400 = vmatmul.mubr.f32.gmra.mrb[0].mxu0 %v4306
        %v4401 = vpop.f32.mrb[0].mxu0
        %v4402 = vadd.f32 %v4277, %v4401
        %v4403 = vpop.f32.mrb[0].mxu0
        %v4404 = vadd.f32 %v4277, %v4403
        %4405 = vmatprep.mubr.f32.mxu0 0.0
        %4406 = vmatmul.mubr.f32.gmra.mrb[0].mxu0 %v4309
        %v4407 = vpop.f32.mrb[0].mxu0
        %v4408 = vadd.f32 %v4281, %v4407
        %v4409 = vpop.f32.mrb[0].mxu0
        %v4410 = vadd.f32 %v4281, %v4409
        %4411 = vmatprep.mubr.f32.mxu0 0.0
        %4412 = vmatmul.mubr.f32.gmra.mrb[0].mxu0 %v4312
        %v4413 = vpop.f32.mrb[0].mxu0
        %v4414 = vadd.f32 %v4285, %v4413
        %v4415 = vpop.f32.mrb[0].mxu0
        %v4416 = vadd.f32 %v4285, %v4415
        %4417 = vmatprep.mubr.f32.mxu0 0.0
        %4418 = vmatmul.mubr.f32.gmra.mrb[0].mxu0 %v4315
        %v4419 = vpop.f32.mrb[0].mxu0
        %v4420 = vadd.f32 %v4289, %v4419
        %v4421 = vpop.f32.mrb[0].mxu0
        %v4422 = vadd.f32 %v4289, %v4421
        %4423 = vmatprep.mubr.f32.mxu0 0.0
        %4424 = vmatmul.mubr.f32.gmra.mrb[0].mxu0 %v4318
        %v4425 = vpop.f32.mrb[0].mxu0
        %v4426 = vadd.f32 %v4293, %v4425
        %v4427 = vpop.f32.mrb[0].mxu0
        %v4428 = vadd.f32 %v4293, %v4427
        %4429 = vmatprep.mubr.f32.mxu0 0.0
        %4430 = vmatmul.mubr.f32.gmra.mrb[0].mxu0 %v4321
        %v4431 = vpop.f32.mrb[0].mxu0
        %v4432 = vadd.f32 %v4297, %v4431
        %v4433 = vpop.f32.mrb[0].mxu0
        %v4434 = vadd.f32 %v4297, %v4433
        %4435 = vdwg.mxu0
        %4436 = vmatprep.subr.mxu0 %v4198
        %4437 = vmatpush1.msra.mxu0 %v4197
        %4438 = vmatprep.subr.mxu0 %v4206
        %4439 = vmatpush1.msra.mxu0 %v4205
        %4440 = vmatprep.subr.mxu0 %v4214
        %4441 = vmatpush1.msra.mxu0 %v4213
        %4442 = vmatprep.subr.mxu0 %v4222
        %4443 = vmatpush1.msra.mxu0 %v4221
        %4444 = vmatprep.subr.mxu0 %v4230
        %4445 = vmatpush1.msra.mxu0 %v4229
        %4446 = vmatprep.subr.mxu0 %v4238
        %4447 = vmatpush1.msra.mxu0 %v4237
        %4448 = vmatprep.subr.mxu0 %v4246
        %4449 = vmatpush1.msra.mxu0 %v4245
        %4450 = vmatprep.subr.mxu0 %v4254
        %4451 = vmatpush1.msra.mxu0 %v4253
        %4452 = vmatprep.subr.mxu0 0.0
        %4453 = vmatpush1.msra.mxu0 0.0
        %4454 = vmatprep.subr.mxu0 0.0
        %4455 = vmatpush1.msra.mxu0 0.0
        %4456 = vmatprep.subr.mxu0 0.0
        %4457 = vmatpush1.msra.mxu0 0.0
        %4458 = vmatprep.subr.mxu0 0.0
        %4459 = vmatpush1.msra.mxu0 0.0
        %4460 = vmatprep.subr.mxu0 0.0
        %4461 = vmatpush1.msra.mxu0 0.0
        %4462 = vmatprep.subr.mxu0 0.0
        %4463 = vmatpush1.msra.mxu0 0.0
        %4464 = vmatprep.subr.mxu0 0.0
        %4465 = vmatpush1.msra.mxu0 0.0
        %4466 = vmatprep.subr.mxu0 0.0
        %4467 = vmatpush1.msra.mxu0 0.0
        %4468 = vmatprep.subr.mxu0 0.0
        %4469 = vmatpush1.msra.mxu0 0.0
        %4470 = vmatprep.subr.mxu0 0.0
        %4471 = vmatpush1.msra.mxu0 0.0
        %4472 = vmatprep.subr.mxu0 0.0
        %4473 = vmatpush1.msra.mxu0 0.0
        %4474 = vmatprep.subr.mxu0 0.0
        %4475 = vmatpush1.msra.mxu0 0.0
        %4476 = vmatprep.subr.mxu0 0.0
        %4477 = vmatpush1.msra.mxu0 0.0
        %4478 = vmatprep.subr.mxu0 0.0
        %4479 = vmatpush1.msra.mxu0 0.0
        %4480 = vmatprep.subr.mxu0 0.0
        %4481 = vmatpush1.msra.mxu0 0.0
        %4482 = vmatprep.subr.mxu0 0.0
        %4483 = vmatpush1.msra.mxu0 0.0
        %4484 = vmatprep.subr.mxu0 0.0
        %4485 = vmatpush1.msra.mxu0 0.0
        %4486 = vmatprep.subr.mxu0 0.0
        %4487 = vmatpush1.msra.mxu0 0.0
        %4488 = vmatprep.subr.mxu0 0.0
        %4489 = vmatpush1.msra.mxu0 0.0
        %4490 = vmatprep.subr.mxu0 0.0
        %4491 = vmatpush1.msra.mxu0 0.0
        %4492 = vmatprep.subr.mxu0 0.0
        %4493 = vmatpush1.msra.mxu0 0.0
        %4494 = vmatprep.subr.mxu0 0.0
        %4495 = vmatpush1.msra.mxu0 0.0
        %4496 = vmatprep.subr.mxu0 0.0
        %4497 = vmatpush1.msra.mxu0 0.0
        %4498 = vmatprep.subr.mxu0 0.0
        %4499 = vmatpush1.msra.mxu0 0.0
        %4500 = vmatprep.mubr.f32.mxu0 0.0
        %4501 = vmatmul.mubr.f32.gmra.mrb[0].mxu0 %v4300
        %v4502 = vpop.f32.mrb[0].mxu0
        %v4503 = vadd.f32 %v4269, %v4502
        %v4504 = vpop.f32.mrb[0].mxu0
        %v4505 = vadd.f32 %v4269, %v4504
        %4506 = vmatprep.mubr.f32.mxu0 0.0
        %4507 = vmatmul.mubr.f32.gmra.mrb[0].mxu0 %v4303
        %v4508 = vpop.f32.mrb[0].mxu0
        %v4509 = vadd.f32 %v4273, %v4508
        %v4510 = vpop.f32.mrb[0].mxu0
        %v4511 = vadd.f32 %v4273, %v4510
        %4512 = vmatprep.mubr.f32.mxu0 0.0
        %4513 = vmatmul.mubr.f32.gmra.mrb[0].mxu0 %v4306
        %v4514 = vpop.f32.mrb[0].mxu0
        %v4515 = vadd.f32 %v4277, %v4514
        %v4516 = vpop.f32.mrb[0].mxu0
        %v4517 = vadd.f32 %v4277, %v4516
        %4518 = vmatprep.mubr.f32.mxu0 0.0
        %4519 = vmatmul.mubr.f32.gmra.mrb[0].mxu0 %v4309
        %v4520 = vpop.f32.mrb[0].mxu0
        %v4521 = vadd.f32 %v4281, %v4520
        %v4522 = vpop.f32.mrb[0].mxu0
        %v4523 = vadd.f32 %v4281, %v4522
        %4524 = vmatprep.mubr.f32.mxu0 0.0
        %4525 = vmatmul.mubr.f32.gmra.mrb[0].mxu0 %v4312
        %v4526 = vpop.f32.mrb[0].mxu0
        %v4527 = vadd.f32 %v4285, %v4526
        %v4528 = vpop.f32.mrb[0].mxu0
        %v4529 = vadd.f32 %v4285, %v4528
        %4530 = vmatprep.mubr.f32.mxu0 0.0
        %4531 = vmatmul.mubr.f32.gmra.mrb[0].mxu0 %v4315
        %v4532 = vpop.f32.mrb[0].mxu0
        %v4533 = vadd.f32 %v4289, %v4532
        %v4534 = vpop.f32.mrb[0].mxu0
        %v4535 = vadd.f32 %v4289, %v4534
        %4536 = vmatprep.mubr.f32.mxu0 0.0
        %4537 = vmatmul.mubr.f32.gmra.mrb[0].mxu0 %v4318
        %v4538 = vpop.f32.mrb[0].mxu0
        %v4539 = vadd.f32 %v4293, %v4538
        %v4540 = vpop.f32.mrb[0].mxu0
        %v4541 = vadd.f32 %v4293, %v4540
        %4542 = vmatprep.mubr.f32.mxu0 0.0
        %4543 = vmatmul.mubr.f32.gmra.mrb[0].mxu0 %v4321
        %v4544 = vpop.f32.mrb[0].mxu0
        %v4545 = vadd.f32 %v4297, %v4544
        %v4546 = vpop.f32.mrb[0].mxu0
        %v4547 = vadd.f32 %v4297, %v4546
        %4548 = vdwg.mxu0
        %4549 = vmatprep.subr.mxu0 %v4200
        %4550 = vmatpush1.msra.mxu0 %v4199
        %4551 = vmatprep.subr.mxu0 %v4208
        %4552 = vmatpush1.msra.mxu0 %v4207
        %4553 = vmatprep.subr.mxu0 %v4216
        %4554 = vmatpush1.msra.mxu0 %v4215
        %4555 = vmatprep.subr.mxu0 %v4224
        %4556 = vmatpush1.msra.mxu0 %v4223
        %4557 = vmatprep.subr.mxu0 %v4232
        %4558 = vmatpush1.msra.mxu0 %v4231
        %4559 = vmatprep.subr.mxu0 %v4240
        %4560 = vmatpush1.msra.mxu0 %v4239
        %4561 = vmatprep.subr.mxu0 %v4248
        %4562 = vmatpush1.msra.mxu0 %v4247
        %4563 = vmatprep.subr.mxu0 %v4256
        %4564 = vmatpush1.msra.mxu0 %v4255
        %4565 = vmatprep.subr.mxu0 0.0
        %4566 = vmatpush1.msra.mxu0 0.0
        %4567 = vmatprep.subr.mxu0 0.0
        %4568 = vmatpush1.msra.mxu0 0.0
        %4569 = vmatprep.subr.mxu0 0.0
        %4570 = vmatpush1.msra.mxu0 0.0
        %4571 = vmatprep.subr.mxu0 0.0
        %4572 = vmatpush1.msra.mxu0 0.0
        %4573 = vmatprep.subr.mxu0 0.0
        %4574 = vmatpush1.msra.mxu0 0.0
        %4575 = vmatprep.subr.mxu0 0.0
        %4576 = vmatpush1.msra.mxu0 0.0
        %4577 = vmatprep.subr.mxu0 0.0
        %4578 = vmatpush1.msra.mxu0 0.0
        %4579 = vmatprep.subr.mxu0 0.0
        %4580 = vmatpush1.msra.mxu0 0.0
        %4581 = vmatprep.subr.mxu0 0.0
        %4582 = vmatpush1.msra.mxu0 0.0
        %4583 = vmatprep.subr.mxu0 0.0
        %4584 = vmatpush1.msra.mxu0 0.0
        %4585 = vmatprep.subr.mxu0 0.0
        %4586 = vmatpush1.msra.mxu0 0.0
        %4587 = vmatprep.subr.mxu0 0.0
        %4588 = vmatpush1.msra.mxu0 0.0
        %4589 = vmatprep.subr.mxu0 0.0
        %4590 = vmatpush1.msra.mxu0 0.0
        %4591 = vmatprep.subr.mxu0 0.0
        %4592 = vmatpush1.msra.mxu0 0.0
        %4593 = vmatprep.subr.mxu0 0.0
        %4594 = vmatpush1.msra.mxu0 0.0
        %4595 = vmatprep.subr.mxu0 0.0
        %4596 = vmatpush1.msra.mxu0 0.0
        %4597 = vmatprep.subr.mxu0 0.0
        %4598 = vmatpush1.msra.mxu0 0.0
        %4599 = vmatprep.subr.mxu0 0.0
        %4600 = vmatpush1.msra.mxu0 0.0
        %4601 = vmatprep.subr.mxu0 0.0
        %4602 = vmatpush1.msra.mxu0 0.0
        %4603 = vmatprep.subr.mxu0 0.0
        %4604 = vmatpush1.msra.mxu0 0.0
        %4605 = vmatprep.subr.mxu0 0.0
        %4606 = vmatpush1.msra.mxu0 0.0
        %4607 = vmatprep.subr.mxu0 0.0
        %4608 = vmatpush1.msra.mxu0 0.0
        %4609 = vmatprep.subr.mxu0 0.0
        %4610 = vmatpush1.msra.mxu0 0.0
        %4611 = vmatprep.subr.mxu0 0.0
        %4612 = vmatpush1.msra.mxu0 0.0
        %4613 = vmatprep.mubr.f32.mxu0 0.0
        %4614 = vmatmul.mubr.f32.gmra.mrb[0].mxu0 %v4300
        %v4615 = vpop.f32.mrb[0].mxu0
        %v4616 = vadd.f32 %v4269, %v4615
        %v4617 = vpop.f32.mrb[0].mxu0
        %v4618 = vadd.f32 %v4269, %v4617
        %4619 = vmatprep.mubr.f32.mxu0 0.0
        %4620 = vmatmul.mubr.f32.gmra.mrb[0].mxu0 %v4303
        %v4621 = vpop.f32.mrb[0].mxu0
        %v4622 = vadd.f32 %v4273, %v4621
        %v4623 = vpop.f32.mrb[0].mxu0
        %v4624 = vadd.f32 %v4273, %v4623
        %4625 = vmatprep.mubr.f32.mxu0 0.0
        %4626 = vmatmul.mubr.f32.gmra.mrb[0].mxu0 %v4306
        %v4627 = vpop.f32.mrb[0].mxu0
        %v4628 = vadd.f32 %v4277, %v4627
        %v4629 = vpop.f32.mrb[0].mxu0
        %v4630 = vadd.f32 %v4277, %v4629
        %4631 = vmatprep.mubr.f32.mxu0 0.0
        %4632 = vmatmul.mubr.f32.gmra.mrb[0].mxu0 %v4309
        %v4633 = vpop.f32.mrb[0].mxu0
        %v4634 = vadd.f32 %v4281, %v4633
        %v4635 = vpop.f32.mrb[0].mxu0
        %v4636 = vadd.f32 %v4281, %v4635
        %4637 = vmatprep.mubr.f32.mxu0 0.0
        %4638 = vmatmul.mubr.f32.gmra.mrb[0].mxu0 %v4312
        %v4639 = vpop.f32.mrb[0].mxu0
        %v4640 = vadd.f32 %v4285, %v4639
        %v4641 = vpop.f32.mrb[0].mxu0
        %v4642 = vadd.f32 %v4285, %v4641
        %4643 = vmatprep.mubr.f32.mxu0 0.0
        %4644 = vmatmul.mubr.f32.gmra.mrb[0].mxu0 %v4315
        %v4645 = vpop.f32.mrb[0].mxu0
        %v4646 = vadd.f32 %v4289, %v4645
        %v4647 = vpop.f32.mrb[0].mxu0
        %v4648 = vadd.f32 %v4289, %v4647
        %4649 = vmatprep.mubr.f32.mxu0 0.0
        %4650 = vmatmul.mubr.f32.gmra.mrb[0].mxu0 %v4318
        %v4651 = vpop.f32.mrb[0].mxu0
        %v4652 = vadd.f32 %v4293, %v4651
        %v4653 = vpop.f32.mrb[0].mxu0
        %v4654 = vadd.f32 %v4293, %v4653
        %4655 = vmatprep.mubr.f32.mxu0 0.0
        %4656 = vmatmul.mubr.f32.gmra.mrb[0].mxu0 %v4321
        %v4657 = vpop.f32.mrb[0].mxu0
        %v4658 = vadd.f32 %v4297, %v4657
        %v4659 = vpop.f32.mrb[0].mxu0
        %v4660 = vadd.f32 %v4297, %v4659
        %4661 = vdwg.mxu0
        %4662 = vmatprep.subr.mxu0 %v4202
        %4663 = vmatpush1.msra.mxu0 %v4201
        %4664 = vmatprep.subr.mxu0 %v4210
        %4665 = vmatpush1.msra.mxu0 %v4209
        %4666 = vmatprep.subr.mxu0 %v4218
        %4667 = vmatpush1.msra.mxu0 %v4217
        %4668 = vmatprep.subr.mxu0 %v4226
        %4669 = vmatpush1.msra.mxu0 %v4225
        %4670 = vmatprep.subr.mxu0 %v4234
        %4671 = vmatpush1.msra.mxu0 %v4233
        %4672 = vmatprep.subr.mxu0 %v4242
        %4673 = vmatpush1.msra.mxu0 %v4241
        %4674 = vmatprep.subr.mxu0 %v4250
        %4675 = vmatpush1.msra.mxu0 %v4249
        %4676 = vmatprep.subr.mxu0 %v4258
        %4677 = vmatpush1.msra.mxu0 %v4257
        %4678 = vmatprep.subr.mxu0 0.0
        %4679 = vmatpush1.msra.mxu0 0.0
        %4680 = vmatprep.subr.mxu0 0.0
        %4681 = vmatpush1.msra.mxu0 0.0
        %4682 = vmatprep.subr.mxu0 0.0
        %4683 = vmatpush1.msra.mxu0 0.0
        %4684 = vmatprep.subr.mxu0 0.0
        %4685 = vmatpush1.msra.mxu0 0.0
        %4686 = vmatprep.subr.mxu0 0.0
        %4687 = vmatpush1.msra.mxu0 0.0
        %4688 = vmatprep.subr.mxu0 0.0
        %4689 = vmatpush1.msra.mxu0 0.0
        %4690 = vmatprep.subr.mxu0 0.0
        %4691 = vmatpush1.msra.mxu0 0.0
        %4692 = vmatprep.subr.mxu0 0.0
        %4693 = vmatpush1.msra.mxu0 0.0
        %4694 = vmatprep.subr.mxu0 0.0
        %4695 = vmatpush1.msra.mxu0 0.0
        %4696 = vmatprep.subr.mxu0 0.0
        %4697 = vmatpush1.msra.mxu0 0.0
        %4698 = vmatprep.subr.mxu0 0.0
        %4699 = vmatpush1.msra.mxu0 0.0
        %4700 = vmatprep.subr.mxu0 0.0
        %4701 = vmatpush1.msra.mxu0 0.0
        %4702 = vmatprep.subr.mxu0 0.0
        %4703 = vmatpush1.msra.mxu0 0.0
        %4704 = vmatprep.subr.mxu0 0.0
        %4705 = vmatpush1.msra.mxu0 0.0
        %4706 = vmatprep.subr.mxu0 0.0
        %4707 = vmatpush1.msra.mxu0 0.0
        %4708 = vmatprep.subr.mxu0 0.0
        %4709 = vmatpush1.msra.mxu0 0.0
        %4710 = vmatprep.subr.mxu0 0.0
        %4711 = vmatpush1.msra.mxu0 0.0
        %4712 = vmatprep.subr.mxu0 0.0
        %4713 = vmatpush1.msra.mxu0 0.0
        %4714 = vmatprep.subr.mxu0 0.0
        %4715 = vmatpush1.msra.mxu0 0.0
        %4716 = vmatprep.subr.mxu0 0.0
        %4717 = vmatpush1.msra.mxu0 0.0
        %4718 = vmatprep.subr.mxu0 0.0
        %4719 = vmatpush1.msra.mxu0 0.0
        %4720 = vmatprep.subr.mxu0 0.0
        %4721 = vmatpush1.msra.mxu0 0.0
        %4722 = vmatprep.subr.mxu0 0.0
        %4723 = vmatpush1.msra.mxu0 0.0
        %4724 = vmatprep.subr.mxu0 0.0
        %4725 = vmatpush1.msra.mxu0 0.0
        %4726 = vmatprep.mubr.f32.mxu0 0.0
        %4727 = vmatmul.mubr.f32.gmra.mrb[0].mxu0 %v4300
        %v4728 = vpop.f32.mrb[0].mxu0
        %v4729 = vadd.f32 %v4269, %v4728
        %v4730 = vpop.f32.mrb[0].mxu0
        %v4731 = vadd.f32 %v4269, %v4730
        %4732 = vmatprep.mubr.f32.mxu0 0.0
        %4733 = vmatmul.mubr.f32.gmra.mrb[0].mxu0 %v4303
        %v4734 = vpop.f32.mrb[0].mxu0
        %v4735 = vadd.f32 %v4273, %v4734
        %v4736 = vpop.f32.mrb[0].mxu0
        %v4737 = vadd.f32 %v4273, %v4736
        %4738 = vmatprep.mubr.f32.mxu0 0.0
        %4739 = vmatmul.mubr.f32.gmra.mrb[0].mxu0 %v4306
        %v4740 = vpop.f32.mrb[0].mxu0
        %v4741 = vadd.f32 %v4277, %v4740
        %v4742 = vpop.f32.mrb[0].mxu0
        %v4743 = vadd.f32 %v4277, %v4742
        %4744 = vmatprep.mubr.f32.mxu0 0.0
        %4745 = vmatmul.mubr.f32.gmra.mrb[0].mxu0 %v4309
        %v4746 = vpop.f32.mrb[0].mxu0
        %v4747 = vadd.f32 %v4281, %v4746
        %v4748 = vpop.f32.mrb[0].mxu0
        %v4749 = vadd.f32 %v4281, %v4748
        %4750 = vmatprep.mubr.f32.mxu0 0.0
        %4751 = vmatmul.mubr.f32.gmra.mrb[0].mxu0 %v4312
        %v4752 = vpop.f32.mrb[0].mxu0
        %v4753 = vadd.f32 %v4285, %v4752
        %v4754 = vpop.f32.mrb[0].mxu0
        %v4755 = vadd.f32 %v4285, %v4754
        %4756 = vmatprep.mubr.f32.mxu0 0.0
        %4757 = vmatmul.mubr.f32.gmra.mrb[0].mxu0 %v4315
        %v4758 = vpop.f32.mrb[0].mxu0
        %v4759 = vadd.f32 %v4289, %v4758
        %v4760 = vpop.f32.mrb[0].mxu0
        %v4761 = vadd.f32 %v4289, %v4760
        %4762 = vmatprep.mubr.f32.mxu0 0.0
        %4763 = vmatmul.mubr.f32.gmra.mrb[0].mxu0 %v4318
        %v4764 = vpop.f32.mrb[0].mxu0
        %v4765 = vadd.f32 %v4293, %v4764
        %v4766 = vpop.f32.mrb[0].mxu0
        %v4767 = vadd.f32 %v4293, %v4766
        %4768 = vmatprep.mubr.f32.mxu0 0.0
        %4769 = vmatmul.mubr.f32.gmra.mrb[0].mxu0 %v4321
        %v4770 = vpop.f32.mrb[0].mxu0
        %v4771 = vadd.f32 %v4297, %v4770
        %v4772 = vpop.f32.mrb[0].mxu0
        %v4773 = vadd.f32 %v4297, %v4772
        %4774 = vdwg.mxu0
        %v4775 = vmax.f32 %v4390, 0.0
        %v4776 = vmax.f32 %v4392, 0.0
        %v4777 = vmax.f32 %v4503, 0.0
        %v4778 = vmax.f32 %v4505, 0.0
        %v4779 = vmax.f32 %v4616, 0.0
        %v4780 = vmax.f32 %v4618, 0.0
        %v4781 = vmax.f32 %v4729, 0.0
        %v4782 = vmax.f32 %v4731, 0.0
        %v4783 = vmax.f32 %v4396, 0.0
        %v4784 = vmax.f32 %v4398, 0.0
        %v4785 = vmax.f32 %v4509, 0.0
        %v4786 = vmax.f32 %v4511, 0.0
        %v4787 = vmax.f32 %v4622, 0.0
        %v4788 = vmax.f32 %v4624, 0.0
        %v4789 = vmax.f32 %v4735, 0.0
        %v4790 = vmax.f32 %v4737, 0.0
        %v4791 = vmax.f32 %v4402, 0.0
        %v4792 = vmax.f32 %v4404, 0.0
        %v4793 = vmax.f32 %v4515, 0.0
        %v4794 = vmax.f32 %v4517, 0.0
        %v4795 = vmax.f32 %v4628, 0.0
        %v4796 = vmax.f32 %v4630, 0.0
        %v4797 = vmax.f32 %v4741, 0.0
        %v4798 = vmax.f32 %v4743, 0.0
        %v4799 = vmax.f32 %v4408, 0.0
        %v4800 = vmax.f32 %v4410, 0.0
        %v4801 = vmax.f32 %v4521, 0.0
        %v4802 = vmax.f32 %v4523, 0.0
        %v4803 = vmax.f32 %v4634, 0.0
        %v4804 = vmax.f32 %v4636, 0.0
        %v4805 = vmax.f32 %v4747, 0.0
        %v4806 = vmax.f32 %v4749, 0.0
        %v4807 = vmax.f32 %v4414, 0.0
        %v4808 = vmax.f32 %v4416, 0.0
        %v4809 = vmax.f32 %v4527, 0.0
        %v4810 = vmax.f32 %v4529, 0.0
        %v4811 = vmax.f32 %v4640, 0.0
        %v4812 = vmax.f32 %v4642, 0.0
        %v4813 = vmax.f32 %v4753, 0.0
        %v4814 = vmax.f32 %v4755, 0.0
        %v4815 = vmax.f32 %v4420, 0.0
        %v4816 = vmax.f32 %v4422, 0.0
        %v4817 = vmax.f32 %v4533, 0.0
        %v4818 = vmax.f32 %v4535, 0.0
        %v4819 = vmax.f32 %v4646, 0.0
        %v4820 = vmax.f32 %v4648, 0.0
        %v4821 = vmax.f32 %v4759, 0.0
        %v4822 = vmax.f32 %v4761, 0.0
        %v4823 = vmax.f32 %v4426, 0.0
        %v4824 = vmax.f32 %v4428, 0.0
        %v4825 = vmax.f32 %v4539, 0.0
        %v4826 = vmax.f32 %v4541, 0.0
        %v4827 = vmax.f32 %v4652, 0.0
        %v4828 = vmax.f32 %v4654, 0.0
        %v4829 = vmax.f32 %v4765, 0.0
        %v4830 = vmax.f32 %v4767, 0.0
        %v4831 = vmax.f32 %v4432, 0.0
        %v4832 = vmax.f32 %v4434, 0.0
        %v4833 = vmax.f32 %v4545, 0.0
        %v4834 = vmax.f32 %v4547, 0.0
        %v4835 = vmax.f32 %v4658, 0.0
        %v4836 = vmax.f32 %v4660, 0.0
        %v4837 = vmax.f32 %v4771, 0.0
        %v4838 = vmax.f32 %v4773, 0.0
        %v4839 = vld [vmem:[#allocation7 + $0x15] sm:$0x1]
        %4841 = vset.pattern.permute.xlu0 64
        %4842 = vperm.xlu0 %4841, %v4839
        %v4843 = vpop.permute.xlu0 %4842
        %v4845 = vsel %vm3718, %v4839, 0
        %4847 = vmatprep.subr.mxu0 %v4776
        %4848 = vmatpush1.msra.mxu0 %v4775
        %4849 = vmatprep.subr.mxu0 %v4784
        %4850 = vmatpush1.msra.mxu0 %v4783
        %4851 = vmatprep.subr.mxu0 %v4792
        %4852 = vmatpush1.msra.mxu0 %v4791
        %4853 = vmatprep.subr.mxu0 %v4800
        %4854 = vmatpush1.msra.mxu0 %v4799
        %4855 = vmatprep.subr.mxu0 %v4808
        %4856 = vmatpush1.msra.mxu0 %v4807
        %4857 = vmatprep.subr.mxu0 %v4816
        %4858 = vmatpush1.msra.mxu0 %v4815
        %4859 = vmatprep.subr.mxu0 %v4824
        %4860 = vmatpush1.msra.mxu0 %v4823
        %4861 = vmatprep.subr.mxu0 %v4832
        %4862 = vmatpush1.msra.mxu0 %v4831
        %4863 = vmatprep.subr.mxu0 0.0
        %4864 = vmatpush1.msra.mxu0 0.0
        %4865 = vmatprep.subr.mxu0 0.0
        %4866 = vmatpush1.msra.mxu0 0.0
        %4867 = vmatprep.subr.mxu0 0.0
        %4868 = vmatpush1.msra.mxu0 0.0
        %4869 = vmatprep.subr.mxu0 0.0
        %4870 = vmatpush1.msra.mxu0 0.0
        %4871 = vmatprep.subr.mxu0 0.0
        %4872 = vmatpush1.msra.mxu0 0.0
        %4873 = vmatprep.subr.mxu0 0.0
        %4874 = vmatpush1.msra.mxu0 0.0
        %4875 = vmatprep.subr.mxu0 0.0
        %4876 = vmatpush1.msra.mxu0 0.0
        %4877 = vmatprep.subr.mxu0 0.0
        %4878 = vmatpush1.msra.mxu0 0.0
        %4879 = vmatprep.subr.mxu0 0.0
        %4880 = vmatpush1.msra.mxu0 0.0
        %4881 = vmatprep.subr.mxu0 0.0
        %4882 = vmatpush1.msra.mxu0 0.0
        %4883 = vmatprep.subr.mxu0 0.0
        %4884 = vmatpush1.msra.mxu0 0.0
        %4885 = vmatprep.subr.mxu0 0.0
        %4886 = vmatpush1.msra.mxu0 0.0
        %4887 = vmatprep.subr.mxu0 0.0
        %4888 = vmatpush1.msra.mxu0 0.0
        %4889 = vmatprep.subr.mxu0 0.0
        %4890 = vmatpush1.msra.mxu0 0.0
        %4891 = vmatprep.subr.mxu0 0.0
        %4892 = vmatpush1.msra.mxu0 0.0
        %4893 = vmatprep.subr.mxu0 0.0
        %4894 = vmatpush1.msra.mxu0 0.0
        %4895 = vmatprep.subr.mxu0 0.0
        %4896 = vmatpush1.msra.mxu0 0.0
        %4897 = vmatprep.subr.mxu0 0.0
        %4898 = vmatpush1.msra.mxu0 0.0
        %4899 = vmatprep.subr.mxu0 0.0
        %4900 = vmatpush1.msra.mxu0 0.0
        %4901 = vmatprep.subr.mxu0 0.0
        %4902 = vmatpush1.msra.mxu0 0.0
        %4903 = vmatprep.subr.mxu0 0.0
        %4904 = vmatpush1.msra.mxu0 0.0
        %4905 = vmatprep.subr.mxu0 0.0
        %4906 = vmatpush1.msra.mxu0 0.0
        %4907 = vmatprep.subr.mxu0 0.0
        %4908 = vmatpush1.msra.mxu0 0.0
        %4909 = vmatprep.subr.mxu0 0.0
        %4910 = vmatpush1.msra.mxu0 0.0
        %4911 = vmatprep.mubr.f32.mxu0 0.0
        %4912 = vmatmul.mubr.f32.gmra.mrb[0].mxu0 %v4845
        %v4913 = vpop.f32.mrb[0].mxu0
        %v4914 = vadd.f32 %v4843, %v4913
        %v4915 = vpop.f32.mrb[0].mxu0
        %v4916 = vadd.f32 %v4843, %v4915
        %4917 = vdwg.mxu0
        %4918 = vmatprep.subr.mxu0 %v4778
        %4919 = vmatpush1.msra.mxu0 %v4777
        %4920 = vmatprep.subr.mxu0 %v4786
        %4921 = vmatpush1.msra.mxu0 %v4785
        %4922 = vmatprep.subr.mxu0 %v4794
        %4923 = vmatpush1.msra.mxu0 %v4793
        %4924 = vmatprep.subr.mxu0 %v4802
        %4925 = vmatpush1.msra.mxu0 %v4801
        %4926 = vmatprep.subr.mxu0 %v4810
        %4927 = vmatpush1.msra.mxu0 %v4809
        %4928 = vmatprep.subr.mxu0 %v4818
        %4929 = vmatpush1.msra.mxu0 %v4817
        %4930 = vmatprep.subr.mxu0 %v4826
        %4931 = vmatpush1.msra.mxu0 %v4825
        %4932 = vmatprep.subr.mxu0 %v4834
        %4933 = vmatpush1.msra.mxu0 %v4833
        %4934 = vmatprep.subr.mxu0 0.0
        %4935 = vmatpush1.msra.mxu0 0.0
        %4936 = vmatprep.subr.mxu0 0.0
        %4937 = vmatpush1.msra.mxu0 0.0
        %4938 = vmatprep.subr.mxu0 0.0
        %4939 = vmatpush1.msra.mxu0 0.0
        %4940 = vmatprep.subr.mxu0 0.0
        %4941 = vmatpush1.msra.mxu0 0.0
        %4942 = vmatprep.subr.mxu0 0.0
        %4943 = vmatpush1.msra.mxu0 0.0
        %4944 = vmatprep.subr.mxu0 0.0
        %4945 = vmatpush1.msra.mxu0 0.0
        %4946 = vmatprep.subr.mxu0 0.0
        %4947 = vmatpush1.msra.mxu0 0.0
        %4948 = vmatprep.subr.mxu0 0.0
        %4949 = vmatpush1.msra.mxu0 0.0
        %4950 = vmatprep.subr.mxu0 0.0
        %4951 = vmatpush1.msra.mxu0 0.0
        %4952 = vmatprep.subr.mxu0 0.0
        %4953 = vmatpush1.msra.mxu0 0.0
        %4954 = vmatprep.subr.mxu0 0.0
        %4955 = vmatpush1.msra.mxu0 0.0
        %4956 = vmatprep.subr.mxu0 0.0
        %4957 = vmatpush1.msra.mxu0 0.0
        %4958 = vmatprep.subr.mxu0 0.0
        %4959 = vmatpush1.msra.mxu0 0.0
        %4960 = vmatprep.subr.mxu0 0.0
        %4961 = vmatpush1.msra.mxu0 0.0
        %4962 = vmatprep.subr.mxu0 0.0
        %4963 = vmatpush1.msra.mxu0 0.0
        %4964 = vmatprep.subr.mxu0 0.0
        %4965 = vmatpush1.msra.mxu0 0.0
        %4966 = vmatprep.subr.mxu0 0.0
        %4967 = vmatpush1.msra.mxu0 0.0
        %4968 = vmatprep.subr.mxu0 0.0
        %4969 = vmatpush1.msra.mxu0 0.0
        %4970 = vmatprep.subr.mxu0 0.0
        %4971 = vmatpush1.msra.mxu0 0.0
        %4972 = vmatprep.subr.mxu0 0.0
        %4973 = vmatpush1.msra.mxu0 0.0
        %4974 = vmatprep.subr.mxu0 0.0
        %4975 = vmatpush1.msra.mxu0 0.0
        %4976 = vmatprep.subr.mxu0 0.0
        %4977 = vmatpush1.msra.mxu0 0.0
        %4978 = vmatprep.subr.mxu0 0.0
        %4979 = vmatpush1.msra.mxu0 0.0
        %4980 = vmatprep.subr.mxu0 0.0
        %4981 = vmatpush1.msra.mxu0 0.0
        %4982 = vmatprep.mubr.f32.mxu0 0.0
        %4983 = vmatmul.mubr.f32.gmra.mrb[0].mxu0 %v4845
        %v4984 = vpop.f32.mrb[0].mxu0
        %v4985 = vadd.f32 %v4843, %v4984
        %v4986 = vpop.f32.mrb[0].mxu0
        %v4987 = vadd.f32 %v4843, %v4986
        %4988 = vdwg.mxu0
        %4989 = vmatprep.subr.mxu0 %v4780
        %4990 = vmatpush1.msra.mxu0 %v4779
        %4991 = vmatprep.subr.mxu0 %v4788
        %4992 = vmatpush1.msra.mxu0 %v4787
        %4993 = vmatprep.subr.mxu0 %v4796
        %4994 = vmatpush1.msra.mxu0 %v4795
        %4995 = vmatprep.subr.mxu0 %v4804
        %4996 = vmatpush1.msra.mxu0 %v4803
        %4997 = vmatprep.subr.mxu0 %v4812
        %4998 = vmatpush1.msra.mxu0 %v4811
        %4999 = vmatprep.subr.mxu0 %v4820
        %5000 = vmatpush1.msra.mxu0 %v4819
        %5001 = vmatprep.subr.mxu0 %v4828
        %5002 = vmatpush1.msra.mxu0 %v4827
        %5003 = vmatprep.subr.mxu0 %v4836
        %5004 = vmatpush1.msra.mxu0 %v4835
        %5005 = vmatprep.subr.mxu0 0.0
        %5006 = vmatpush1.msra.mxu0 0.0
        %5007 = vmatprep.subr.mxu0 0.0
        %5008 = vmatpush1.msra.mxu0 0.0
        %5009 = vmatprep.subr.mxu0 0.0
        %5010 = vmatpush1.msra.mxu0 0.0
        %5011 = vmatprep.subr.mxu0 0.0
        %5012 = vmatpush1.msra.mxu0 0.0
        %5013 = vmatprep.subr.mxu0 0.0
        %5014 = vmatpush1.msra.mxu0 0.0
        %5015 = vmatprep.subr.mxu0 0.0
        %5016 = vmatpush1.msra.mxu0 0.0
        %5017 = vmatprep.subr.mxu0 0.0
        %5018 = vmatpush1.msra.mxu0 0.0
        %5019 = vmatprep.subr.mxu0 0.0
        %5020 = vmatpush1.msra.mxu0 0.0
        %5021 = vmatprep.subr.mxu0 0.0
        %5022 = vmatpush1.msra.mxu0 0.0
        %5023 = vmatprep.subr.mxu0 0.0
        %5024 = vmatpush1.msra.mxu0 0.0
        %5025 = vmatprep.subr.mxu0 0.0
        %5026 = vmatpush1.msra.mxu0 0.0
        %5027 = vmatprep.subr.mxu0 0.0
        %5028 = vmatpush1.msra.mxu0 0.0
        %5029 = vmatprep.subr.mxu0 0.0
        %5030 = vmatpush1.msra.mxu0 0.0
        %5031 = vmatprep.subr.mxu0 0.0
        %5032 = vmatpush1.msra.mxu0 0.0
        %5033 = vmatprep.subr.mxu0 0.0
        %5034 = vmatpush1.msra.mxu0 0.0
        %5035 = vmatprep.subr.mxu0 0.0
        %5036 = vmatpush1.msra.mxu0 0.0
        %5037 = vmatprep.subr.mxu0 0.0
        %5038 = vmatpush1.msra.mxu0 0.0
        %5039 = vmatprep.subr.mxu0 0.0
        %5040 = vmatpush1.msra.mxu0 0.0
        %5041 = vmatprep.subr.mxu0 0.0
        %5042 = vmatpush1.msra.mxu0 0.0
        %5043 = vmatprep.subr.mxu0 0.0
        %5044 = vmatpush1.msra.mxu0 0.0
        %5045 = vmatprep.subr.mxu0 0.0
        %5046 = vmatpush1.msra.mxu0 0.0
        %5047 = vmatprep.subr.mxu0 0.0
        %5048 = vmatpush1.msra.mxu0 0.0
        %5049 = vmatprep.subr.mxu0 0.0
        %5050 = vmatpush1.msra.mxu0 0.0
        %5051 = vmatprep.subr.mxu0 0.0
        %5052 = vmatpush1.msra.mxu0 0.0
        %5053 = vmatprep.mubr.f32.mxu0 0.0
        %5054 = vmatmul.mubr.f32.gmra.mrb[0].mxu0 %v4845
        %v5055 = vpop.f32.mrb[0].mxu0
        %v5056 = vadd.f32 %v4843, %v5055
        %v5057 = vpop.f32.mrb[0].mxu0
        %v5058 = vadd.f32 %v4843, %v5057
        %5059 = vdwg.mxu0
        %5060 = vmatprep.subr.mxu0 %v4782
        %5061 = vmatpush1.msra.mxu0 %v4781
        %5062 = vmatprep.subr.mxu0 %v4790
        %5063 = vmatpush1.msra.mxu0 %v4789
        %5064 = vmatprep.subr.mxu0 %v4798
        %5065 = vmatpush1.msra.mxu0 %v4797
        %5066 = vmatprep.subr.mxu0 %v4806
        %5067 = vmatpush1.msra.mxu0 %v4805
        %5068 = vmatprep.subr.mxu0 %v4814
        %5069 = vmatpush1.msra.mxu0 %v4813
        %5070 = vmatprep.subr.mxu0 %v4822
        %5071 = vmatpush1.msra.mxu0 %v4821
        %5072 = vmatprep.subr.mxu0 %v4830
        %5073 = vmatpush1.msra.mxu0 %v4829
        %5074 = vmatprep.subr.mxu0 %v4838
        %5075 = vmatpush1.msra.mxu0 %v4837
        %5076 = vmatprep.subr.mxu0 0.0
        %5077 = vmatpush1.msra.mxu0 0.0
        %5078 = vmatprep.subr.mxu0 0.0
        %5079 = vmatpush1.msra.mxu0 0.0
        %5080 = vmatprep.subr.mxu0 0.0
        %5081 = vmatpush1.msra.mxu0 0.0
        %5082 = vmatprep.subr.mxu0 0.0
        %5083 = vmatpush1.msra.mxu0 0.0
        %5084 = vmatprep.subr.mxu0 0.0
        %5085 = vmatpush1.msra.mxu0 0.0
        %5086 = vmatprep.subr.mxu0 0.0
        %5087 = vmatpush1.msra.mxu0 0.0
        %5088 = vmatprep.subr.mxu0 0.0
        %5089 = vmatpush1.msra.mxu0 0.0
        %5090 = vmatprep.subr.mxu0 0.0
        %5091 = vmatpush1.msra.mxu0 0.0
        %5092 = vmatprep.subr.mxu0 0.0
        %5093 = vmatpush1.msra.mxu0 0.0
        %5094 = vmatprep.subr.mxu0 0.0
        %5095 = vmatpush1.msra.mxu0 0.0
        %5096 = vmatprep.subr.mxu0 0.0
        %5097 = vmatpush1.msra.mxu0 0.0
        %5098 = vmatprep.subr.mxu0 0.0
        %5099 = vmatpush1.msra.mxu0 0.0
        %5100 = vmatprep.subr.mxu0 0.0
        %5101 = vmatpush1.msra.mxu0 0.0
        %5102 = vmatprep.subr.mxu0 0.0
        %5103 = vmatpush1.msra.mxu0 0.0
        %5104 = vmatprep.subr.mxu0 0.0
        %5105 = vmatpush1.msra.mxu0 0.0
        %5106 = vmatprep.subr.mxu0 0.0
        %5107 = vmatpush1.msra.mxu0 0.0
        %5108 = vmatprep.subr.mxu0 0.0
        %5109 = vmatpush1.msra.mxu0 0.0
        %5110 = vmatprep.subr.mxu0 0.0
        %5111 = vmatpush1.msra.mxu0 0.0
        %5112 = vmatprep.subr.mxu0 0.0
        %5113 = vmatpush1.msra.mxu0 0.0
        %5114 = vmatprep.subr.mxu0 0.0
        %5115 = vmatpush1.msra.mxu0 0.0
        %5116 = vmatprep.subr.mxu0 0.0
        %5117 = vmatpush1.msra.mxu0 0.0
        %5118 = vmatprep.subr.mxu0 0.0
        %5119 = vmatpush1.msra.mxu0 0.0
        %5120 = vmatprep.subr.mxu0 0.0
        %5121 = vmatpush1.msra.mxu0 0.0
        %5122 = vmatprep.subr.mxu0 0.0
        %5123 = vmatpush1.msra.mxu0 0.0
        %5124 = vmatprep.mubr.f32.mxu0 0.0
        %5125 = vmatmul.mubr.f32.gmra.mrb[0].mxu0 %v4845
        %v5126 = vpop.f32.mrb[0].mxu0
        %v5127 = vadd.f32 %v4843, %v5126
        %v5128 = vpop.f32.mrb[0].mxu0
        %v5129 = vadd.f32 %v4843, %v5128
        %5130 = vdwg.mxu0
        %v5131 = vtanh.pop %v4914
        %v5132 = vtanh.pop %v4916
        %v5133 = vtanh.pop %v4985
        %v5134 = vtanh.pop %v4987
        %v5135 = vtanh.pop %v5056
        %v5136 = vtanh.pop %v5058
        %v5137 = vtanh.pop %v5127
        %v5138 = vtanh.pop %v5129
        %v5139 = vmul.f32 %v5131, 2.0
        %v5140 = vmul.f32 %v5132, 2.0
        %v5141 = vmul.f32 %v5133, 2.0
        %v5142 = vmul.f32 %v5134, 2.0
        %v5143 = vmul.f32 %v5135, 2.0
        %v5144 = vmul.f32 %v5136, 2.0
        %v5145 = vmul.f32 %v5137, 2.0
        %v5146 = vmul.f32 %v5138, 2.0
        %v5147 = vadd.f32 %v5139, 0.0
        %v5148 = vadd.f32 %v5140, 0.0
        %v5149 = vadd.f32 %v5141, 0.0
        %v5150 = vadd.f32 %v5142, 0.0
        %v5151 = vadd.f32 %v5143, 0.0
        %v5152 = vadd.f32 %v5144, 0.0
        %v5153 = vadd.f32 %v5145, 0.0
        %v5154 = vadd.f32 %v5146, 0.0
        %v5163 = vcombine.low %v5147, %v5148
        %v5164 = vcombine.low %v5149, %v5150
        %v5165 = vcombine.low %v5151, %v5152
        %v5166 = vcombine.low %v5153, %v5154
        %v5168 = vunpack.c.l.s4 1966171168
        %v5169 = vunpack.c.0.s8 %v5168
        %v5170 = vlaneseq
        %v5171 = vshrl.u32 %v5170, 7
        %v5172 = vsub.s32 %v5169, %v5171
        %v5173 = vrot.slane %v5163, %v5172
        %v5175 = vunpack.c.l.s4 1966171168
        %v5176 = vunpack.c.0.s8 %v5175
        %v5177 = vlaneseq
        %v5178 = vshrl.u32 %v5177, 7
        %v5179 = vsub.s32 %v5176, %v5178
        %v5180 = vrot.slane %v5164, %v5179
        %v5182 = vunpack.c.l.s4 1966171168
        %v5183 = vunpack.c.0.s8 %v5182
        %v5184 = vlaneseq
        %v5185 = vshrl.u32 %v5184, 7
        %v5186 = vsub.s32 %v5183, %v5185
        %v5187 = vrot.slane %v5165, %v5186
        %v5189 = vunpack.c.l.s4 1966171168
        %v5190 = vunpack.c.0.s8 %v5189
        %v5191 = vlaneseq
        %v5192 = vshrl.u32 %v5191, 7
        %v5193 = vsub.s32 %v5190, %v5192
        %v5194 = vrot.slane %v5166, %v5193
        %v5195 = vcombine.low %v5173, %v5180
        %v5196 = vcombine.low %v5187, %v5194
        %v5198 = vunpack.c.l.s4 1966171168
        %v5199 = vunpack.c.0.s8 %v5198
        %v5200 = vlaneseq
        %v5201 = vshrl.u32 %v5200, 7
        %v5202 = vsub.s32 %v5199, %v5201
        %v5203 = vrot.slane %v5195, %v5202
        %v5205 = vunpack.c.l.s4 1966171168
        %v5206 = vunpack.c.0.s8 %v5205
        %v5207 = vlaneseq
        %v5208 = vshrl.u32 %v5207, 7
        %v5209 = vsub.s32 %v5206, %v5208
        %v5210 = vrot.slane %v5196, %v5209
        %v5211 = vcombine.low %v5203, %v5210
        %5213 = vst [vmem:[%s215] sm:$0xff] %v5211
        %s5214 = sand.u32 %s97, 1
        %s5215 = scalar_lea.sflag [#allocation4], %s5214
        %s5216 = sand.u32 %s97, 1
        %s5217 = smul.addr %s5216, 8
        %s5218 = scalar_lea.vmem [#allocation8], %s5217
        // Predicated region
        $region45: #{tpu_custom_call.1} parent=31 // pred_check
          %p5219 = pneg %p107
        $region46: #{tpu_custom_call.1} parent=31 // pred_check_branch
          %5221 = sbr.rel (%p5219) target = $region48
        $region47: #{tpu_custom_call.1} parent=31 // pred_region
          %s5222 = smul.u32 8, %s21
          %s5224 = ssub.s32 128, 128
          %5225 = vsyncadd %s5215, %s5224
          %s5226 = smul.addr %s5222, 16
          %s5227 = scalar_lea.hbm %s3, %s5226
          %s5229 = sshll.u32 %s5218, 4
          %s5230 = int_to_ptr.vmem [resolvable:$true] %s5229
          %5232 = dma.vmem_to_hbm [thread:$0]  %s5230, 128, %s5227, %s5215
        $region48: #{tpu_custom_call.1} parent=31 // pred_fallthru
          _
      $region32: #{tpu_custom_call.1} parent=5 // pred_fallthru
        _
      %p5233 = scmp.le.s32.totalorder 2, %s16
      // Predicated region
      $region49: #{tpu_custom_call.1} parent=5 // pred_check
        %p5234 = pneg %p5233
      $region50: #{tpu_custom_call.1} parent=5 // pred_check_branch
        %5236 = sbr.rel (%p5234) target = $region52
      $region51: #{tpu_custom_call.1} parent=5 // pred_region
        %s5237 = ssub.s32 %s16, 2
        // Predicated region
        $region53: #{tpu_custom_call.1} parent=51 // pred_check
          %p5238 = pneg %p113
        $region54: #{tpu_custom_call.1} parent=51 // pred_check_branch
          %5240 = sbr.rel (%p5238) target = $region56
        $region55: #{tpu_custom_call.1} parent=51 // pred_region
          %s5241 = sand.u32 %s98, 1
          %s5242 = scalar_lea.sflag [#allocation4], %s5241
          %s5243 = sand.u32 %s98, 1
          %s5244 = smul.addr %s5243, 8
          %s5245 = scalar_lea.vmem [#allocation8], %s5244
          %5246 = dma.done %s5242, 128
        $region56: #{tpu_custom_call.1} parent=51 // pred_fallthru
          _
      $region52: #{tpu_custom_call.1} parent=5 // pred_fallthru
        _
    $region6: #{tpu_custom_call.1} parent=1 // loop_footer
      %s20 = sadd.s32 1, %s16
    $region7: #{tpu_custom_call.1} parent=1 // loop_footer_branch
      %15 = sbr.rel target = $region3
    $region8: #{tpu_custom_call.1} parent=1 // loop_exit
      _
    %5247 = vsyncpa [#allocation3], 1
    %s5248 = scalar_lea.sflag [#allocation3], 1
    %5249 = vsyncpa %s5248, 1
    %5250 = vsyncpa [#allocation6], 1
    %5251 = vsyncpa [#allocation4], 1
    %s5252 = scalar_lea.sflag [#allocation4], 1
    %5253 = vsyncpa %s5252, 1

</llo_original>
